<compile_context>
chip_gen: v5e
topology: v5e:2x2
jax: 0.10.0
libtpu: 0.0.40
codegen_flags: <defaults>
</compile_context>

<pallas_src>
import functools

import jax
import jax.numpy as jnp
from jax.experimental import pallas as pl
from jax.experimental.pallas import tpu as pltpu

NUM_CLASSES = 6
NUM_FEATURES = 310
NOISE = 128
H1 = 500
H2 = 1000

# Lane/sublane-padded sizes used inside the kernel.
CLSP = 8       # class-bias table rows padded to sublane granularity
H1P = 512
H2P = 1024
OUTP = 384


def _round_up(x, m):
    return ((x + m - 1) // m) * m


def _tpu_kind():
    try:
        return jax.devices()[0].device_kind.lower()
    except Exception:  # pragma: no cover - CPU/interpret fallbacks
        return ""


_KIND = _tpu_kind()
_IS_V5E = ("v5 lite" in _KIND) or ("v5e" in _KIND) or ("v5litepod" in _KIND)
_IS_V7 = "v7" in _KIND
# v5e is MXU-bound at BM=256; v6e/v7x benefit from larger tiles (step-overhead
# amortization).  v7x has 2 TensorCores -> want >= 2 grid steps when possible.
_BM_MAX = 256 if _IS_V5E else 512
_MIN_GRID = 2 if _IS_V7 else 1


def _gen_mlp_kernel(z_ref, lbl_ref, cbt_ref, w1_ref, w2_ref, b2_ref,
                    w3_ref, b3_ref, o_ref):
    """One batch tile of the 3-layer MLP, fully on-chip.

    z_ref   : (BM, 128)  f32   noise tile (cast to bf16 in-kernel)
    lbl_ref : (BM, 1)    int32 class labels
    cbt_ref : (8, 512)   f32   per-class bias table (emb @ W1c + b1), resident
    w1_ref  : (128, 512) bf16  noise part of W1, resident
    w2_ref  : (512, 1024) bf16, b2_ref: (1, 1024) f32, resident
    w3_ref  : (1024, 384) bf16, b3_ref: (1, 384)  f32, resident
    o_ref   : (BM, 384)  bf16
    """
    # Layer 1, noise part: MXU contraction dim is exactly 128.
    z = z_ref[...].astype(jnp.bfloat16)
    h1 = jnp.dot(z, w1_ref[...], preferred_element_type=jnp.float32)  # (BM,512)

    # Per-row class bias via 6-way compare/select on the VPU (exact f32,
    # replaces the old streamed (BM, 512) f32 operand).
    lbl = lbl_ref[...]                                     # (BM, 1) int32
    cb = jnp.broadcast_to(cbt_ref[0:1, :], h1.shape)       # class 0 default
    for c in range(1, NUM_CLASSES):
        cb = jnp.where(lbl == c, cbt_ref[c:c + 1, :], cb)
    h1 = jnp.maximum(h1 + cb, 0.0)                         # (BM, 512)

    h2 = jnp.dot(h1.astype(jnp.bfloat16), w2_ref[...],
                 preferred_element_type=jnp.float32)
    h2 = jnp.maximum(h2 + b2_ref[...], 0.0)                # (BM, 1024)

    o = jnp.dot(h2.astype(jnp.bfloat16), w3_ref[...],
                preferred_element_type=jnp.float32)
    o_ref[...] = jax.nn.sigmoid(o + b3_ref[...]).astype(o_ref.dtype)


def init_params(key):
    """Canonical f32 params mirroring the PyTorch module's shapes/scales."""
    ks = jax.random.split(key, 7)

    def linear(kw, kb, fan_in, fan_out):
        bound = 1.0 / jnp.sqrt(fan_in)
        w = jax.random.uniform(kw, (fan_in, fan_out), jnp.float32,
                               -bound, bound)
        b = jax.random.uniform(kb, (1, fan_out), jnp.float32, -bound, bound)
        return w, b

    emb = jax.random.normal(ks[0], (NUM_CLASSES, NUM_CLASSES), jnp.float32)
    w1, b1 = linear(ks[1], ks[2], NOISE + NUM_CLASSES, H1)
    w2, b2 = linear(ks[3], ks[4], H1, H2)
    w3, b3 = linear(ks[5], ks[6], H2, NUM_FEATURES)
    return {"label_emb": emb, "w1": w1, "b1": b1, "w2": w2, "b2": b2,
            "w3": w3, "b3": b3}


def prepare_kernel_params(params):
    """Fold embedding into a per-class bias table; pad + cast weights."""
    w1 = params["w1"]                                   # (134, 500)
    b1 = params["b1"]                                   # (1, 500)
    emb = params["label_emb"]                           # (6, 6)

    # Per-class bias table: emb @ W1[128:134, :] + b1 -> (6, 500), pad (8, 512).
    cbt = emb @ w1[NOISE:, :] + b1
    cbt = jnp.pad(cbt, ((0, CLSP - NUM_CLASSES),
                        (0, H1P - H1))).astype(jnp.float32)

    w1z = jnp.pad(w1[:NOISE, :], ((0, 0), (0, H1P - H1))).astype(jnp.bfloat16)
    w2 = jnp.pad(params["w2"],
                 ((0, H1P - H1), (0, H2P - H2))).astype(jnp.bfloat16)
    b2 = jnp.pad(params["b2"], ((0, 0), (0, H2P - H2))).astype(jnp.float32)
    w3 = jnp.pad(params["w3"],
                 ((0, H2P - H2), (0, OUTP - NUM_FEATURES))).astype(jnp.bfloat16)
    b3 = jnp.pad(params["b3"],
                 ((0, 0), (0, OUTP - NUM_FEATURES))).astype(jnp.float32)
    return {"cbt": cbt, "w1z": w1z, "w2": w2, "b2": b2, "w3": w3, "b3": b3}


@functools.partial(jax.jit, static_argnames=())
def generator_forward(z, labels, kparams):
    """z: (B, 128) f32, labels: (B,) int32 -> (B, 1, 1, 310) f32."""
    B = z.shape[0]
    z = z.reshape(B, NOISE).astype(jnp.float32)
    lbl = labels.astype(jnp.int32).reshape(B, 1)

    # Batch padding / tiling.  Pad to 16 rows (bf16 sublane packing) and pick a
    # tile so v7x gets >= 2 grid steps (2 TensorCores) when the batch allows.
    b_pad = _round_up(max(B, 16), 16)
    target_tiles = max(_MIN_GRID, pl.cdiv(b_pad, _BM_MAX))
    bm = min(_BM_MAX, _round_up(pl.cdiv(b_pad, target_tiles), 16))
    bp = _round_up(b_pad, bm)

    if bp != B:
        z_in = jnp.pad(z, ((0, bp - B), (0, 0)))
        lbl_in = jnp.pad(lbl, ((0, bp - B), (0, 0)))
    else:
        z_in, lbl_in = z, lbl

    out = pl.pallas_call(
        _gen_mlp_kernel,
        out_shape=jax.ShapeDtypeStruct((bp, OUTP), jnp.bfloat16),
        grid=(bp // bm,),
        in_specs=[
            pl.BlockSpec((bm, NOISE), lambda i: (i, 0)),    # z tile (streamed)
            pl.BlockSpec((bm, 1), lambda i: (i, 0)),        # labels (streamed)
            pl.BlockSpec((CLSP, H1P), lambda i: (0, 0)),    # class-bias table
            pl.BlockSpec((NOISE, H1P), lambda i: (0, 0)),   # W1z (resident)
            pl.BlockSpec((H1P, H2P), lambda i: (0, 0)),     # W2  (resident)
            pl.BlockSpec((1, H2P), lambda i: (0, 0)),       # b2  (resident)
            pl.BlockSpec((H2P, OUTP), lambda i: (0, 0)),    # W3  (resident)
            pl.BlockSpec((1, OUTP), lambda i: (0, 0)),      # b3  (resident)
        ],
        out_specs=pl.BlockSpec((bm, OUTP), lambda i: (i, 0)),
        compiler_params=pltpu.CompilerParams(
            dimension_semantics=("parallel",)),
    )(z_in, lbl_in, kparams["cbt"], kparams["w1z"], kparams["w2"],
      kparams["b2"], kparams["w3"], kparams["b3"])

    # Slice off batch/lane padding; f32 to match the PyTorch module's output.
    return (out[:B, :NUM_FEATURES].astype(jnp.float32)
            .reshape(B, 1, 1, NUM_FEATURES))


def _reference(z, labels, params):
    """Pure-JAX f32 reference matching the PyTorch module."""
    B = z.shape[0]
    c = params["label_emb"][labels]
    x = jnp.concatenate([z.reshape(B, NOISE), c], axis=1)
    h1 = jnp.maximum(x @ params["w1"] + params["b1"], 0.0)
    h2 = jnp.maximum(h1 @ params["w2"] + params["b2"], 0.0)
    o = jax.nn.sigmoid(h2 @ params["w3"] + params["b3"])
    return o.reshape(B, 1, 1, NUM_FEATURES)


if __name__ == "__main__":
    key = jax.random.PRNGKey(0)
    kp, kz, kl = jax.random.split(key, 3)

    B = 4
    params = init_params(kp)
    kparams = prepare_kernel_params(params)
    z = jax.random.normal(kz, (B, NOISE), jnp.float32)
    labels = jax.random.randint(kl, (B,), 0, NUM_CLASSES, jnp.int32)

    out = jax.block_until_ready(generator_forward(z, labels, kparams))
    assert out.shape == (B, 1, 1, NUM_FEATURES), out.shape

    ref = jax.block_until_ready(_reference(z, labels, params))
    # bf16 matmuls (f32 accumulate) + bf16 output: sigmoid agrees to ~1e-3.
    assert jnp.allclose(out, ref, atol=2e-2, rtol=0.0), "mismatch vs reference"

    print("KERNEL_OK")
</pallas_src>

<mosaic_0001>
module attributes {stable_mosaic.version = 11 : i64} {
  func.func @_gen_mlp_kernel(%arg0: i32, %arg1: memref<16x128xf32, #tpu.memory_space<vmem>>, %arg2: memref<16x1xi32, #tpu.memory_space<vmem>>, %arg3: memref<8x512xf32, #tpu.memory_space<vmem>>, %arg4: memref<128x512xbf16, #tpu.memory_space<vmem>>, %arg5: memref<512x1024xbf16, #tpu.memory_space<vmem>>, %arg6: memref<1x1024xf32, #tpu.memory_space<vmem>>, %arg7: memref<1024x384xbf16, #tpu.memory_space<vmem>>, %arg8: memref<1x384xf32, #tpu.memory_space<vmem>>, %arg9: memref<16x384xbf16, #tpu.memory_space<vmem>>) attributes {dimension_semantics = [#tpu.dimension_semantics<parallel>], iteration_bounds = array<i64: 1>, scalar_prefetch = 0 : i64, scratch_operands = 0 : i64, tpu.core_type = #tpu.core_type<tc>, window_params = [{transform_indices = @transform_0, window_bounds = array<i64: 16, 128>}, {transform_indices = @transform_1, window_bounds = array<i64: 16, 1>}, {pipeline_mode = #tpu.pipeline_mode<synchronous>, transform_indices = @transform_2, window_bounds = array<i64: 8, 512>}, {pipeline_mode = #tpu.pipeline_mode<synchronous>, transform_indices = @transform_3, window_bounds = array<i64: 128, 512>}, {pipeline_mode = #tpu.pipeline_mode<synchronous>, transform_indices = @transform_4, window_bounds = array<i64: 512, 1024>}, {pipeline_mode = #tpu.pipeline_mode<synchronous>, transform_indices = @transform_5, window_bounds = array<i64: 1, 1024>}, {pipeline_mode = #tpu.pipeline_mode<synchronous>, transform_indices = @transform_6, window_bounds = array<i64: 1024, 384>}, {pipeline_mode = #tpu.pipeline_mode<synchronous>, transform_indices = @transform_7, window_bounds = array<i64: 1, 384>}, {transform_indices = @transform_8, window_bounds = array<i64: 16, 384>}]} {
    %c0 = arith.constant 0 : index
    %c0_0 = arith.constant 0 : index
    %0 = vector.load %arg1[%c0, %c0_0] : memref<16x128xf32, #tpu.memory_space<vmem>>, vector<16x128xf32>
    %1 = arith.truncf %0 : vector<16x128xf32> to vector<16x128xbf16>
    %c0_1 = arith.constant 0 : index
    %c0_2 = arith.constant 0 : index
    %2 = vector.load %arg4[%c0_1, %c0_2] : memref<128x512xbf16, #tpu.memory_space<vmem>>, vector<128x512xbf16>
    %cst = arith.constant dense<0.000000e+00> : vector<16x512xf32>
    %3 = tpu.matmul %1, %2, %cst {dimension_numbers = #tpu.dot_dimension_numbers<[1], [0], [0], [1], [0, 0, 1, 1], [], []>} : vector<16x128xbf16>, vector<128x512xbf16>, vector<16x512xf32> -> vector<16x512xf32>
    %c0_3 = arith.constant 0 : index
    %c0_4 = arith.constant 0 : index
    %4 = vector.load %arg2[%c0_3, %c0_4] : memref<16x1xi32, #tpu.memory_space<vmem>>, vector<16x1xi32>
    %c0_5 = arith.constant 0 : index
    %c0_6 = arith.constant 0 : index
    %5 = vector.load %arg3[%c0_5, %c0_6] : memref<8x512xf32, #tpu.memory_space<vmem>>, vector<1x512xf32>
    %6 = vector.shape_cast %5 : vector<1x512xf32> to vector<1x512xf32>
    %7 = vector.broadcast %6 : vector<1x512xf32> to vector<16x512xf32>
    %c1_i32 = arith.constant 1 : i32
    %8 = vector.broadcast %c1_i32 : i32 to vector<16x1xi32>
    %9 = arith.cmpi eq, %4, %8 : vector<16x1xi32>
    %c1 = arith.constant 1 : index
    %c0_7 = arith.constant 0 : index
    %10 = vector.load %arg3[%c1, %c0_7] : memref<8x512xf32, #tpu.memory_space<vmem>>, vector<1x512xf32>
    %11 = vector.shape_cast %9 : vector<16x1xi1> to vector<16x1xi1>
    %12 = vector.broadcast %11 : vector<16x1xi1> to vector<16x512xi1>
    %13 = vector.shape_cast %10 : vector<1x512xf32> to vector<1x512xf32>
    %14 = vector.broadcast %13 : vector<1x512xf32> to vector<16x512xf32>
    %15 = arith.select %12, %14, %7 : vector<16x512xi1>, vector<16x512xf32>
    %c2_i32 = arith.constant 2 : i32
    %16 = vector.broadcast %c2_i32 : i32 to vector<16x1xi32>
    %17 = arith.cmpi eq, %4, %16 : vector<16x1xi32>
    %c2 = arith.constant 2 : index
    %c0_8 = arith.constant 0 : index
    %18 = vector.load %arg3[%c2, %c0_8] : memref<8x512xf32, #tpu.memory_space<vmem>>, vector<1x512xf32>
    %19 = vector.shape_cast %17 : vector<16x1xi1> to vector<16x1xi1>
    %20 = vector.broadcast %19 : vector<16x1xi1> to vector<16x512xi1>
    %21 = vector.shape_cast %18 : vector<1x512xf32> to vector<1x512xf32>
    %22 = vector.broadcast %21 : vector<1x512xf32> to vector<16x512xf32>
    %23 = arith.select %20, %22, %15 : vector<16x512xi1>, vector<16x512xf32>
    %c3_i32 = arith.constant 3 : i32
    %24 = vector.broadcast %c3_i32 : i32 to vector<16x1xi32>
    %25 = arith.cmpi eq, %4, %24 : vector<16x1xi32>
    %c3 = arith.constant 3 : index
    %c0_9 = arith.constant 0 : index
    %26 = vector.load %arg3[%c3, %c0_9] : memref<8x512xf32, #tpu.memory_space<vmem>>, vector<1x512xf32>
    %27 = vector.shape_cast %25 : vector<16x1xi1> to vector<16x1xi1>
    %28 = vector.broadcast %27 : vector<16x1xi1> to vector<16x512xi1>
    %29 = vector.shape_cast %26 : vector<1x512xf32> to vector<1x512xf32>
    %30 = vector.broadcast %29 : vector<1x512xf32> to vector<16x512xf32>
    %31 = arith.select %28, %30, %23 : vector<16x512xi1>, vector<16x512xf32>
    %c4_i32 = arith.constant 4 : i32
    %32 = vector.broadcast %c4_i32 : i32 to vector<16x1xi32>
    %33 = arith.cmpi eq, %4, %32 : vector<16x1xi32>
    %c4 = arith.constant 4 : index
    %c0_10 = arith.constant 0 : index
    %34 = vector.load %arg3[%c4, %c0_10] : memref<8x512xf32, #tpu.memory_space<vmem>>, vector<1x512xf32>
    %35 = vector.shape_cast %33 : vector<16x1xi1> to vector<16x1xi1>
    %36 = vector.broadcast %35 : vector<16x1xi1> to vector<16x512xi1>
    %37 = vector.shape_cast %34 : vector<1x512xf32> to vector<1x512xf32>
    %38 = vector.broadcast %37 : vector<1x512xf32> to vector<16x512xf32>
    %39 = arith.select %36, %38, %31 : vector<16x512xi1>, vector<16x512xf32>
    %c5_i32 = arith.constant 5 : i32
    %40 = vector.broadcast %c5_i32 : i32 to vector<16x1xi32>
    %41 = arith.cmpi eq, %4, %40 : vector<16x1xi32>
    %c5 = arith.constant 5 : index
    %c0_11 = arith.constant 0 : index
    %42 = vector.load %arg3[%c5, %c0_11] : memref<8x512xf32, #tpu.memory_space<vmem>>, vector<1x512xf32>
    %43 = vector.shape_cast %41 : vector<16x1xi1> to vector<16x1xi1>
    %44 = vector.broadcast %43 : vector<16x1xi1> to vector<16x512xi1>
    %45 = vector.shape_cast %42 : vector<1x512xf32> to vector<1x512xf32>
    %46 = vector.broadcast %45 : vector<1x512xf32> to vector<16x512xf32>
    %47 = arith.select %44, %46, %39 : vector<16x512xi1>, vector<16x512xf32>
    %48 = arith.addf %3, %47 : vector<16x512xf32>
    %cst_12 = arith.constant 0.000000e+00 : f32
    %49 = vector.broadcast %cst_12 : f32 to vector<16x512xf32>
    %50 = arith.maximumf %48, %49 : vector<16x512xf32>
    %51 = arith.truncf %50 : vector<16x512xf32> to vector<16x512xbf16>
    %c0_13 = arith.constant 0 : index
    %c0_14 = arith.constant 0 : index
    %52 = vector.load %arg5[%c0_13, %c0_14] : memref<512x1024xbf16, #tpu.memory_space<vmem>>, vector<512x1024xbf16>
    %cst_15 = arith.constant dense<0.000000e+00> : vector<16x1024xf32>
    %53 = tpu.matmul %51, %52, %cst_15 {dimension_numbers = #tpu.dot_dimension_numbers<[1], [0], [0], [1], [0, 0, 1, 1], [], []>} : vector<16x512xbf16>, vector<512x1024xbf16>, vector<16x1024xf32> -> vector<16x1024xf32>
    %c0_16 = arith.constant 0 : index
    %c0_17 = arith.constant 0 : index
    %54 = vector.load %arg6[%c0_16, %c0_17] : memref<1x1024xf32, #tpu.memory_space<vmem>>, vector<1x1024xf32>
    %55 = vector.broadcast %54 : vector<1x1024xf32> to vector<16x1024xf32>
    %56 = arith.addf %53, %55 : vector<16x1024xf32>
    %cst_18 = arith.constant 0.000000e+00 : f32
    %57 = vector.broadcast %cst_18 : f32 to vector<16x1024xf32>
    %58 = arith.maximumf %56, %57 : vector<16x1024xf32>
    %59 = arith.truncf %58 : vector<16x1024xf32> to vector<16x1024xbf16>
    %c0_19 = arith.constant 0 : index
    %c0_20 = arith.constant 0 : index
    %60 = vector.load %arg7[%c0_19, %c0_20] : memref<1024x384xbf16, #tpu.memory_space<vmem>>, vector<1024x384xbf16>
    %cst_21 = arith.constant dense<0.000000e+00> : vector<16x384xf32>
    %61 = tpu.matmul %59, %60, %cst_21 {dimension_numbers = #tpu.dot_dimension_numbers<[1], [0], [0], [1], [0, 0, 1, 1], [], []>} : vector<16x1024xbf16>, vector<1024x384xbf16>, vector<16x384xf32> -> vector<16x384xf32>
    %c0_22 = arith.constant 0 : index
    %c0_23 = arith.constant 0 : index
    %62 = vector.load %arg8[%c0_22, %c0_23] : memref<1x384xf32, #tpu.memory_space<vmem>>, vector<1x384xf32>
    %63 = vector.broadcast %62 : vector<1x384xf32> to vector<16x384xf32>
    %64 = arith.addf %61, %63 : vector<16x384xf32>
    %65 = arith.negf %64 : vector<16x384xf32>
    %66 = math.exp %65 : vector<16x384xf32>
    %cst_24 = arith.constant 1.000000e+00 : f32
    %67 = vector.broadcast %cst_24 : f32 to vector<16x384xf32>
    %68 = arith.addf %67, %66 : vector<16x384xf32>
    %69 = arith.divf %67, %68 : vector<16x384xf32>
    %70 = arith.truncf %69 : vector<16x384xf32> to vector<16x384xbf16>
    %c0_25 = arith.constant 0 : index
    %c0_26 = arith.constant 0 : index
    %71 = vector.load %arg9[%c0_25, %c0_26] : memref<16x384xbf16, #tpu.memory_space<vmem>>, vector<16x384xbf16>
    tpu.vector_store %arg9[%c0_25, %c0_26], %70 {strides = array<i32>} : memref<16x384xbf16, #tpu.memory_space<vmem>>, vector<16x384xbf16>,
    return
  }
  func.func @transform_0(%arg0: i32) -> (i32, i32) {
    %c0_i32 = arith.constant 0 : i32
    %c0_i32_0 = arith.constant 0 : i32
    return %arg0, %c0_i32 : i32, i32
  }
  func.func @transform_1(%arg0: i32) -> (i32, i32) {
    %c0_i32 = arith.constant 0 : i32
    %c0_i32_0 = arith.constant 0 : i32
    return %arg0, %c0_i32 : i32, i32
  }
  func.func @transform_2(%arg0: i32) -> (i32, i32) {
    %c0_i32 = arith.constant 0 : i32
    %c0_i32_0 = arith.constant 0 : i32
    %c0_i32_1 = arith.constant 0 : i32
    return %c0_i32, %c0_i32_0 : i32, i32
  }
  func.func @transform_3(%arg0: i32) -> (i32, i32) {
    %c0_i32 = arith.constant 0 : i32
    %c0_i32_0 = arith.constant 0 : i32
    %c0_i32_1 = arith.constant 0 : i32
    return %c0_i32, %c0_i32_0 : i32, i32
  }
  func.func @transform_4(%arg0: i32) -> (i32, i32) {
    %c0_i32 = arith.constant 0 : i32
    %c0_i32_0 = arith.constant 0 : i32
    %c0_i32_1 = arith.constant 0 : i32
    return %c0_i32, %c0_i32_0 : i32, i32
  }
  func.func @transform_5(%arg0: i32) -> (i32, i32) {
    %c0_i32 = arith.constant 0 : i32
    %c0_i32_0 = arith.constant 0 : i32
    %c0_i32_1 = arith.constant 0 : i32
    return %c0_i32, %c0_i32_0 : i32, i32
  }
  func.func @transform_6(%arg0: i32) -> (i32, i32) {
    %c0_i32 = arith.constant 0 : i32
    %c0_i32_0 = arith.constant 0 : i32
    %c0_i32_1 = arith.constant 0 : i32
    return %c0_i32, %c0_i32_0 : i32, i32
  }
  func.func @transform_7(%arg0: i32) -> (i32, i32) {
    %c0_i32 = arith.constant 0 : i32
    %c0_i32_0 = arith.constant 0 : i32
    %c0_i32_1 = arith.constant 0 : i32
    return %c0_i32, %c0_i32_0 : i32, i32
  }
  func.func @transform_8(%arg0: i32) -> (i32, i32) {
    %c0_i32 = arith.constant 0 : i32
    %c0_i32_0 = arith.constant 0 : i32
    return %arg0, %c0_i32 : i32, i32
  }
}

</mosaic_0001>

<llo_original>
// kernel: generator_forward.1
$region0: #{generator_forward.1}
  #allocation0 [shape = 'u32[]', space=smem, size = 0x4, offset = 0x4, fixed_abs, tag = 'smem constant byte address 0x4 - core index']
  #allocation1 [shape = 'u32[72,128]{1,0:T(1,128)}', space=vmem, size = 0x9000, scoped, tag = 'internal scratch']
  %s0 = inlined_call_operand.vmem [shape: f32[16,128], index: 0, kind: input, shape index: {}]
  %s1 = inlined_call_operand.vmem [shape: s32[16,1], index: 1, kind: input, shape index: {}]
  %s2 = inlined_call_operand.vmem [shape: f32[8,512], index: 2, kind: input, shape index: {}]
  %s3 = inlined_call_operand.hbm [shape: bf16[128,512], index: 3, kind: input, shape index: {}]
  %s4 = inlined_call_operand.hbm [shape: bf16[512,1024], index: 4, kind: input, shape index: {}]
  %s5 = inlined_call_operand.vmem [shape: f32[1,1024], index: 5, kind: input, shape index: {}]
  %s6 = inlined_call_operand.hbm [shape: bf16[1024,384], index: 6, kind: input, shape index: {}]
  %s7 = inlined_call_operand.vmem [shape: f32[1,384], index: 7, kind: input, shape index: {}]
  %s8 = inlined_call_operand.vmem [shape: bf16[16,384], index: 8, kind: output, shape index: {}]
  %s9 = sld [smem:[#allocation0]]
  $region54: #{generator_forward.1} parent=0
    _
  %s11 = ssub.s32 1, %s9
  %s12 = scalar_select 0, %s11, %s9
  $region1: #{generator_forward.1} parent=0
    #allocation2 [shape = 'u8[131072]{0}', space=vmem, size = 0x20000, scoped, tag = 'input window, operand 3, single buffered']
    #allocation3 [shape = 's32[1]{0}', space=sflag, size = 0x4, scoped, tag = 'scoped memory for generator_forward.1']
    #allocation4 [shape = 'u8[1048576]{0}', space=vmem, size = 0x100000, scoped, tag = 'input window, operand 4, single buffered']
    #allocation5 [shape = 's32[1]{0}', space=sflag, size = 0x4, scoped, tag = 'scoped memory for generator_forward.1']
    #allocation6 [shape = 'u8[786432]{0}', space=vmem, size = 0xc0000, scoped, tag = 'input window, operand 6, single buffered']
    %13 = vsyncpa [#allocation3], 0
    %14 = vsyncpa [#allocation5], 0
    // Predicated region
    $region2: #{generator_forward.1} parent=1 // pred_check
      _
    $region3: #{generator_forward.1} parent=1 // pred_check_branch
      %16 = sbr.rel (0) target = $region5
    $region4: #{generator_forward.1} parent=1 // pred_region
      _
    $region5: #{generator_forward.1} parent=1 // pred_fallthru
      _
    // Predicated region
    $region6: #{generator_forward.1} parent=1 // pred_check
      _
    $region7: #{generator_forward.1} parent=1 // pred_check_branch
      %18 = sbr.rel (0) target = $region9
    $region8: #{generator_forward.1} parent=1 // pred_region
      _
    $region9: #{generator_forward.1} parent=1 // pred_fallthru
      _
    // Predicated region
    $region10: #{generator_forward.1} parent=1 // pred_check
      _
    $region11: #{generator_forward.1} parent=1 // pred_check_branch
      %20 = sbr.rel (0) target = $region13
    $region12: #{generator_forward.1} parent=1 // pred_region
      _
    $region13: #{generator_forward.1} parent=1 // pred_fallthru
      _
    // Predicated region
    $region14: #{generator_forward.1} parent=1 // pred_check
      _
    $region15: #{generator_forward.1} parent=1 // pred_check_branch
      %22 = sbr.rel (0) target = $region17
    $region16: #{generator_forward.1} parent=1 // pred_region
      %24 = vsyncadd [#allocation3], 0
      %s25 = sshll.u32 %s3, 4
      %s26 = int_to_ptr.hbm [resolvable:$true] %s25
      %s27 = sshll.u32 [#allocation2], 4
      %s28 = int_to_ptr.vmem [resolvable:$true] %s27
      %33 = dma.hbm_to_vmem [thread:$0]  %s26, 4096, %s28, [#allocation3], 256, 256, 16
    $region17: #{generator_forward.1} parent=1 // pred_fallthru
      _
    // Predicated region
    $region18: #{generator_forward.1} parent=1 // pred_check
      _
    $region19: #{generator_forward.1} parent=1 // pred_check_branch
      %35 = sbr.rel (0) target = $region21
    $region20: #{generator_forward.1} parent=1 // pred_region
      %37 = vsyncadd [#allocation5], 0
      %s38 = sshll.u32 %s4, 4
      %s39 = int_to_ptr.hbm [resolvable:$true] %s38
      %s40 = sshll.u32 [#allocation4], 4
      %s41 = int_to_ptr.vmem [resolvable:$true] %s40
      %46 = dma.hbm_to_vmem [thread:$0]  %s39, 32768, %s41, [#allocation5], 512, 512, 32
    $region21: #{generator_forward.1} parent=1 // pred_fallthru
      _
    // Predicated region
    $region22: #{generator_forward.1} parent=1 // pred_check
      _
    $region23: #{generator_forward.1} parent=1 // pred_check_branch
      %48 = sbr.rel (0) target = $region25
    $region24: #{generator_forward.1} parent=1 // pred_region
      _
    $region25: #{generator_forward.1} parent=1 // pred_fallthru
      _
    // Predicated region
    $region26: #{generator_forward.1} parent=1 // pred_check
      _
    $region27: #{generator_forward.1} parent=1 // pred_check_branch
      %50 = sbr.rel (0) target = $region29
    $region28: #{generator_forward.1} parent=1 // pred_region
      %52 = vsyncadd [#allocation5], 0
      %s53 = sshll.u32 %s6, 4
      %s54 = int_to_ptr.hbm [resolvable:$true] %s53
      %s55 = sshll.u32 [#allocation6], 4
      %s56 = int_to_ptr.vmem [resolvable:$true] %s55
      %61 = dma.hbm_to_vmem [thread:$0]  %s54, 24576, %s56, [#allocation5], 192, 192, 12
    $region29: #{generator_forward.1} parent=1 // pred_fallthru
      _
    // Predicated region
    $region30: #{generator_forward.1} parent=1 // pred_check
      _
    $region31: #{generator_forward.1} parent=1 // pred_check_branch
      %63 = sbr.rel (0) target = $region33
    $region32: #{generator_forward.1} parent=1 // pred_region
      _
    $region33: #{generator_forward.1} parent=1 // pred_fallthru
      _
    // Predicated region
    $region34: #{generator_forward.1} parent=1 // pred_check
      _
    $region35: #{generator_forward.1} parent=1 // pred_check_branch
      %65 = sbr.rel (0) target = $region37
    $region36: #{generator_forward.1} parent=1 // pred_region
      %67 = dma.done [#allocation3], 4096
    $region37: #{generator_forward.1} parent=1 // pred_fallthru
      _
    // Predicated region
    $region38: #{generator_forward.1} parent=1 // pred_check
      _
    $region39: #{generator_forward.1} parent=1 // pred_check_branch
      %69 = sbr.rel (0) target = $region41
    $region40: #{generator_forward.1} parent=1 // pred_region
      %71 = dma.done [#allocation5], 32768
    $region41: #{generator_forward.1} parent=1 // pred_fallthru
      _
    // Predicated region
    $region42: #{generator_forward.1} parent=1 // pred_check
      _
    $region43: #{generator_forward.1} parent=1 // pred_check_branch
      %73 = sbr.rel (0) target = $region45
    $region44: #{generator_forward.1} parent=1 // pred_region
      %75 = dma.done [#allocation5], 24576
    $region45: #{generator_forward.1} parent=1 // pred_fallthru
      _
    %v76 = vld [vmem:[%s0] sm:$0xff]
    %v77 = vld [vmem:[%s0 + $0x8] sm:$0xff]
    %v78 = vpack.c.bf16 %v77, %v76
    %v79 = vld [vmem:[#allocation2] sm:$0xff]
    %v80 = vld [vmem:[#allocation2 + $0x8] sm:$0xff]
    %v81 = vld [vmem:[#allocation2 + $0x10] sm:$0xff]
    %v82 = vld [vmem:[#allocation2 + $0x18] sm:$0xff]
    %v83 = vld [vmem:[#allocation2 + $0x20] sm:$0xff]
    %v84 = vld [vmem:[#allocation2 + $0x28] sm:$0xff]
    %v85 = vld [vmem:[#allocation2 + $0x30] sm:$0xff]
    %v86 = vld [vmem:[#allocation2 + $0x38] sm:$0xff]
    %v87 = vld [vmem:[#allocation2 + $0x40] sm:$0xff]
    %v88 = vld [vmem:[#allocation2 + $0x48] sm:$0xff]
    %v89 = vld [vmem:[#allocation2 + $0x50] sm:$0xff]
    %v90 = vld [vmem:[#allocation2 + $0x58] sm:$0xff]
    %v91 = vld [vmem:[#allocation2 + $0x60] sm:$0xff]
    %v92 = vld [vmem:[#allocation2 + $0x68] sm:$0xff]
    %v93 = vld [vmem:[#allocation2 + $0x70] sm:$0xff]
    %v94 = vld [vmem:[#allocation2 + $0x78] sm:$0xff]
    %v95 = vld [vmem:[#allocation2 + $0x80] sm:$0xff]
    %v96 = vld [vmem:[#allocation2 + $0x88] sm:$0xff]
    %v97 = vld [vmem:[#allocation2 + $0x90] sm:$0xff]
    %v98 = vld [vmem:[#allocation2 + $0x98] sm:$0xff]
    %v99 = vld [vmem:[#allocation2 + $0xa0] sm:$0xff]
    %v100 = vld [vmem:[#allocation2 + $0xa8] sm:$0xff]
    %v101 = vld [vmem:[#allocation2 + $0xb0] sm:$0xff]
    %v102 = vld [vmem:[#allocation2 + $0xb8] sm:$0xff]
    %v103 = vld [vmem:[#allocation2 + $0xc0] sm:$0xff]
    %v104 = vld [vmem:[#allocation2 + $0xc8] sm:$0xff]
    %v105 = vld [vmem:[#allocation2 + $0xd0] sm:$0xff]
    %v106 = vld [vmem:[#allocation2 + $0xd8] sm:$0xff]
    %v107 = vld [vmem:[#allocation2 + $0xe0] sm:$0xff]
    %v108 = vld [vmem:[#allocation2 + $0xe8] sm:$0xff]
    %v109 = vld [vmem:[#allocation2 + $0xf0] sm:$0xff]
    %v110 = vld [vmem:[#allocation2 + $0xf8] sm:$0xff]
    %v111 = vld [vmem:[%s1] sm:$0xff]
    %v112 = vld [vmem:[%s1 + $0x8] sm:$0xff]
    %v113 = vld [vmem:[%s2] ss:$8 sm:$0xf]
    %v115 = vperm.slane %v113, 0
    %v116 = vperm.slane %v113, 1
    %v117 = vperm.slane %v113, 2
    %v118 = vperm.slane %v113, 3
    %vm123 = vcmp.eq.s32.totalorder %v111, 1
    %vm124 = vcmp.eq.s32.totalorder %v112, 1
    %s125 = scalar_lea.vmem %s2, 1
    %v126 = vld [vmem:[%s125] ss:$8 sm:$0xf]
    %v127 = vsel %vm123, 1, 0
    %v128 = vsel %vm124, 1, 0
    %129 = vset.pattern.permute.xlu0 0
    %130 = vperm.xlu0 %129, %v127
    %v131 = vpop.permute.xlu0 %130
    %132 = vset.pattern.permute.xlu0 0
    %133 = vperm.xlu0 %132, %v128
    %v134 = vpop.permute.xlu0 %133
    %vm135 = vcmp.eq.s32.totalorder %v131, 1
    %vm136 = vcmp.eq.s32.totalorder %v134, 1
    %v138 = vperm.slane %v126, 0
    %v139 = vperm.slane %v126, 1
    %v140 = vperm.slane %v126, 2
    %v141 = vperm.slane %v126, 3
    %v146 = vsel %vm135, %v138, %v115
    %v147 = vsel %vm135, %v139, %v116
    %v148 = vsel %vm135, %v140, %v117
    %v149 = vsel %vm135, %v141, %v118
    %v150 = vsel %vm136, %v138, %v115
    %v151 = vsel %vm136, %v139, %v116
    %v152 = vsel %vm136, %v140, %v117
    %v153 = vsel %vm136, %v141, %v118
    %vm154 = vcmp.eq.s32.totalorder %v111, 2
    %vm155 = vcmp.eq.s32.totalorder %v112, 2
    %s156 = scalar_lea.vmem %s2, 2
    %v157 = vld [vmem:[%s156] ss:$8 sm:$0xf]
    %v158 = vsel %vm154, 1, 0
    %v159 = vsel %vm155, 1, 0
    %160 = vset.pattern.permute.xlu0 0
    %161 = vperm.xlu0 %160, %v158
    %v162 = vpop.permute.xlu0 %161
    %163 = vset.pattern.permute.xlu0 0
    %164 = vperm.xlu0 %163, %v159
    %v165 = vpop.permute.xlu0 %164
    %vm166 = vcmp.eq.s32.totalorder %v162, 1
    %vm167 = vcmp.eq.s32.totalorder %v165, 1
    %v169 = vperm.slane %v157, 0
    %v170 = vperm.slane %v157, 1
    %v171 = vperm.slane %v157, 2
    %v172 = vperm.slane %v157, 3
    %v177 = vsel %vm166, %v169, %v146
    %v178 = vsel %vm166, %v170, %v147
    %v179 = vsel %vm166, %v171, %v148
    %v180 = vsel %vm166, %v172, %v149
    %v181 = vsel %vm167, %v169, %v150
    %v182 = vsel %vm167, %v170, %v151
    %v183 = vsel %vm167, %v171, %v152
    %v184 = vsel %vm167, %v172, %v153
    %vm185 = vcmp.eq.s32.totalorder %v111, 3
    %vm186 = vcmp.eq.s32.totalorder %v112, 3
    %s187 = scalar_lea.vmem %s2, 3
    %v188 = vld [vmem:[%s187] ss:$8 sm:$0xf]
    %v189 = vsel %vm185, 1, 0
    %v190 = vsel %vm186, 1, 0
    %191 = vset.pattern.permute.xlu0 0
    %192 = vperm.xlu0 %191, %v189
    %v193 = vpop.permute.xlu0 %192
    %194 = vset.pattern.permute.xlu0 0
    %195 = vperm.xlu0 %194, %v190
    %v196 = vpop.permute.xlu0 %195
    %vm197 = vcmp.eq.s32.totalorder %v193, 1
    %vm198 = vcmp.eq.s32.totalorder %v196, 1
    %v200 = vperm.slane %v188, 0
    %v201 = vperm.slane %v188, 1
    %v202 = vperm.slane %v188, 2
    %v203 = vperm.slane %v188, 3
    %v208 = vsel %vm197, %v200, %v177
    %v209 = vsel %vm197, %v201, %v178
    %v210 = vsel %vm197, %v202, %v179
    %v211 = vsel %vm197, %v203, %v180
    %v212 = vsel %vm198, %v200, %v181
    %v213 = vsel %vm198, %v201, %v182
    %v214 = vsel %vm198, %v202, %v183
    %v215 = vsel %vm198, %v203, %v184
    %vm216 = vcmp.eq.s32.totalorder %v111, 4
    %vm217 = vcmp.eq.s32.totalorder %v112, 4
    %s218 = scalar_lea.vmem %s2, 4
    %v219 = vld [vmem:[%s218] ss:$8 sm:$0xf]
    %v220 = vsel %vm216, 1, 0
    %v221 = vsel %vm217, 1, 0
    %222 = vset.pattern.permute.xlu0 0
    %223 = vperm.xlu0 %222, %v220
    %v224 = vpop.permute.xlu0 %223
    %225 = vset.pattern.permute.xlu0 0
    %226 = vperm.xlu0 %225, %v221
    %v227 = vpop.permute.xlu0 %226
    %vm228 = vcmp.eq.s32.totalorder %v224, 1
    %vm229 = vcmp.eq.s32.totalorder %v227, 1
    %v231 = vperm.slane %v219, 0
    %v232 = vperm.slane %v219, 1
    %v233 = vperm.slane %v219, 2
    %v234 = vperm.slane %v219, 3
    %v239 = vsel %vm228, %v231, %v208
    %v240 = vsel %vm228, %v232, %v209
    %v241 = vsel %vm228, %v233, %v210
    %v242 = vsel %vm228, %v234, %v211
    %v243 = vsel %vm229, %v231, %v212
    %v244 = vsel %vm229, %v232, %v213
    %v245 = vsel %vm229, %v233, %v214
    %v246 = vsel %vm229, %v234, %v215
    %vm247 = vcmp.eq.s32.totalorder %v111, 5
    %vm248 = vcmp.eq.s32.totalorder %v112, 5
    %s249 = scalar_lea.vmem %s2, 5
    %v250 = vld [vmem:[%s249] ss:$8 sm:$0xf]
    %v251 = vsel %vm247, 1, 0
    %v252 = vsel %vm248, 1, 0
    %253 = vset.pattern.permute.xlu0 0
    %254 = vperm.xlu0 %253, %v251
    %v255 = vpop.permute.xlu0 %254
    %256 = vset.pattern.permute.xlu0 0
    %257 = vperm.xlu0 %256, %v252
    %v258 = vpop.permute.xlu0 %257
    %vm259 = vcmp.eq.s32.totalorder %v255, 1
    %vm260 = vcmp.eq.s32.totalorder %v258, 1
    %v262 = vperm.slane %v250, 0
    %v263 = vperm.slane %v250, 1
    %v264 = vperm.slane %v250, 2
    %v265 = vperm.slane %v250, 3
    %v270 = vsel %vm259, %v262, %v239
    %v271 = vsel %vm259, %v263, %v240
    %v272 = vsel %vm259, %v264, %v241
    %v273 = vsel %vm259, %v265, %v242
    %v274 = vsel %vm260, %v262, %v243
    %v275 = vsel %vm260, %v263, %v244
    %v276 = vsel %vm260, %v264, %v245
    %v277 = vsel %vm260, %v265, %v246
    %v310 = vunpack.c.l.b16 %v79
    %v311 = vunpack.c.h.b16 %v79
    %v312 = vunpack.c.l.b16 %v80
    %v313 = vunpack.c.h.b16 %v80
    %v314 = vunpack.c.l.b16 %v81
    %v315 = vunpack.c.h.b16 %v81
    %v316 = vunpack.c.l.b16 %v82
    %v317 = vunpack.c.h.b16 %v82
    %v318 = vunpack.c.l.b16 %v83
    %v319 = vunpack.c.h.b16 %v83
    %v320 = vunpack.c.l.b16 %v84
    %v321 = vunpack.c.h.b16 %v84
    %v322 = vunpack.c.l.b16 %v85
    %v323 = vunpack.c.h.b16 %v85
    %v324 = vunpack.c.l.b16 %v86
    %v325 = vunpack.c.h.b16 %v86
    %v326 = vunpack.c.l.b16 %v87
    %v327 = vunpack.c.h.b16 %v87
    %v328 = vunpack.c.l.b16 %v88
    %v329 = vunpack.c.h.b16 %v88
    %v330 = vunpack.c.l.b16 %v89
    %v331 = vunpack.c.h.b16 %v89
    %v332 = vunpack.c.l.b16 %v90
    %v333 = vunpack.c.h.b16 %v90
    %v334 = vunpack.c.l.b16 %v91
    %v335 = vunpack.c.h.b16 %v91
    %v336 = vunpack.c.l.b16 %v92
    %v337 = vunpack.c.h.b16 %v92
    %v338 = vunpack.c.l.b16 %v93
    %v339 = vunpack.c.h.b16 %v93
    %v340 = vunpack.c.l.b16 %v94
    %v341 = vunpack.c.h.b16 %v94
    %v342 = vunpack.c.l.b16 %v95
    %v343 = vunpack.c.h.b16 %v95
    %v344 = vunpack.c.l.b16 %v96
    %v345 = vunpack.c.h.b16 %v96
    %v346 = vunpack.c.l.b16 %v97
    %v347 = vunpack.c.h.b16 %v97
    %v348 = vunpack.c.l.b16 %v98
    %v349 = vunpack.c.h.b16 %v98
    %v350 = vunpack.c.l.b16 %v99
    %v351 = vunpack.c.h.b16 %v99
    %v352 = vunpack.c.l.b16 %v100
    %v353 = vunpack.c.h.b16 %v100
    %v354 = vunpack.c.l.b16 %v101
    %v355 = vunpack.c.h.b16 %v101
    %v356 = vunpack.c.l.b16 %v102
    %v357 = vunpack.c.h.b16 %v102
    %v358 = vunpack.c.l.b16 %v103
    %v359 = vunpack.c.h.b16 %v103
    %v360 = vunpack.c.l.b16 %v104
    %v361 = vunpack.c.h.b16 %v104
    %v362 = vunpack.c.l.b16 %v105
    %v363 = vunpack.c.h.b16 %v105
    %v364 = vunpack.c.l.b16 %v106
    %v365 = vunpack.c.h.b16 %v106
    %v366 = vunpack.c.l.b16 %v107
    %v367 = vunpack.c.h.b16 %v107
    %v368 = vunpack.c.l.b16 %v108
    %v369 = vunpack.c.h.b16 %v108
    %v370 = vunpack.c.l.b16 %v109
    %v371 = vunpack.c.h.b16 %v109
    %v372 = vunpack.c.l.b16 %v110
    %v373 = vunpack.c.h.b16 %v110
    %v374 = vpack.c.b16 %v314, %v310
    %v375 = vpack.c.b16 %v315, %v311
    %v376 = vpack.c.b16 %v316, %v312
    %v377 = vpack.c.b16 %v317, %v313
    %v378 = vpack.c.b16 %v322, %v318
    %v379 = vpack.c.b16 %v323, %v319
    %v380 = vpack.c.b16 %v324, %v320
    %v381 = vpack.c.b16 %v325, %v321
    %v382 = vpack.c.b16 %v330, %v326
    %v383 = vpack.c.b16 %v331, %v327
    %v384 = vpack.c.b16 %v332, %v328
    %v385 = vpack.c.b16 %v333, %v329
    %v386 = vpack.c.b16 %v338, %v334
    %v387 = vpack.c.b16 %v339, %v335
    %v388 = vpack.c.b16 %v340, %v336
    %v389 = vpack.c.b16 %v341, %v337
    %v390 = vpack.c.b16 %v346, %v342
    %v391 = vpack.c.b16 %v347, %v343
    %v392 = vpack.c.b16 %v348, %v344
    %v393 = vpack.c.b16 %v349, %v345
    %v394 = vpack.c.b16 %v354, %v350
    %v395 = vpack.c.b16 %v355, %v351
    %v396 = vpack.c.b16 %v356, %v352
    %v397 = vpack.c.b16 %v357, %v353
    %v398 = vpack.c.b16 %v362, %v358
    %v399 = vpack.c.b16 %v363, %v359
    %v400 = vpack.c.b16 %v364, %v360
    %v401 = vpack.c.b16 %v365, %v361
    %v402 = vpack.c.b16 %v370, %v366
    %v403 = vpack.c.b16 %v371, %v367
    %v404 = vpack.c.b16 %v372, %v368
    %v405 = vpack.c.b16 %v373, %v369
    %438 = vmatpush.bf16.msra.mxu0 %v402
    %439 = vmatpush.bf16.msra.mxu0 %v398
    %440 = vmatpush.bf16.msra.mxu0 %v394
    %441 = vmatpush.bf16.msra.mxu0 %v390
    %442 = vmatpush.bf16.msra.mxu0 %v386
    %443 = vmatpush.bf16.msra.mxu0 %v382
    %444 = vmatpush.bf16.msra.mxu0 %v378
    %445 = vmatpush.bf16.msra.mxu0 %v374
    %446 = vmatmul.bf16.gmra.mxu0 %v78
    %v447 = vpop.f32.mrf.mxu0
    %v448 = vadd.f32 %v270, %v447
    %v449 = vpop.f32.mrf.mxu0
    %v450 = vadd.f32 %v274, %v449
    %451 = vdwg.mxu0
    %452 = vmatpush.bf16.msra.mxu0 %v403
    %453 = vmatpush.bf16.msra.mxu0 %v399
    %454 = vmatpush.bf16.msra.mxu0 %v395
    %455 = vmatpush.bf16.msra.mxu0 %v391
    %456 = vmatpush.bf16.msra.mxu0 %v387
    %457 = vmatpush.bf16.msra.mxu0 %v383
    %458 = vmatpush.bf16.msra.mxu0 %v379
    %459 = vmatpush.bf16.msra.mxu0 %v375
    %460 = vmatmul.bf16.gmra.mxu0 %v78
    %v461 = vpop.f32.mrf.mxu0
    %v462 = vadd.f32 %v271, %v461
    %v463 = vpop.f32.mrf.mxu0
    %v464 = vadd.f32 %v275, %v463
    %465 = vdwg.mxu0
    %466 = vmatpush.bf16.msra.mxu0 %v404
    %467 = vmatpush.bf16.msra.mxu0 %v400
    %468 = vmatpush.bf16.msra.mxu0 %v396
    %469 = vmatpush.bf16.msra.mxu0 %v392
    %470 = vmatpush.bf16.msra.mxu0 %v388
    %471 = vmatpush.bf16.msra.mxu0 %v384
    %472 = vmatpush.bf16.msra.mxu0 %v380
    %473 = vmatpush.bf16.msra.mxu0 %v376
    %474 = vmatmul.bf16.gmra.mxu0 %v78
    %v475 = vpop.f32.mrf.mxu0
    %v476 = vadd.f32 %v272, %v475
    %v477 = vpop.f32.mrf.mxu0
    %v478 = vadd.f32 %v276, %v477
    %479 = vdwg.mxu0
    %480 = vmatpush.bf16.msra.mxu0 %v405
    %481 = vmatpush.bf16.msra.mxu0 %v401
    %482 = vmatpush.bf16.msra.mxu0 %v397
    %483 = vmatpush.bf16.msra.mxu0 %v393
    %484 = vmatpush.bf16.msra.mxu0 %v389
    %485 = vmatpush.bf16.msra.mxu0 %v385
    %486 = vmatpush.bf16.msra.mxu0 %v381
    %487 = vmatpush.bf16.msra.mxu0 %v377
    %488 = vmatmul.bf16.gmra.mxu0 %v78
    %v489 = vpop.f32.mrf.mxu0
    %v490 = vadd.f32 %v273, %v489
    %v491 = vpop.f32.mrf.mxu0
    %v492 = vadd.f32 %v277, %v491
    %493 = vdwg.mxu0
    %v494 = vmax.f32 %v448, 0.0
    %v495 = vmax.f32 %v462, 0.0
    %v496 = vmax.f32 %v476, 0.0
    %v497 = vmax.f32 %v490, 0.0
    %v498 = vmax.f32 %v450, 0.0
    %v499 = vmax.f32 %v464, 0.0
    %v500 = vmax.f32 %v478, 0.0
    %v501 = vmax.f32 %v492, 0.0
    %v502 = vpack.c.bf16 %v498, %v494
    %v503 = vpack.c.bf16 %v499, %v495
    %v504 = vpack.c.bf16 %v500, %v496
    %v505 = vpack.c.bf16 %v501, %v497
    %v506 = vld [vmem:[#allocation4] sm:$0xff]
    %v507 = vld [vmem:[#allocation4 + $0x8] sm:$0xff]
    %v508 = vld [vmem:[#allocation4 + $0x10] sm:$0xff]
    %v509 = vld [vmem:[#allocation4 + $0x18] sm:$0xff]
    %v510 = vld [vmem:[#allocation4 + $0x20] sm:$0xff]
    %v511 = vld [vmem:[#allocation4 + $0x28] sm:$0xff]
    %v512 = vld [vmem:[#allocation4 + $0x30] sm:$0xff]
    %v513 = vld [vmem:[#allocation4 + $0x38] sm:$0xff]
    %v514 = vld [vmem:[#allocation4 + $0x40] sm:$0xff]
    %v515 = vld [vmem:[#allocation4 + $0x48] sm:$0xff]
    %v516 = vld [vmem:[#allocation4 + $0x50] sm:$0xff]
    %v517 = vld [vmem:[#allocation4 + $0x58] sm:$0xff]
    %v518 = vld [vmem:[#allocation4 + $0x60] sm:$0xff]
    %v519 = vld [vmem:[#allocation4 + $0x68] sm:$0xff]
    %v520 = vld [vmem:[#allocation4 + $0x70] sm:$0xff]
    %v521 = vld [vmem:[#allocation4 + $0x78] sm:$0xff]
    %v522 = vld [vmem:[#allocation4 + $0x80] sm:$0xff]
    %v523 = vld [vmem:[#allocation4 + $0x88] sm:$0xff]
    %v524 = vld [vmem:[#allocation4 + $0x90] sm:$0xff]
    %v525 = vld [vmem:[#allocation4 + $0x98] sm:$0xff]
    %v526 = vld [vmem:[#allocation4 + $0xa0] sm:$0xff]
    %v527 = vld [vmem:[#allocation4 + $0xa8] sm:$0xff]
    %v528 = vld [vmem:[#allocation4 + $0xb0] sm:$0xff]
    %v529 = vld [vmem:[#allocation4 + $0xb8] sm:$0xff]
    %v530 = vld [vmem:[#allocation4 + $0xc0] sm:$0xff]
    %v531 = vld [vmem:[#allocation4 + $0xc8] sm:$0xff]
    %v532 = vld [vmem:[#allocation4 + $0xd0] sm:$0xff]
    %v533 = vld [vmem:[#allocation4 + $0xd8] sm:$0xff]
    %v534 = vld [vmem:[#allocation4 + $0xe0] sm:$0xff]
    %v535 = vld [vmem:[#allocation4 + $0xe8] sm:$0xff]
    %v536 = vld [vmem:[#allocation4 + $0xf0] sm:$0xff]
    %v537 = vld [vmem:[#allocation4 + $0xf8] sm:$0xff]
    %v538 = vld [vmem:[#allocation4 + $0x100] sm:$0xff]
    %v539 = vld [vmem:[#allocation4 + $0x108] sm:$0xff]
    %v540 = vld [vmem:[#allocation4 + $0x110] sm:$0xff]
    %v541 = vld [vmem:[#allocation4 + $0x118] sm:$0xff]
    %v542 = vld [vmem:[#allocation4 + $0x120] sm:$0xff]
    %v543 = vld [vmem:[#allocation4 + $0x128] sm:$0xff]
    %v544 = vld [vmem:[#allocation4 + $0x130] sm:$0xff]
    %v545 = vld [vmem:[#allocation4 + $0x138] sm:$0xff]
    %v546 = vld [vmem:[#allocation4 + $0x140] sm:$0xff]
    %v547 = vld [vmem:[#allocation4 + $0x148] sm:$0xff]
    %v548 = vld [vmem:[#allocation4 + $0x150] sm:$0xff]
    %v549 = vld [vmem:[#allocation4 + $0x158] sm:$0xff]
    %v550 = vld [vmem:[#allocation4 + $0x160] sm:$0xff]
    %v551 = vld [vmem:[#allocation4 + $0x168] sm:$0xff]
    %v552 = vld [vmem:[#allocation4 + $0x170] sm:$0xff]
    %v553 = vld [vmem:[#allocation4 + $0x178] sm:$0xff]
    %v554 = vld [vmem:[#allocation4 + $0x180] sm:$0xff]
    %v555 = vld [vmem:[#allocation4 + $0x188] sm:$0xff]
    %v556 = vld [vmem:[#allocation4 + $0x190] sm:$0xff]
    %v557 = vld [vmem:[#allocation4 + $0x198] sm:$0xff]
    %v558 = vld [vmem:[#allocation4 + $0x1a0] sm:$0xff]
    %v559 = vld [vmem:[#allocation4 + $0x1a8] sm:$0xff]
    %v560 = vld [vmem:[#allocation4 + $0x1b0] sm:$0xff]
    %v561 = vld [vmem:[#allocation4 + $0x1b8] sm:$0xff]
    %v562 = vld [vmem:[#allocation4 + $0x1c0] sm:$0xff]
    %v563 = vld [vmem:[#allocation4 + $0x1c8] sm:$0xff]
    %v564 = vld [vmem:[#allocation4 + $0x1d0] sm:$0xff]
    %v565 = vld [vmem:[#allocation4 + $0x1d8] sm:$0xff]
    %v566 = vld [vmem:[#allocation4 + $0x1e0] sm:$0xff]
    %v567 = vld [vmem:[#allocation4 + $0x1e8] sm:$0xff]
    %v568 = vld [vmem:[#allocation4 + $0x1f0] sm:$0xff]
    %v569 = vld [vmem:[#allocation4 + $0x1f8] sm:$0xff]
    %v570 = vld [vmem:[#allocation4 + $0x200] sm:$0xff]
    %v571 = vld [vmem:[#allocation4 + $0x208] sm:$0xff]
    %v572 = vld [vmem:[#allocation4 + $0x210] sm:$0xff]
    %v573 = vld [vmem:[#allocation4 + $0x218] sm:$0xff]
    %v574 = vld [vmem:[#allocation4 + $0x220] sm:$0xff]
    %v575 = vld [vmem:[#allocation4 + $0x228] sm:$0xff]
    %v576 = vld [vmem:[#allocation4 + $0x230] sm:$0xff]
    %v577 = vld [vmem:[#allocation4 + $0x238] sm:$0xff]
    %v578 = vld [vmem:[#allocation4 + $0x240] sm:$0xff]
    %v579 = vld [vmem:[#allocation4 + $0x248] sm:$0xff]
    %v580 = vld [vmem:[#allocation4 + $0x250] sm:$0xff]
    %v581 = vld [vmem:[#allocation4 + $0x258] sm:$0xff]
    %v582 = vld [vmem:[#allocation4 + $0x260] sm:$0xff]
    %v583 = vld [vmem:[#allocation4 + $0x268] sm:$0xff]
    %v584 = vld [vmem:[#allocation4 + $0x270] sm:$0xff]
    %v585 = vld [vmem:[#allocation4 + $0x278] sm:$0xff]
    %v586 = vld [vmem:[#allocation4 + $0x280] sm:$0xff]
    %v587 = vld [vmem:[#allocation4 + $0x288] sm:$0xff]
    %v588 = vld [vmem:[#allocation4 + $0x290] sm:$0xff]
    %v589 = vld [vmem:[#allocation4 + $0x298] sm:$0xff]
    %v590 = vld [vmem:[#allocation4 + $0x2a0] sm:$0xff]
    %v591 = vld [vmem:[#allocation4 + $0x2a8] sm:$0xff]
    %v592 = vld [vmem:[#allocation4 + $0x2b0] sm:$0xff]
    %v593 = vld [vmem:[#allocation4 + $0x2b8] sm:$0xff]
    %v594 = vld [vmem:[#allocation4 + $0x2c0] sm:$0xff]
    %v595 = vld [vmem:[#allocation4 + $0x2c8] sm:$0xff]
    %v596 = vld [vmem:[#allocation4 + $0x2d0] sm:$0xff]
    %v597 = vld [vmem:[#allocation4 + $0x2d8] sm:$0xff]
    %v598 = vld [vmem:[#allocation4 + $0x2e0] sm:$0xff]
    %v599 = vld [vmem:[#allocation4 + $0x2e8] sm:$0xff]
    %v600 = vld [vmem:[#allocation4 + $0x2f0] sm:$0xff]
    %v601 = vld [vmem:[#allocation4 + $0x2f8] sm:$0xff]
    %v602 = vld [vmem:[#allocation4 + $0x300] sm:$0xff]
    %v603 = vld [vmem:[#allocation4 + $0x308] sm:$0xff]
    %v604 = vld [vmem:[#allocation4 + $0x310] sm:$0xff]
    %v605 = vld [vmem:[#allocation4 + $0x318] sm:$0xff]
    %v606 = vld [vmem:[#allocation4 + $0x320] sm:$0xff]
    %v607 = vld [vmem:[#allocation4 + $0x328] sm:$0xff]
    %v608 = vld [vmem:[#allocation4 + $0x330] sm:$0xff]
    %v609 = vld [vmem:[#allocation4 + $0x338] sm:$0xff]
    %v610 = vld [vmem:[#allocation4 + $0x340] sm:$0xff]
    %v611 = vld [vmem:[#allocation4 + $0x348] sm:$0xff]
    %v612 = vld [vmem:[#allocation4 + $0x350] sm:$0xff]
    %v613 = vld [vmem:[#allocation4 + $0x358] sm:$0xff]
    %v614 = vld [vmem:[#allocation4 + $0x360] sm:$0xff]
    %v615 = vld [vmem:[#allocation4 + $0x368] sm:$0xff]
    %v616 = vld [vmem:[#allocation4 + $0x370] sm:$0xff]
    %v617 = vld [vmem:[#allocation4 + $0x378] sm:$0xff]
    %v618 = vld [vmem:[#allocation4 + $0x380] sm:$0xff]
    %v619 = vld [vmem:[#allocation4 + $0x388] sm:$0xff]
    %v620 = vld [vmem:[#allocation4 + $0x390] sm:$0xff]
    %v621 = vld [vmem:[#allocation4 + $0x398] sm:$0xff]
    %v622 = vld [vmem:[#allocation4 + $0x3a0] sm:$0xff]
    %v623 = vld [vmem:[#allocation4 + $0x3a8] sm:$0xff]
    %v624 = vld [vmem:[#allocation4 + $0x3b0] sm:$0xff]
    %v625 = vld [vmem:[#allocation4 + $0x3b8] sm:$0xff]
    %v626 = vld [vmem:[#allocation4 + $0x3c0] sm:$0xff]
    %v627 = vld [vmem:[#allocation4 + $0x3c8] sm:$0xff]
    %v628 = vld [vmem:[#allocation4 + $0x3d0] sm:$0xff]
    %v629 = vld [vmem:[#allocation4 + $0x3d8] sm:$0xff]
    %v630 = vld [vmem:[#allocation4 + $0x3e0] sm:$0xff]
    %v631 = vld [vmem:[#allocation4 + $0x3e8] sm:$0xff]
    %v632 = vld [vmem:[#allocation4 + $0x3f0] sm:$0xff]
    %v633 = vld [vmem:[#allocation4 + $0x3f8] sm:$0xff]
    %v634 = vld [vmem:[#allocation4 + $0x400] sm:$0xff]
    %v635 = vld [vmem:[#allocation4 + $0x408] sm:$0xff]
    %v636 = vld [vmem:[#allocation4 + $0x410] sm:$0xff]
    %v637 = vld [vmem:[#allocation4 + $0x418] sm:$0xff]
    %v638 = vld [vmem:[#allocation4 + $0x420] sm:$0xff]
    %v639 = vld [vmem:[#allocation4 + $0x428] sm:$0xff]
    %v640 = vld [vmem:[#allocation4 + $0x430] sm:$0xff]
    %v641 = vld [vmem:[#allocation4 + $0x438] sm:$0xff]
    %v642 = vld [vmem:[#allocation4 + $0x440] sm:$0xff]
    %v643 = vld [vmem:[#allocation4 + $0x448] sm:$0xff]
    %v644 = vld [vmem:[#allocation4 + $0x450] sm:$0xff]
    %v645 = vld [vmem:[#allocation4 + $0x458] sm:$0xff]
    %v646 = vld [vmem:[#allocation4 + $0x460] sm:$0xff]
    %v647 = vld [vmem:[#allocation4 + $0x468] sm:$0xff]
    %v648 = vld [vmem:[#allocation4 + $0x470] sm:$0xff]
    %v649 = vld [vmem:[#allocation4 + $0x478] sm:$0xff]
    %v650 = vld [vmem:[#allocation4 + $0x480] sm:$0xff]
    %v651 = vld [vmem:[#allocation4 + $0x488] sm:$0xff]
    %v652 = vld [vmem:[#allocation4 + $0x490] sm:$0xff]
    %v653 = vld [vmem:[#allocation4 + $0x498] sm:$0xff]
    %v654 = vld [vmem:[#allocation4 + $0x4a0] sm:$0xff]
    %v655 = vld [vmem:[#allocation4 + $0x4a8] sm:$0xff]
    %v656 = vld [vmem:[#allocation4 + $0x4b0] sm:$0xff]
    %v657 = vld [vmem:[#allocation4 + $0x4b8] sm:$0xff]
    %v658 = vld [vmem:[#allocation4 + $0x4c0] sm:$0xff]
    %v659 = vld [vmem:[#allocation4 + $0x4c8] sm:$0xff]
    %v660 = vld [vmem:[#allocation4 + $0x4d0] sm:$0xff]
    %v661 = vld [vmem:[#allocation4 + $0x4d8] sm:$0xff]
    %v662 = vld [vmem:[#allocation4 + $0x4e0] sm:$0xff]
    %v663 = vld [vmem:[#allocation4 + $0x4e8] sm:$0xff]
    %v664 = vld [vmem:[#allocation4 + $0x4f0] sm:$0xff]
    %v665 = vld [vmem:[#allocation4 + $0x4f8] sm:$0xff]
    %v666 = vld [vmem:[#allocation4 + $0x500] sm:$0xff]
    %v667 = vld [vmem:[#allocation4 + $0x508] sm:$0xff]
    %v668 = vld [vmem:[#allocation4 + $0x510] sm:$0xff]
    %v669 = vld [vmem:[#allocation4 + $0x518] sm:$0xff]
    %v670 = vld [vmem:[#allocation4 + $0x520] sm:$0xff]
    %v671 = vld [vmem:[#allocation4 + $0x528] sm:$0xff]
    %v672 = vld [vmem:[#allocation4 + $0x530] sm:$0xff]
    %v673 = vld [vmem:[#allocation4 + $0x538] sm:$0xff]
    %v674 = vld [vmem:[#allocation4 + $0x540] sm:$0xff]
    %v675 = vld [vmem:[#allocation4 + $0x548] sm:$0xff]
    %v676 = vld [vmem:[#allocation4 + $0x550] sm:$0xff]
    %v677 = vld [vmem:[#allocation4 + $0x558] sm:$0xff]
    %v678 = vld [vmem:[#allocation4 + $0x560] sm:$0xff]
    %v679 = vld [vmem:[#allocation4 + $0x568] sm:$0xff]
    %v680 = vld [vmem:[#allocation4 + $0x570] sm:$0xff]
    %v681 = vld [vmem:[#allocation4 + $0x578] sm:$0xff]
    %v682 = vld [vmem:[#allocation4 + $0x580] sm:$0xff]
    %v683 = vld [vmem:[#allocation4 + $0x588] sm:$0xff]
    %v684 = vld [vmem:[#allocation4 + $0x590] sm:$0xff]
    %v685 = vld [vmem:[#allocation4 + $0x598] sm:$0xff]
    %v686 = vld [vmem:[#allocation4 + $0x5a0] sm:$0xff]
    %v687 = vld [vmem:[#allocation4 + $0x5a8] sm:$0xff]
    %v688 = vld [vmem:[#allocation4 + $0x5b0] sm:$0xff]
    %v689 = vld [vmem:[#allocation4 + $0x5b8] sm:$0xff]
    %v690 = vld [vmem:[#allocation4 + $0x5c0] sm:$0xff]
    %v691 = vld [vmem:[#allocation4 + $0x5c8] sm:$0xff]
    %v692 = vld [vmem:[#allocation4 + $0x5d0] sm:$0xff]
    %v693 = vld [vmem:[#allocation4 + $0x5d8] sm:$0xff]
    %v694 = vld [vmem:[#allocation4 + $0x5e0] sm:$0xff]
    %v695 = vld [vmem:[#allocation4 + $0x5e8] sm:$0xff]
    %v696 = vld [vmem:[#allocation4 + $0x5f0] sm:$0xff]
    %v697 = vld [vmem:[#allocation4 + $0x5f8] sm:$0xff]
    %v698 = vld [vmem:[#allocation4 + $0x600] sm:$0xff]
    %v699 = vld [vmem:[#allocation4 + $0x608] sm:$0xff]
    %v700 = vld [vmem:[#allocation4 + $0x610] sm:$0xff]
    %v701 = vld [vmem:[#allocation4 + $0x618] sm:$0xff]
    %v702 = vld [vmem:[#allocation4 + $0x620] sm:$0xff]
    %v703 = vld [vmem:[#allocation4 + $0x628] sm:$0xff]
    %v704 = vld [vmem:[#allocation4 + $0x630] sm:$0xff]
    %v705 = vld [vmem:[#allocation4 + $0x638] sm:$0xff]
    %v706 = vld [vmem:[#allocation4 + $0x640] sm:$0xff]
    %v707 = vld [vmem:[#allocation4 + $0x648] sm:$0xff]
    %v708 = vld [vmem:[#allocation4 + $0x650] sm:$0xff]
    %v709 = vld [vmem:[#allocation4 + $0x658] sm:$0xff]
    %v710 = vld [vmem:[#allocation4 + $0x660] sm:$0xff]
    %v711 = vld [vmem:[#allocation4 + $0x668] sm:$0xff]
    %v712 = vld [vmem:[#allocation4 + $0x670] sm:$0xff]
    %v713 = vld [vmem:[#allocation4 + $0x678] sm:$0xff]
    %v714 = vld [vmem:[#allocation4 + $0x680] sm:$0xff]
    %v715 = vld [vmem:[#allocation4 + $0x688] sm:$0xff]
    %v716 = vld [vmem:[#allocation4 + $0x690] sm:$0xff]
    %v717 = vld [vmem:[#allocation4 + $0x698] sm:$0xff]
    %v718 = vld [vmem:[#allocation4 + $0x6a0] sm:$0xff]
    %v719 = vld [vmem:[#allocation4 + $0x6a8] sm:$0xff]
    %v720 = vld [vmem:[#allocation4 + $0x6b0] sm:$0xff]
    %v721 = vld [vmem:[#allocation4 + $0x6b8] sm:$0xff]
    %v722 = vld [vmem:[#allocation4 + $0x6c0] sm:$0xff]
    %v723 = vld [vmem:[#allocation4 + $0x6c8] sm:$0xff]
    %v724 = vld [vmem:[#allocation4 + $0x6d0] sm:$0xff]
    %v725 = vld [vmem:[#allocation4 + $0x6d8] sm:$0xff]
    %v726 = vld [vmem:[#allocation4 + $0x6e0] sm:$0xff]
    %v727 = vld [vmem:[#allocation4 + $0x6e8] sm:$0xff]
    %v728 = vld [vmem:[#allocation4 + $0x6f0] sm:$0xff]
    %v729 = vld [vmem:[#allocation4 + $0x6f8] sm:$0xff]
    %v730 = vld [vmem:[#allocation4 + $0x700] sm:$0xff]
    %v731 = vld [vmem:[#allocation4 + $0x708] sm:$0xff]
    %v732 = vld [vmem:[#allocation4 + $0x710] sm:$0xff]
    %v733 = vld [vmem:[#allocation4 + $0x718] sm:$0xff]
    %v734 = vld [vmem:[#allocation4 + $0x720] sm:$0xff]
    %v735 = vld [vmem:[#allocation4 + $0x728] sm:$0xff]
    %v736 = vld [vmem:[#allocation4 + $0x730] sm:$0xff]
    %v737 = vld [vmem:[#allocation4 + $0x738] sm:$0xff]
    %v738 = vld [vmem:[#allocation4 + $0x740] sm:$0xff]
    %v739 = vld [vmem:[#allocation4 + $0x748] sm:$0xff]
    %v740 = vld [vmem:[#allocation4 + $0x750] sm:$0xff]
    %v741 = vld [vmem:[#allocation4 + $0x758] sm:$0xff]
    %v742 = vld [vmem:[#allocation4 + $0x760] sm:$0xff]
    %v743 = vld [vmem:[#allocation4 + $0x768] sm:$0xff]
    %v744 = vld [vmem:[#allocation4 + $0x770] sm:$0xff]
    %v745 = vld [vmem:[#allocation4 + $0x778] sm:$0xff]
    %v746 = vld [vmem:[#allocation4 + $0x780] sm:$0xff]
    %v747 = vld [vmem:[#allocation4 + $0x788] sm:$0xff]
    %v748 = vld [vmem:[#allocation4 + $0x790] sm:$0xff]
    %v749 = vld [vmem:[#allocation4 + $0x798] sm:$0xff]
    %v750 = vld [vmem:[#allocation4 + $0x7a0] sm:$0xff]
    %v751 = vld [vmem:[#allocation4 + $0x7a8] sm:$0xff]
    %v752 = vld [vmem:[#allocation4 + $0x7b0] sm:$0xff]
    %v753 = vld [vmem:[#allocation4 + $0x7b8] sm:$0xff]
    %v754 = vld [vmem:[#allocation4 + $0x7c0] sm:$0xff]
    %v755 = vld [vmem:[#allocation4 + $0x7c8] sm:$0xff]
    %v756 = vld [vmem:[#allocation4 + $0x7d0] sm:$0xff]
    %v757 = vld [vmem:[#allocation4 + $0x7d8] sm:$0xff]
    %v758 = vld [vmem:[#allocation4 + $0x7e0] sm:$0xff]
    %v759 = vld [vmem:[#allocation4 + $0x7e8] sm:$0xff]
    %v760 = vld [vmem:[#allocation4 + $0x7f0] sm:$0xff]
    %v761 = vld [vmem:[#allocation4 + $0x7f8] sm:$0xff]
    %v762 = vld [vmem:[%s5] sm:$0xff]
    %v764 = vperm.slane %v762, 0
    %v765 = vperm.slane %v762, 1
    %v766 = vperm.slane %v762, 2
    %v767 = vperm.slane %v762, 3
    %v768 = vperm.slane %v762, 4
    %v769 = vperm.slane %v762, 5
    %v770 = vperm.slane %v762, 6
    %v771 = vperm.slane %v762, 7
    %v1036 = vunpack.c.l.b16 %v506
    %v1037 = vunpack.c.h.b16 %v506
    %v1038 = vunpack.c.l.b16 %v507
    %v1039 = vunpack.c.h.b16 %v507
    %v1040 = vunpack.c.l.b16 %v508
    %v1041 = vunpack.c.h.b16 %v508
    %v1042 = vunpack.c.l.b16 %v509
    %v1043 = vunpack.c.h.b16 %v509
    %v1044 = vunpack.c.l.b16 %v510
    %v1045 = vunpack.c.h.b16 %v510
    %v1046 = vunpack.c.l.b16 %v511
    %v1047 = vunpack.c.h.b16 %v511
    %v1048 = vunpack.c.l.b16 %v512
    %v1049 = vunpack.c.h.b16 %v512
    %v1050 = vunpack.c.l.b16 %v513
    %v1051 = vunpack.c.h.b16 %v513
    %v1052 = vunpack.c.l.b16 %v514
    %v1053 = vunpack.c.h.b16 %v514
    %v1054 = vunpack.c.l.b16 %v515
    %v1055 = vunpack.c.h.b16 %v515
    %v1056 = vunpack.c.l.b16 %v516
    %v1057 = vunpack.c.h.b16 %v516
    %v1058 = vunpack.c.l.b16 %v517
    %v1059 = vunpack.c.h.b16 %v517
    %v1060 = vunpack.c.l.b16 %v518
    %v1061 = vunpack.c.h.b16 %v518
    %v1062 = vunpack.c.l.b16 %v519
    %v1063 = vunpack.c.h.b16 %v519
    %v1064 = vunpack.c.l.b16 %v520
    %v1065 = vunpack.c.h.b16 %v520
    %v1066 = vunpack.c.l.b16 %v521
    %v1067 = vunpack.c.h.b16 %v521
    %v1068 = vunpack.c.l.b16 %v522
    %v1069 = vunpack.c.h.b16 %v522
    %v1070 = vunpack.c.l.b16 %v523
    %v1071 = vunpack.c.h.b16 %v523
    %v1072 = vunpack.c.l.b16 %v524
    %v1073 = vunpack.c.h.b16 %v524
    %v1074 = vunpack.c.l.b16 %v525
    %v1075 = vunpack.c.h.b16 %v525
    %v1076 = vunpack.c.l.b16 %v526
    %v1077 = vunpack.c.h.b16 %v526
    %v1078 = vunpack.c.l.b16 %v527
    %v1079 = vunpack.c.h.b16 %v527
    %v1080 = vunpack.c.l.b16 %v528
    %v1081 = vunpack.c.h.b16 %v528
    %v1082 = vunpack.c.l.b16 %v529
    %v1083 = vunpack.c.h.b16 %v529
    %v1084 = vunpack.c.l.b16 %v530
    %v1085 = vunpack.c.h.b16 %v530
    %v1086 = vunpack.c.l.b16 %v531
    %v1087 = vunpack.c.h.b16 %v531
    %v1088 = vunpack.c.l.b16 %v532
    %v1089 = vunpack.c.h.b16 %v532
    %v1090 = vunpack.c.l.b16 %v533
    %v1091 = vunpack.c.h.b16 %v533
    %v1092 = vunpack.c.l.b16 %v534
    %v1093 = vunpack.c.h.b16 %v534
    %v1094 = vunpack.c.l.b16 %v535
    %v1095 = vunpack.c.h.b16 %v535
    %v1096 = vunpack.c.l.b16 %v536
    %v1097 = vunpack.c.h.b16 %v536
    %v1098 = vunpack.c.l.b16 %v537
    %v1099 = vunpack.c.h.b16 %v537
    %v1100 = vunpack.c.l.b16 %v538
    %v1101 = vunpack.c.h.b16 %v538
    %v1102 = vunpack.c.l.b16 %v539
    %v1103 = vunpack.c.h.b16 %v539
    %v1104 = vunpack.c.l.b16 %v540
    %v1105 = vunpack.c.h.b16 %v540
    %v1106 = vunpack.c.l.b16 %v541
    %v1107 = vunpack.c.h.b16 %v541
    %v1108 = vunpack.c.l.b16 %v542
    %v1109 = vunpack.c.h.b16 %v542
    %v1110 = vunpack.c.l.b16 %v543
    %v1111 = vunpack.c.h.b16 %v543
    %v1112 = vunpack.c.l.b16 %v544
    %v1113 = vunpack.c.h.b16 %v544
    %v1114 = vunpack.c.l.b16 %v545
    %v1115 = vunpack.c.h.b16 %v545
    %v1116 = vunpack.c.l.b16 %v546
    %v1117 = vunpack.c.h.b16 %v546
    %v1118 = vunpack.c.l.b16 %v547
    %v1119 = vunpack.c.h.b16 %v547
    %v1120 = vunpack.c.l.b16 %v548
    %v1121 = vunpack.c.h.b16 %v548
    %v1122 = vunpack.c.l.b16 %v549
    %v1123 = vunpack.c.h.b16 %v549
    %v1124 = vunpack.c.l.b16 %v550
    %v1125 = vunpack.c.h.b16 %v550
    %v1126 = vunpack.c.l.b16 %v551
    %v1127 = vunpack.c.h.b16 %v551
    %v1128 = vunpack.c.l.b16 %v552
    %v1129 = vunpack.c.h.b16 %v552
    %v1130 = vunpack.c.l.b16 %v553
    %v1131 = vunpack.c.h.b16 %v553
    %v1132 = vunpack.c.l.b16 %v554
    %v1133 = vunpack.c.h.b16 %v554
    %v1134 = vunpack.c.l.b16 %v555
    %v1135 = vunpack.c.h.b16 %v555
    %v1136 = vunpack.c.l.b16 %v556
    %v1137 = vunpack.c.h.b16 %v556
    %v1138 = vunpack.c.l.b16 %v557
    %v1139 = vunpack.c.h.b16 %v557
    %v1140 = vunpack.c.l.b16 %v558
    %v1141 = vunpack.c.h.b16 %v558
    %v1142 = vunpack.c.l.b16 %v559
    %v1143 = vunpack.c.h.b16 %v559
    %v1144 = vunpack.c.l.b16 %v560
    %v1145 = vunpack.c.h.b16 %v560
    %v1146 = vunpack.c.l.b16 %v561
    %v1147 = vunpack.c.h.b16 %v561
    %v1148 = vunpack.c.l.b16 %v562
    %v1149 = vunpack.c.h.b16 %v562
    %v1150 = vunpack.c.l.b16 %v563
    %v1151 = vunpack.c.h.b16 %v563
    %v1152 = vunpack.c.l.b16 %v564
    %v1153 = vunpack.c.h.b16 %v564
    %v1154 = vunpack.c.l.b16 %v565
    %v1155 = vunpack.c.h.b16 %v565
    %v1156 = vunpack.c.l.b16 %v566
    %v1157 = vunpack.c.h.b16 %v566
    %v1158 = vunpack.c.l.b16 %v567
    %v1159 = vunpack.c.h.b16 %v567
    %v1160 = vunpack.c.l.b16 %v568
    %v1161 = vunpack.c.h.b16 %v568
    %v1162 = vunpack.c.l.b16 %v569
    %v1163 = vunpack.c.h.b16 %v569
    %v1164 = vunpack.c.l.b16 %v570
    %v1165 = vunpack.c.h.b16 %v570
    %v1166 = vunpack.c.l.b16 %v571
    %v1167 = vunpack.c.h.b16 %v571
    %v1168 = vunpack.c.l.b16 %v572
    %v1169 = vunpack.c.h.b16 %v572
    %v1170 = vunpack.c.l.b16 %v573
    %v1171 = vunpack.c.h.b16 %v573
    %v1172 = vunpack.c.l.b16 %v574
    %v1173 = vunpack.c.h.b16 %v574
    %v1174 = vunpack.c.l.b16 %v575
    %v1175 = vunpack.c.h.b16 %v575
    %v1176 = vunpack.c.l.b16 %v576
    %v1177 = vunpack.c.h.b16 %v576
    %v1178 = vunpack.c.l.b16 %v577
    %v1179 = vunpack.c.h.b16 %v577
    %v1180 = vunpack.c.l.b16 %v578
    %v1181 = vunpack.c.h.b16 %v578
    %v1182 = vunpack.c.l.b16 %v579
    %v1183 = vunpack.c.h.b16 %v579
    %v1184 = vunpack.c.l.b16 %v580
    %v1185 = vunpack.c.h.b16 %v580
    %v1186 = vunpack.c.l.b16 %v581
    %v1187 = vunpack.c.h.b16 %v581
    %v1188 = vunpack.c.l.b16 %v582
    %v1189 = vunpack.c.h.b16 %v582
    %v1190 = vunpack.c.l.b16 %v583
    %v1191 = vunpack.c.h.b16 %v583
    %v1192 = vunpack.c.l.b16 %v584
    %v1193 = vunpack.c.h.b16 %v584
    %v1194 = vunpack.c.l.b16 %v585
    %v1195 = vunpack.c.h.b16 %v585
    %v1196 = vunpack.c.l.b16 %v586
    %v1197 = vunpack.c.h.b16 %v586
    %v1198 = vunpack.c.l.b16 %v587
    %v1199 = vunpack.c.h.b16 %v587
    %v1200 = vunpack.c.l.b16 %v588
    %v1201 = vunpack.c.h.b16 %v588
    %v1202 = vunpack.c.l.b16 %v589
    %v1203 = vunpack.c.h.b16 %v589
    %v1204 = vunpack.c.l.b16 %v590
    %v1205 = vunpack.c.h.b16 %v590
    %v1206 = vunpack.c.l.b16 %v591
    %v1207 = vunpack.c.h.b16 %v591
    %v1208 = vunpack.c.l.b16 %v592
    %v1209 = vunpack.c.h.b16 %v592
    %v1210 = vunpack.c.l.b16 %v593
    %v1211 = vunpack.c.h.b16 %v593
    %v1212 = vunpack.c.l.b16 %v594
    %v1213 = vunpack.c.h.b16 %v594
    %v1214 = vunpack.c.l.b16 %v595
    %v1215 = vunpack.c.h.b16 %v595
    %v1216 = vunpack.c.l.b16 %v596
    %v1217 = vunpack.c.h.b16 %v596
    %v1218 = vunpack.c.l.b16 %v597
    %v1219 = vunpack.c.h.b16 %v597
    %v1220 = vunpack.c.l.b16 %v598
    %v1221 = vunpack.c.h.b16 %v598
    %v1222 = vunpack.c.l.b16 %v599
    %v1223 = vunpack.c.h.b16 %v599
    %v1224 = vunpack.c.l.b16 %v600
    %v1225 = vunpack.c.h.b16 %v600
    %v1226 = vunpack.c.l.b16 %v601
    %v1227 = vunpack.c.h.b16 %v601
    %v1228 = vunpack.c.l.b16 %v602
    %v1229 = vunpack.c.h.b16 %v602
    %v1230 = vunpack.c.l.b16 %v603
    %v1231 = vunpack.c.h.b16 %v603
    %v1232 = vunpack.c.l.b16 %v604
    %v1233 = vunpack.c.h.b16 %v604
    %v1234 = vunpack.c.l.b16 %v605
    %v1235 = vunpack.c.h.b16 %v605
    %v1236 = vunpack.c.l.b16 %v606
    %v1237 = vunpack.c.h.b16 %v606
    %v1238 = vunpack.c.l.b16 %v607
    %v1239 = vunpack.c.h.b16 %v607
    %v1240 = vunpack.c.l.b16 %v608
    %v1241 = vunpack.c.h.b16 %v608
    %v1242 = vunpack.c.l.b16 %v609
    %v1243 = vunpack.c.h.b16 %v609
    %v1244 = vunpack.c.l.b16 %v610
    %v1245 = vunpack.c.h.b16 %v610
    %v1246 = vunpack.c.l.b16 %v611
    %v1247 = vunpack.c.h.b16 %v611
    %v1248 = vunpack.c.l.b16 %v612
    %v1249 = vunpack.c.h.b16 %v612
    %v1250 = vunpack.c.l.b16 %v613
    %v1251 = vunpack.c.h.b16 %v613
    %v1252 = vunpack.c.l.b16 %v614
    %v1253 = vunpack.c.h.b16 %v614
    %v1254 = vunpack.c.l.b16 %v615
    %v1255 = vunpack.c.h.b16 %v615
    %v1256 = vunpack.c.l.b16 %v616
    %v1257 = vunpack.c.h.b16 %v616
    %v1258 = vunpack.c.l.b16 %v617
    %v1259 = vunpack.c.h.b16 %v617
    %v1260 = vunpack.c.l.b16 %v618
    %v1261 = vunpack.c.h.b16 %v618
    %v1262 = vunpack.c.l.b16 %v619
    %v1263 = vunpack.c.h.b16 %v619
    %v1264 = vunpack.c.l.b16 %v620
    %v1265 = vunpack.c.h.b16 %v620
    %v1266 = vunpack.c.l.b16 %v621
    %v1267 = vunpack.c.h.b16 %v621
    %v1268 = vunpack.c.l.b16 %v622
    %v1269 = vunpack.c.h.b16 %v622
    %v1270 = vunpack.c.l.b16 %v623
    %v1271 = vunpack.c.h.b16 %v623
    %v1272 = vunpack.c.l.b16 %v624
    %v1273 = vunpack.c.h.b16 %v624
    %v1274 = vunpack.c.l.b16 %v625
    %v1275 = vunpack.c.h.b16 %v625
    %v1276 = vunpack.c.l.b16 %v626
    %v1277 = vunpack.c.h.b16 %v626
    %v1278 = vunpack.c.l.b16 %v627
    %v1279 = vunpack.c.h.b16 %v627
    %v1280 = vunpack.c.l.b16 %v628
    %v1281 = vunpack.c.h.b16 %v628
    %v1282 = vunpack.c.l.b16 %v629
    %v1283 = vunpack.c.h.b16 %v629
    %v1284 = vunpack.c.l.b16 %v630
    %v1285 = vunpack.c.h.b16 %v630
    %v1286 = vunpack.c.l.b16 %v631
    %v1287 = vunpack.c.h.b16 %v631
    %v1288 = vunpack.c.l.b16 %v632
    %v1289 = vunpack.c.h.b16 %v632
    %v1290 = vunpack.c.l.b16 %v633
    %v1291 = vunpack.c.h.b16 %v633
    %v1292 = vunpack.c.l.b16 %v634
    %v1293 = vunpack.c.h.b16 %v634
    %v1294 = vunpack.c.l.b16 %v635
    %v1295 = vunpack.c.h.b16 %v635
    %v1296 = vunpack.c.l.b16 %v636
    %v1297 = vunpack.c.h.b16 %v636
    %v1298 = vunpack.c.l.b16 %v637
    %v1299 = vunpack.c.h.b16 %v637
    %v1300 = vunpack.c.l.b16 %v638
    %v1301 = vunpack.c.h.b16 %v638
    %v1302 = vunpack.c.l.b16 %v639
    %v1303 = vunpack.c.h.b16 %v639
    %v1304 = vunpack.c.l.b16 %v640
    %v1305 = vunpack.c.h.b16 %v640
    %v1306 = vunpack.c.l.b16 %v641
    %v1307 = vunpack.c.h.b16 %v641
    %v1308 = vunpack.c.l.b16 %v642
    %v1309 = vunpack.c.h.b16 %v642
    %v1310 = vunpack.c.l.b16 %v643
    %v1311 = vunpack.c.h.b16 %v643
    %v1312 = vunpack.c.l.b16 %v644
    %v1313 = vunpack.c.h.b16 %v644
    %v1314 = vunpack.c.l.b16 %v645
    %v1315 = vunpack.c.h.b16 %v645
    %v1316 = vunpack.c.l.b16 %v646
    %v1317 = vunpack.c.h.b16 %v646
    %v1318 = vunpack.c.l.b16 %v647
    %v1319 = vunpack.c.h.b16 %v647
    %v1320 = vunpack.c.l.b16 %v648
    %v1321 = vunpack.c.h.b16 %v648
    %v1322 = vunpack.c.l.b16 %v649
    %v1323 = vunpack.c.h.b16 %v649
    %v1324 = vunpack.c.l.b16 %v650
    %v1325 = vunpack.c.h.b16 %v650
    %v1326 = vunpack.c.l.b16 %v651
    %v1327 = vunpack.c.h.b16 %v651
    %v1328 = vunpack.c.l.b16 %v652
    %v1329 = vunpack.c.h.b16 %v652
    %v1330 = vunpack.c.l.b16 %v653
    %v1331 = vunpack.c.h.b16 %v653
    %v1332 = vunpack.c.l.b16 %v654
    %v1333 = vunpack.c.h.b16 %v654
    %v1334 = vunpack.c.l.b16 %v655
    %v1335 = vunpack.c.h.b16 %v655
    %v1336 = vunpack.c.l.b16 %v656
    %v1337 = vunpack.c.h.b16 %v656
    %v1338 = vunpack.c.l.b16 %v657
    %v1339 = vunpack.c.h.b16 %v657
    %v1340 = vunpack.c.l.b16 %v658
    %v1341 = vunpack.c.h.b16 %v658
    %v1342 = vunpack.c.l.b16 %v659
    %v1343 = vunpack.c.h.b16 %v659
    %v1344 = vunpack.c.l.b16 %v660
    %v1345 = vunpack.c.h.b16 %v660
    %v1346 = vunpack.c.l.b16 %v661
    %v1347 = vunpack.c.h.b16 %v661
    %v1348 = vunpack.c.l.b16 %v662
    %v1349 = vunpack.c.h.b16 %v662
    %v1350 = vunpack.c.l.b16 %v663
    %v1351 = vunpack.c.h.b16 %v663
    %v1352 = vunpack.c.l.b16 %v664
    %v1353 = vunpack.c.h.b16 %v664
    %v1354 = vunpack.c.l.b16 %v665
    %v1355 = vunpack.c.h.b16 %v665
    %v1356 = vunpack.c.l.b16 %v666
    %v1357 = vunpack.c.h.b16 %v666
    %v1358 = vunpack.c.l.b16 %v667
    %v1359 = vunpack.c.h.b16 %v667
    %v1360 = vunpack.c.l.b16 %v668
    %v1361 = vunpack.c.h.b16 %v668
    %v1362 = vunpack.c.l.b16 %v669
    %v1363 = vunpack.c.h.b16 %v669
    %v1364 = vunpack.c.l.b16 %v670
    %v1365 = vunpack.c.h.b16 %v670
    %v1366 = vunpack.c.l.b16 %v671
    %v1367 = vunpack.c.h.b16 %v671
    %v1368 = vunpack.c.l.b16 %v672
    %v1369 = vunpack.c.h.b16 %v672
    %v1370 = vunpack.c.l.b16 %v673
    %v1371 = vunpack.c.h.b16 %v673
    %v1372 = vunpack.c.l.b16 %v674
    %v1373 = vunpack.c.h.b16 %v674
    %v1374 = vunpack.c.l.b16 %v675
    %v1375 = vunpack.c.h.b16 %v675
    %v1376 = vunpack.c.l.b16 %v676
    %v1377 = vunpack.c.h.b16 %v676
    %v1378 = vunpack.c.l.b16 %v677
    %v1379 = vunpack.c.h.b16 %v677
    %v1380 = vunpack.c.l.b16 %v678
    %v1381 = vunpack.c.h.b16 %v678
    %v1382 = vunpack.c.l.b16 %v679
    %v1383 = vunpack.c.h.b16 %v679
    %v1384 = vunpack.c.l.b16 %v680
    %v1385 = vunpack.c.h.b16 %v680
    %v1386 = vunpack.c.l.b16 %v681
    %v1387 = vunpack.c.h.b16 %v681
    %v1388 = vunpack.c.l.b16 %v682
    %v1389 = vunpack.c.h.b16 %v682
    %v1390 = vunpack.c.l.b16 %v683
    %v1391 = vunpack.c.h.b16 %v683
    %v1392 = vunpack.c.l.b16 %v684
    %v1393 = vunpack.c.h.b16 %v684
    %v1394 = vunpack.c.l.b16 %v685
    %v1395 = vunpack.c.h.b16 %v685
    %v1396 = vunpack.c.l.b16 %v686
    %v1397 = vunpack.c.h.b16 %v686
    %v1398 = vunpack.c.l.b16 %v687
    %v1399 = vunpack.c.h.b16 %v687
    %v1400 = vunpack.c.l.b16 %v688
    %v1401 = vunpack.c.h.b16 %v688
    %v1402 = vunpack.c.l.b16 %v689
    %v1403 = vunpack.c.h.b16 %v689
    %v1404 = vunpack.c.l.b16 %v690
    %v1405 = vunpack.c.h.b16 %v690
    %v1406 = vunpack.c.l.b16 %v691
    %v1407 = vunpack.c.h.b16 %v691
    %v1408 = vunpack.c.l.b16 %v692
    %v1409 = vunpack.c.h.b16 %v692
    %v1410 = vunpack.c.l.b16 %v693
    %v1411 = vunpack.c.h.b16 %v693
    %v1412 = vunpack.c.l.b16 %v694
    %v1413 = vunpack.c.h.b16 %v694
    %v1414 = vunpack.c.l.b16 %v695
    %v1415 = vunpack.c.h.b16 %v695
    %v1416 = vunpack.c.l.b16 %v696
    %v1417 = vunpack.c.h.b16 %v696
    %v1418 = vunpack.c.l.b16 %v697
    %v1419 = vunpack.c.h.b16 %v697
    %v1420 = vunpack.c.l.b16 %v698
    %v1421 = vunpack.c.h.b16 %v698
    %v1422 = vunpack.c.l.b16 %v699
    %v1423 = vunpack.c.h.b16 %v699
    %v1424 = vunpack.c.l.b16 %v700
    %v1425 = vunpack.c.h.b16 %v700
    %v1426 = vunpack.c.l.b16 %v701
    %v1427 = vunpack.c.h.b16 %v701
    %v1428 = vunpack.c.l.b16 %v702
    %v1429 = vunpack.c.h.b16 %v702
    %v1430 = vunpack.c.l.b16 %v703
    %v1431 = vunpack.c.h.b16 %v703
    %v1432 = vunpack.c.l.b16 %v704
    %v1433 = vunpack.c.h.b16 %v704
    %v1434 = vunpack.c.l.b16 %v705
    %v1435 = vunpack.c.h.b16 %v705
    %v1436 = vunpack.c.l.b16 %v706
    %v1437 = vunpack.c.h.b16 %v706
    %v1438 = vunpack.c.l.b16 %v707
    %v1439 = vunpack.c.h.b16 %v707
    %v1440 = vunpack.c.l.b16 %v708
    %v1441 = vunpack.c.h.b16 %v708
    %v1442 = vunpack.c.l.b16 %v709
    %v1443 = vunpack.c.h.b16 %v709
    %v1444 = vunpack.c.l.b16 %v710
    %v1445 = vunpack.c.h.b16 %v710
    %v1446 = vunpack.c.l.b16 %v711
    %v1447 = vunpack.c.h.b16 %v711
    %v1448 = vunpack.c.l.b16 %v712
    %v1449 = vunpack.c.h.b16 %v712
    %v1450 = vunpack.c.l.b16 %v713
    %v1451 = vunpack.c.h.b16 %v713
    %v1452 = vunpack.c.l.b16 %v714
    %v1453 = vunpack.c.h.b16 %v714
    %v1454 = vunpack.c.l.b16 %v715
    %v1455 = vunpack.c.h.b16 %v715
    %v1456 = vunpack.c.l.b16 %v716
    %v1457 = vunpack.c.h.b16 %v716
    %v1458 = vunpack.c.l.b16 %v717
    %v1459 = vunpack.c.h.b16 %v717
    %v1460 = vunpack.c.l.b16 %v718
    %v1461 = vunpack.c.h.b16 %v718
    %v1462 = vunpack.c.l.b16 %v719
    %v1463 = vunpack.c.h.b16 %v719
    %v1464 = vunpack.c.l.b16 %v720
    %v1465 = vunpack.c.h.b16 %v720
    %v1466 = vunpack.c.l.b16 %v721
    %v1467 = vunpack.c.h.b16 %v721
    %v1468 = vunpack.c.l.b16 %v722
    %v1469 = vunpack.c.h.b16 %v722
    %v1470 = vunpack.c.l.b16 %v723
    %v1471 = vunpack.c.h.b16 %v723
    %v1472 = vunpack.c.l.b16 %v724
    %v1473 = vunpack.c.h.b16 %v724
    %v1474 = vunpack.c.l.b16 %v725
    %v1475 = vunpack.c.h.b16 %v725
    %v1476 = vunpack.c.l.b16 %v726
    %v1477 = vunpack.c.h.b16 %v726
    %v1478 = vunpack.c.l.b16 %v727
    %v1479 = vunpack.c.h.b16 %v727
    %v1480 = vunpack.c.l.b16 %v728
    %v1481 = vunpack.c.h.b16 %v728
    %v1482 = vunpack.c.l.b16 %v729
    %v1483 = vunpack.c.h.b16 %v729
    %v1484 = vunpack.c.l.b16 %v730
    %v1485 = vunpack.c.h.b16 %v730
    %v1486 = vunpack.c.l.b16 %v731
    %v1487 = vunpack.c.h.b16 %v731
    %v1488 = vunpack.c.l.b16 %v732
    %v1489 = vunpack.c.h.b16 %v732
    %v1490 = vunpack.c.l.b16 %v733
    %v1491 = vunpack.c.h.b16 %v733
    %v1492 = vunpack.c.l.b16 %v734
    %v1493 = vunpack.c.h.b16 %v734
    %v1494 = vunpack.c.l.b16 %v735
    %v1495 = vunpack.c.h.b16 %v735
    %v1496 = vunpack.c.l.b16 %v736
    %v1497 = vunpack.c.h.b16 %v736
    %v1498 = vunpack.c.l.b16 %v737
    %v1499 = vunpack.c.h.b16 %v737
    %v1500 = vunpack.c.l.b16 %v738
    %v1501 = vunpack.c.h.b16 %v738
    %v1502 = vunpack.c.l.b16 %v739
    %v1503 = vunpack.c.h.b16 %v739
    %v1504 = vunpack.c.l.b16 %v740
    %v1505 = vunpack.c.h.b16 %v740
    %v1506 = vunpack.c.l.b16 %v741
    %v1507 = vunpack.c.h.b16 %v741
    %v1508 = vunpack.c.l.b16 %v742
    %v1509 = vunpack.c.h.b16 %v742
    %v1510 = vunpack.c.l.b16 %v743
    %v1511 = vunpack.c.h.b16 %v743
    %v1512 = vunpack.c.l.b16 %v744
    %v1513 = vunpack.c.h.b16 %v744
    %v1514 = vunpack.c.l.b16 %v745
    %v1515 = vunpack.c.h.b16 %v745
    %v1516 = vunpack.c.l.b16 %v746
    %v1517 = vunpack.c.h.b16 %v746
    %v1518 = vunpack.c.l.b16 %v747
    %v1519 = vunpack.c.h.b16 %v747
    %v1520 = vunpack.c.l.b16 %v748
    %v1521 = vunpack.c.h.b16 %v748
    %v1522 = vunpack.c.l.b16 %v749
    %v1523 = vunpack.c.h.b16 %v749
    %v1524 = vunpack.c.l.b16 %v750
    %v1525 = vunpack.c.h.b16 %v750
    %v1526 = vunpack.c.l.b16 %v751
    %v1527 = vunpack.c.h.b16 %v751
    %v1528 = vunpack.c.l.b16 %v752
    %v1529 = vunpack.c.h.b16 %v752
    %v1530 = vunpack.c.l.b16 %v753
    %v1531 = vunpack.c.h.b16 %v753
    %v1532 = vunpack.c.l.b16 %v754
    %v1533 = vunpack.c.h.b16 %v754
    %v1534 = vunpack.c.l.b16 %v755
    %v1535 = vunpack.c.h.b16 %v755
    %v1536 = vunpack.c.l.b16 %v756
    %v1537 = vunpack.c.h.b16 %v756
    %v1538 = vunpack.c.l.b16 %v757
    %v1539 = vunpack.c.h.b16 %v757
    %v1540 = vunpack.c.l.b16 %v758
    %v1541 = vunpack.c.h.b16 %v758
    %v1542 = vunpack.c.l.b16 %v759
    %v1543 = vunpack.c.h.b16 %v759
    %v1544 = vunpack.c.l.b16 %v760
    %v1545 = vunpack.c.h.b16 %v760
    %v1546 = vunpack.c.l.b16 %v761
    %v1547 = vunpack.c.h.b16 %v761
    %v1548 = vpack.c.b16 %v1044, %v1036
    %v1549 = vpack.c.b16 %v1045, %v1037
    %v1550 = vpack.c.b16 %v1046, %v1038
    %v1551 = vpack.c.b16 %v1047, %v1039
    %v1552 = vpack.c.b16 %v1048, %v1040
    %v1553 = vpack.c.b16 %v1049, %v1041
    %v1554 = vpack.c.b16 %v1050, %v1042
    %v1555 = vpack.c.b16 %v1051, %v1043
    %v1556 = vpack.c.b16 %v1060, %v1052
    %v1557 = vpack.c.b16 %v1061, %v1053
    %v1558 = vpack.c.b16 %v1062, %v1054
    %v1559 = vpack.c.b16 %v1063, %v1055
    %v1560 = vpack.c.b16 %v1064, %v1056
    %v1561 = vpack.c.b16 %v1065, %v1057
    %v1562 = vpack.c.b16 %v1066, %v1058
    %v1563 = vpack.c.b16 %v1067, %v1059
    %v1564 = vpack.c.b16 %v1076, %v1068
    %v1565 = vpack.c.b16 %v1077, %v1069
    %v1566 = vpack.c.b16 %v1078, %v1070
    %v1567 = vpack.c.b16 %v1079, %v1071
    %v1568 = vpack.c.b16 %v1080, %v1072
    %v1569 = vpack.c.b16 %v1081, %v1073
    %v1570 = vpack.c.b16 %v1082, %v1074
    %v1571 = vpack.c.b16 %v1083, %v1075
    %v1572 = vpack.c.b16 %v1092, %v1084
    %v1573 = vpack.c.b16 %v1093, %v1085
    %v1574 = vpack.c.b16 %v1094, %v1086
    %v1575 = vpack.c.b16 %v1095, %v1087
    %v1576 = vpack.c.b16 %v1096, %v1088
    %v1577 = vpack.c.b16 %v1097, %v1089
    %v1578 = vpack.c.b16 %v1098, %v1090
    %v1579 = vpack.c.b16 %v1099, %v1091
    %v1580 = vpack.c.b16 %v1108, %v1100
    %v1581 = vpack.c.b16 %v1109, %v1101
    %v1582 = vpack.c.b16 %v1110, %v1102
    %v1583 = vpack.c.b16 %v1111, %v1103
    %v1584 = vpack.c.b16 %v1112, %v1104
    %v1585 = vpack.c.b16 %v1113, %v1105
    %v1586 = vpack.c.b16 %v1114, %v1106
    %v1587 = vpack.c.b16 %v1115, %v1107
    %v1588 = vpack.c.b16 %v1124, %v1116
    %v1589 = vpack.c.b16 %v1125, %v1117
    %v1590 = vpack.c.b16 %v1126, %v1118
    %v1591 = vpack.c.b16 %v1127, %v1119
    %v1592 = vpack.c.b16 %v1128, %v1120
    %v1593 = vpack.c.b16 %v1129, %v1121
    %v1594 = vpack.c.b16 %v1130, %v1122
    %v1595 = vpack.c.b16 %v1131, %v1123
    %v1596 = vpack.c.b16 %v1140, %v1132
    %v1597 = vpack.c.b16 %v1141, %v1133
    %v1598 = vpack.c.b16 %v1142, %v1134
    %v1599 = vpack.c.b16 %v1143, %v1135
    %v1600 = vpack.c.b16 %v1144, %v1136
    %v1601 = vpack.c.b16 %v1145, %v1137
    %v1602 = vpack.c.b16 %v1146, %v1138
    %v1603 = vpack.c.b16 %v1147, %v1139
    %v1604 = vpack.c.b16 %v1156, %v1148
    %v1605 = vpack.c.b16 %v1157, %v1149
    %v1606 = vpack.c.b16 %v1158, %v1150
    %v1607 = vpack.c.b16 %v1159, %v1151
    %v1608 = vpack.c.b16 %v1160, %v1152
    %v1609 = vpack.c.b16 %v1161, %v1153
    %v1610 = vpack.c.b16 %v1162, %v1154
    %v1611 = vpack.c.b16 %v1163, %v1155
    %v1612 = vpack.c.b16 %v1172, %v1164
    %v1613 = vpack.c.b16 %v1173, %v1165
    %v1614 = vpack.c.b16 %v1174, %v1166
    %v1615 = vpack.c.b16 %v1175, %v1167
    %v1616 = vpack.c.b16 %v1176, %v1168
    %v1617 = vpack.c.b16 %v1177, %v1169
    %v1618 = vpack.c.b16 %v1178, %v1170
    %v1619 = vpack.c.b16 %v1179, %v1171
    %v1620 = vpack.c.b16 %v1188, %v1180
    %v1621 = vpack.c.b16 %v1189, %v1181
    %v1622 = vpack.c.b16 %v1190, %v1182
    %v1623 = vpack.c.b16 %v1191, %v1183
    %v1624 = vpack.c.b16 %v1192, %v1184
    %v1625 = vpack.c.b16 %v1193, %v1185
    %v1626 = vpack.c.b16 %v1194, %v1186
    %v1627 = vpack.c.b16 %v1195, %v1187
    %v1628 = vpack.c.b16 %v1204, %v1196
    %v1629 = vpack.c.b16 %v1205, %v1197
    %v1630 = vpack.c.b16 %v1206, %v1198
    %v1631 = vpack.c.b16 %v1207, %v1199
    %v1632 = vpack.c.b16 %v1208, %v1200
    %v1633 = vpack.c.b16 %v1209, %v1201
    %v1634 = vpack.c.b16 %v1210, %v1202
    %v1635 = vpack.c.b16 %v1211, %v1203
    %v1636 = vpack.c.b16 %v1220, %v1212
    %v1637 = vpack.c.b16 %v1221, %v1213
    %v1638 = vpack.c.b16 %v1222, %v1214
    %v1639 = vpack.c.b16 %v1223, %v1215
    %v1640 = vpack.c.b16 %v1224, %v1216
    %v1641 = vpack.c.b16 %v1225, %v1217
    %v1642 = vpack.c.b16 %v1226, %v1218
    %v1643 = vpack.c.b16 %v1227, %v1219
    %v1644 = vpack.c.b16 %v1236, %v1228
    %v1645 = vpack.c.b16 %v1237, %v1229
    %v1646 = vpack.c.b16 %v1238, %v1230
    %v1647 = vpack.c.b16 %v1239, %v1231
    %v1648 = vpack.c.b16 %v1240, %v1232
    %v1649 = vpack.c.b16 %v1241, %v1233
    %v1650 = vpack.c.b16 %v1242, %v1234
    %v1651 = vpack.c.b16 %v1243, %v1235
    %v1652 = vpack.c.b16 %v1252, %v1244
    %v1653 = vpack.c.b16 %v1253, %v1245
    %v1654 = vpack.c.b16 %v1254, %v1246
    %v1655 = vpack.c.b16 %v1255, %v1247
    %v1656 = vpack.c.b16 %v1256, %v1248
    %v1657 = vpack.c.b16 %v1257, %v1249
    %v1658 = vpack.c.b16 %v1258, %v1250
    %v1659 = vpack.c.b16 %v1259, %v1251
    %v1660 = vpack.c.b16 %v1268, %v1260
    %v1661 = vpack.c.b16 %v1269, %v1261
    %v1662 = vpack.c.b16 %v1270, %v1262
    %v1663 = vpack.c.b16 %v1271, %v1263
    %v1664 = vpack.c.b16 %v1272, %v1264
    %v1665 = vpack.c.b16 %v1273, %v1265
    %v1666 = vpack.c.b16 %v1274, %v1266
    %v1667 = vpack.c.b16 %v1275, %v1267
    %v1668 = vpack.c.b16 %v1284, %v1276
    %v1669 = vpack.c.b16 %v1285, %v1277
    %v1670 = vpack.c.b16 %v1286, %v1278
    %v1671 = vpack.c.b16 %v1287, %v1279
    %v1672 = vpack.c.b16 %v1288, %v1280
    %v1673 = vpack.c.b16 %v1289, %v1281
    %v1674 = vpack.c.b16 %v1290, %v1282
    %v1675 = vpack.c.b16 %v1291, %v1283
    %v1676 = vpack.c.b16 %v1300, %v1292
    %v1677 = vpack.c.b16 %v1301, %v1293
    %v1678 = vpack.c.b16 %v1302, %v1294
    %v1679 = vpack.c.b16 %v1303, %v1295
    %v1680 = vpack.c.b16 %v1304, %v1296
    %v1681 = vpack.c.b16 %v1305, %v1297
    %v1682 = vpack.c.b16 %v1306, %v1298
    %v1683 = vpack.c.b16 %v1307, %v1299
    %v1684 = vpack.c.b16 %v1316, %v1308
    %v1685 = vpack.c.b16 %v1317, %v1309
    %v1686 = vpack.c.b16 %v1318, %v1310
    %v1687 = vpack.c.b16 %v1319, %v1311
    %v1688 = vpack.c.b16 %v1320, %v1312
    %v1689 = vpack.c.b16 %v1321, %v1313
    %v1690 = vpack.c.b16 %v1322, %v1314
    %v1691 = vpack.c.b16 %v1323, %v1315
    %v1692 = vpack.c.b16 %v1332, %v1324
    %v1693 = vpack.c.b16 %v1333, %v1325
    %v1694 = vpack.c.b16 %v1334, %v1326
    %v1695 = vpack.c.b16 %v1335, %v1327
    %v1696 = vpack.c.b16 %v1336, %v1328
    %v1697 = vpack.c.b16 %v1337, %v1329
    %v1698 = vpack.c.b16 %v1338, %v1330
    %v1699 = vpack.c.b16 %v1339, %v1331
    %v1700 = vpack.c.b16 %v1348, %v1340
    %v1701 = vpack.c.b16 %v1349, %v1341
    %v1702 = vpack.c.b16 %v1350, %v1342
    %v1703 = vpack.c.b16 %v1351, %v1343
    %v1704 = vpack.c.b16 %v1352, %v1344
    %v1705 = vpack.c.b16 %v1353, %v1345
    %v1706 = vpack.c.b16 %v1354, %v1346
    %v1707 = vpack.c.b16 %v1355, %v1347
    %v1708 = vpack.c.b16 %v1364, %v1356
    %v1709 = vpack.c.b16 %v1365, %v1357
    %v1710 = vpack.c.b16 %v1366, %v1358
    %v1711 = vpack.c.b16 %v1367, %v1359
    %v1712 = vpack.c.b16 %v1368, %v1360
    %v1713 = vpack.c.b16 %v1369, %v1361
    %v1714 = vpack.c.b16 %v1370, %v1362
    %v1715 = vpack.c.b16 %v1371, %v1363
    %v1716 = vpack.c.b16 %v1380, %v1372
    %v1717 = vpack.c.b16 %v1381, %v1373
    %v1718 = vpack.c.b16 %v1382, %v1374
    %v1719 = vpack.c.b16 %v1383, %v1375
    %v1720 = vpack.c.b16 %v1384, %v1376
    %v1721 = vpack.c.b16 %v1385, %v1377
    %v1722 = vpack.c.b16 %v1386, %v1378
    %v1723 = vpack.c.b16 %v1387, %v1379
    %v1724 = vpack.c.b16 %v1396, %v1388
    %v1725 = vpack.c.b16 %v1397, %v1389
    %v1726 = vpack.c.b16 %v1398, %v1390
    %v1727 = vpack.c.b16 %v1399, %v1391
    %v1728 = vpack.c.b16 %v1400, %v1392
    %v1729 = vpack.c.b16 %v1401, %v1393
    %v1730 = vpack.c.b16 %v1402, %v1394
    %v1731 = vpack.c.b16 %v1403, %v1395
    %v1732 = vpack.c.b16 %v1412, %v1404
    %v1733 = vpack.c.b16 %v1413, %v1405
    %v1734 = vpack.c.b16 %v1414, %v1406
    %v1735 = vpack.c.b16 %v1415, %v1407
    %v1736 = vpack.c.b16 %v1416, %v1408
    %v1737 = vpack.c.b16 %v1417, %v1409
    %v1738 = vpack.c.b16 %v1418, %v1410
    %v1739 = vpack.c.b16 %v1419, %v1411
    %v1740 = vpack.c.b16 %v1428, %v1420
    %v1741 = vpack.c.b16 %v1429, %v1421
    %v1742 = vpack.c.b16 %v1430, %v1422
    %v1743 = vpack.c.b16 %v1431, %v1423
    %v1744 = vpack.c.b16 %v1432, %v1424
    %v1745 = vpack.c.b16 %v1433, %v1425
    %v1746 = vpack.c.b16 %v1434, %v1426
    %v1747 = vpack.c.b16 %v1435, %v1427
    %v1748 = vpack.c.b16 %v1444, %v1436
    %v1749 = vpack.c.b16 %v1445, %v1437
    %v1750 = vpack.c.b16 %v1446, %v1438
    %v1751 = vpack.c.b16 %v1447, %v1439
    %v1752 = vpack.c.b16 %v1448, %v1440
    %v1753 = vpack.c.b16 %v1449, %v1441
    %v1754 = vpack.c.b16 %v1450, %v1442
    %v1755 = vpack.c.b16 %v1451, %v1443
    %v1756 = vpack.c.b16 %v1460, %v1452
    %v1757 = vpack.c.b16 %v1461, %v1453
    %v1758 = vpack.c.b16 %v1462, %v1454
    %v1759 = vpack.c.b16 %v1463, %v1455
    %v1760 = vpack.c.b16 %v1464, %v1456
    %v1761 = vpack.c.b16 %v1465, %v1457
    %v1762 = vpack.c.b16 %v1466, %v1458
    %v1763 = vpack.c.b16 %v1467, %v1459
    %v1764 = vpack.c.b16 %v1476, %v1468
    %v1765 = vpack.c.b16 %v1477, %v1469
    %v1766 = vpack.c.b16 %v1478, %v1470
    %v1767 = vpack.c.b16 %v1479, %v1471
    %v1768 = vpack.c.b16 %v1480, %v1472
    %v1769 = vpack.c.b16 %v1481, %v1473
    %v1770 = vpack.c.b16 %v1482, %v1474
    %v1771 = vpack.c.b16 %v1483, %v1475
    %v1772 = vpack.c.b16 %v1492, %v1484
    %v1773 = vpack.c.b16 %v1493, %v1485
    %v1774 = vpack.c.b16 %v1494, %v1486
    %v1775 = vpack.c.b16 %v1495, %v1487
    %v1776 = vpack.c.b16 %v1496, %v1488
    %v1777 = vpack.c.b16 %v1497, %v1489
    %v1778 = vpack.c.b16 %v1498, %v1490
    %v1779 = vpack.c.b16 %v1499, %v1491
    %v1780 = vpack.c.b16 %v1508, %v1500
    %v1781 = vpack.c.b16 %v1509, %v1501
    %v1782 = vpack.c.b16 %v1510, %v1502
    %v1783 = vpack.c.b16 %v1511, %v1503
    %v1784 = vpack.c.b16 %v1512, %v1504
    %v1785 = vpack.c.b16 %v1513, %v1505
    %v1786 = vpack.c.b16 %v1514, %v1506
    %v1787 = vpack.c.b16 %v1515, %v1507
    %v1788 = vpack.c.b16 %v1524, %v1516
    %v1789 = vpack.c.b16 %v1525, %v1517
    %v1790 = vpack.c.b16 %v1526, %v1518
    %v1791 = vpack.c.b16 %v1527, %v1519
    %v1792 = vpack.c.b16 %v1528, %v1520
    %v1793 = vpack.c.b16 %v1529, %v1521
    %v1794 = vpack.c.b16 %v1530, %v1522
    %v1795 = vpack.c.b16 %v1531, %v1523
    %v1796 = vpack.c.b16 %v1540, %v1532
    %v1797 = vpack.c.b16 %v1541, %v1533
    %v1798 = vpack.c.b16 %v1542, %v1534
    %v1799 = vpack.c.b16 %v1543, %v1535
    %v1800 = vpack.c.b16 %v1544, %v1536
    %v1801 = vpack.c.b16 %v1545, %v1537
    %v1802 = vpack.c.b16 %v1546, %v1538
    %v1803 = vpack.c.b16 %v1547, %v1539
    %2060 = vmatpush.bf16.msra.mxu0 %v1604
    %2061 = vmatpush.bf16.msra.mxu0 %v1596
    %2062 = vmatpush.bf16.msra.mxu0 %v1588
    %2063 = vmatpush.bf16.msra.mxu0 %v1580
    %2064 = vmatpush.bf16.msra.mxu0 %v1572
    %2065 = vmatpush.bf16.msra.mxu0 %v1564
    %2066 = vmatpush.bf16.msra.mxu0 %v1556
    %2067 = vmatpush.bf16.msra.mxu0 %v1548
    %2068 = vmatmul.bf16.gmra.mxu0 %v502
    %v2069 = vpop.f32.mrf.mxu0
    %v2070 = vadd.f32 %v764, %v2069
    %v2071 = vpop.f32.mrf.mxu0
    %v2072 = vadd.f32 %v764, %v2071
    %2073 = vdwg.mxu0
    %2074 = vmatpush.bf16.msra.mxu0 %v1668
    %2075 = vmatpush.bf16.msra.mxu0 %v1660
    %2076 = vmatpush.bf16.msra.mxu0 %v1652
    %2077 = vmatpush.bf16.msra.mxu0 %v1644
    %2078 = vmatpush.bf16.msra.mxu0 %v1636
    %2079 = vmatpush.bf16.msra.mxu0 %v1628
    %2080 = vmatpush.bf16.msra.mxu0 %v1620
    %2081 = vmatpush.bf16.msra.mxu0 %v1612
    %2082 = vmatmul.bf16.gmra.mxu0 %v503
    %v2083 = vpop.f32.mrf.mxu0
    %v2084 = vadd.f32 %v2070, %v2083
    %v2085 = vpop.f32.mrf.mxu0
    %v2086 = vadd.f32 %v2072, %v2085
    %2087 = vdwg.mxu0
    %2088 = vmatpush.bf16.msra.mxu0 %v1732
    %2089 = vmatpush.bf16.msra.mxu0 %v1724
    %2090 = vmatpush.bf16.msra.mxu0 %v1716
    %2091 = vmatpush.bf16.msra.mxu0 %v1708
    %2092 = vmatpush.bf16.msra.mxu0 %v1700
    %2093 = vmatpush.bf16.msra.mxu0 %v1692
    %2094 = vmatpush.bf16.msra.mxu0 %v1684
    %2095 = vmatpush.bf16.msra.mxu0 %v1676
    %2096 = vmatmul.bf16.gmra.mxu0 %v504
    %v2097 = vpop.f32.mrf.mxu0
    %v2098 = vadd.f32 %v2084, %v2097
    %v2099 = vpop.f32.mrf.mxu0
    %v2100 = vadd.f32 %v2086, %v2099
    %2101 = vdwg.mxu0
    %2102 = vmatpush.bf16.msra.mxu0 %v1796
    %2103 = vmatpush.bf16.msra.mxu0 %v1788
    %2104 = vmatpush.bf16.msra.mxu0 %v1780
    %2105 = vmatpush.bf16.msra.mxu0 %v1772
    %2106 = vmatpush.bf16.msra.mxu0 %v1764
    %2107 = vmatpush.bf16.msra.mxu0 %v1756
    %2108 = vmatpush.bf16.msra.mxu0 %v1748
    %2109 = vmatpush.bf16.msra.mxu0 %v1740
    %2110 = vmatmul.bf16.gmra.mxu0 %v505
    %v2111 = vpop.f32.mrf.mxu0
    %v2112 = vadd.f32 %v2098, %v2111
    %v2113 = vpop.f32.mrf.mxu0
    %v2114 = vadd.f32 %v2100, %v2113
    %2115 = vdwg.mxu0
    %2116 = vmatpush.bf16.msra.mxu0 %v1605
    %2117 = vmatpush.bf16.msra.mxu0 %v1597
    %2118 = vmatpush.bf16.msra.mxu0 %v1589
    %2119 = vmatpush.bf16.msra.mxu0 %v1581
    %2120 = vmatpush.bf16.msra.mxu0 %v1573
    %2121 = vmatpush.bf16.msra.mxu0 %v1565
    %2122 = vmatpush.bf16.msra.mxu0 %v1557
    %2123 = vmatpush.bf16.msra.mxu0 %v1549
    %2124 = vmatmul.bf16.gmra.mxu0 %v502
    %v2125 = vpop.f32.mrf.mxu0
    %v2126 = vadd.f32 %v765, %v2125
    %v2127 = vpop.f32.mrf.mxu0
    %v2128 = vadd.f32 %v765, %v2127
    %2129 = vdwg.mxu0
    %2130 = vmatpush.bf16.msra.mxu0 %v1669
    %2131 = vmatpush.bf16.msra.mxu0 %v1661
    %2132 = vmatpush.bf16.msra.mxu0 %v1653
    %2133 = vmatpush.bf16.msra.mxu0 %v1645
    %2134 = vmatpush.bf16.msra.mxu0 %v1637
    %2135 = vmatpush.bf16.msra.mxu0 %v1629
    %2136 = vmatpush.bf16.msra.mxu0 %v1621
    %2137 = vmatpush.bf16.msra.mxu0 %v1613
    %2138 = vmatmul.bf16.gmra.mxu0 %v503
    %v2139 = vpop.f32.mrf.mxu0
    %v2140 = vadd.f32 %v2126, %v2139
    %v2141 = vpop.f32.mrf.mxu0
    %v2142 = vadd.f32 %v2128, %v2141
    %2143 = vdwg.mxu0
    %2144 = vmatpush.bf16.msra.mxu0 %v1733
    %2145 = vmatpush.bf16.msra.mxu0 %v1725
    %2146 = vmatpush.bf16.msra.mxu0 %v1717
    %2147 = vmatpush.bf16.msra.mxu0 %v1709
    %2148 = vmatpush.bf16.msra.mxu0 %v1701
    %2149 = vmatpush.bf16.msra.mxu0 %v1693
    %2150 = vmatpush.bf16.msra.mxu0 %v1685
    %2151 = vmatpush.bf16.msra.mxu0 %v1677
    %2152 = vmatmul.bf16.gmra.mxu0 %v504
    %v2153 = vpop.f32.mrf.mxu0
    %v2154 = vadd.f32 %v2140, %v2153
    %v2155 = vpop.f32.mrf.mxu0
    %v2156 = vadd.f32 %v2142, %v2155
    %2157 = vdwg.mxu0
    %2158 = vmatpush.bf16.msra.mxu0 %v1797
    %2159 = vmatpush.bf16.msra.mxu0 %v1789
    %2160 = vmatpush.bf16.msra.mxu0 %v1781
    %2161 = vmatpush.bf16.msra.mxu0 %v1773
    %2162 = vmatpush.bf16.msra.mxu0 %v1765
    %2163 = vmatpush.bf16.msra.mxu0 %v1757
    %2164 = vmatpush.bf16.msra.mxu0 %v1749
    %2165 = vmatpush.bf16.msra.mxu0 %v1741
    %2166 = vmatmul.bf16.gmra.mxu0 %v505
    %v2167 = vpop.f32.mrf.mxu0
    %v2168 = vadd.f32 %v2154, %v2167
    %v2169 = vpop.f32.mrf.mxu0
    %v2170 = vadd.f32 %v2156, %v2169
    %2171 = vdwg.mxu0
    %2172 = vmatpush.bf16.msra.mxu0 %v1606
    %2173 = vmatpush.bf16.msra.mxu0 %v1598
    %2174 = vmatpush.bf16.msra.mxu0 %v1590
    %2175 = vmatpush.bf16.msra.mxu0 %v1582
    %2176 = vmatpush.bf16.msra.mxu0 %v1574
    %2177 = vmatpush.bf16.msra.mxu0 %v1566
    %2178 = vmatpush.bf16.msra.mxu0 %v1558
    %2179 = vmatpush.bf16.msra.mxu0 %v1550
    %2180 = vmatmul.bf16.gmra.mxu0 %v502
    %v2181 = vpop.f32.mrf.mxu0
    %v2182 = vadd.f32 %v766, %v2181
    %v2183 = vpop.f32.mrf.mxu0
    %v2184 = vadd.f32 %v766, %v2183
    %2185 = vdwg.mxu0
    %2186 = vmatpush.bf16.msra.mxu0 %v1670
    %2187 = vmatpush.bf16.msra.mxu0 %v1662
    %2188 = vmatpush.bf16.msra.mxu0 %v1654
    %2189 = vmatpush.bf16.msra.mxu0 %v1646
    %2190 = vmatpush.bf16.msra.mxu0 %v1638
    %2191 = vmatpush.bf16.msra.mxu0 %v1630
    %2192 = vmatpush.bf16.msra.mxu0 %v1622
    %2193 = vmatpush.bf16.msra.mxu0 %v1614
    %2194 = vmatmul.bf16.gmra.mxu0 %v503
    %v2195 = vpop.f32.mrf.mxu0
    %v2196 = vadd.f32 %v2182, %v2195
    %v2197 = vpop.f32.mrf.mxu0
    %v2198 = vadd.f32 %v2184, %v2197
    %2199 = vdwg.mxu0
    %2200 = vmatpush.bf16.msra.mxu0 %v1734
    %2201 = vmatpush.bf16.msra.mxu0 %v1726
    %2202 = vmatpush.bf16.msra.mxu0 %v1718
    %2203 = vmatpush.bf16.msra.mxu0 %v1710
    %2204 = vmatpush.bf16.msra.mxu0 %v1702
    %2205 = vmatpush.bf16.msra.mxu0 %v1694
    %2206 = vmatpush.bf16.msra.mxu0 %v1686
    %2207 = vmatpush.bf16.msra.mxu0 %v1678
    %2208 = vmatmul.bf16.gmra.mxu0 %v504
    %v2209 = vpop.f32.mrf.mxu0
    %v2210 = vadd.f32 %v2196, %v2209
    %v2211 = vpop.f32.mrf.mxu0
    %v2212 = vadd.f32 %v2198, %v2211
    %2213 = vdwg.mxu0
    %2214 = vmatpush.bf16.msra.mxu0 %v1798
    %2215 = vmatpush.bf16.msra.mxu0 %v1790
    %2216 = vmatpush.bf16.msra.mxu0 %v1782
    %2217 = vmatpush.bf16.msra.mxu0 %v1774
    %2218 = vmatpush.bf16.msra.mxu0 %v1766
    %2219 = vmatpush.bf16.msra.mxu0 %v1758
    %2220 = vmatpush.bf16.msra.mxu0 %v1750
    %2221 = vmatpush.bf16.msra.mxu0 %v1742
    %2222 = vmatmul.bf16.gmra.mxu0 %v505
    %v2223 = vpop.f32.mrf.mxu0
    %v2224 = vadd.f32 %v2210, %v2223
    %v2225 = vpop.f32.mrf.mxu0
    %v2226 = vadd.f32 %v2212, %v2225
    %2227 = vdwg.mxu0
    %2228 = vmatpush.bf16.msra.mxu0 %v1607
    %2229 = vmatpush.bf16.msra.mxu0 %v1599
    %2230 = vmatpush.bf16.msra.mxu0 %v1591
    %2231 = vmatpush.bf16.msra.mxu0 %v1583
    %2232 = vmatpush.bf16.msra.mxu0 %v1575
    %2233 = vmatpush.bf16.msra.mxu0 %v1567
    %2234 = vmatpush.bf16.msra.mxu0 %v1559
    %2235 = vmatpush.bf16.msra.mxu0 %v1551
    %2236 = vmatmul.bf16.gmra.mxu0 %v502
    %v2237 = vpop.f32.mrf.mxu0
    %v2238 = vadd.f32 %v767, %v2237
    %v2239 = vpop.f32.mrf.mxu0
    %v2240 = vadd.f32 %v767, %v2239
    %2241 = vdwg.mxu0
    %2242 = vmatpush.bf16.msra.mxu0 %v1671
    %2243 = vmatpush.bf16.msra.mxu0 %v1663
    %2244 = vmatpush.bf16.msra.mxu0 %v1655
    %2245 = vmatpush.bf16.msra.mxu0 %v1647
    %2246 = vmatpush.bf16.msra.mxu0 %v1639
    %2247 = vmatpush.bf16.msra.mxu0 %v1631
    %2248 = vmatpush.bf16.msra.mxu0 %v1623
    %2249 = vmatpush.bf16.msra.mxu0 %v1615
    %2250 = vmatmul.bf16.gmra.mxu0 %v503
    %v2251 = vpop.f32.mrf.mxu0
    %v2252 = vadd.f32 %v2238, %v2251
    %v2253 = vpop.f32.mrf.mxu0
    %v2254 = vadd.f32 %v2240, %v2253
    %2255 = vdwg.mxu0
    %2256 = vmatpush.bf16.msra.mxu0 %v1735
    %2257 = vmatpush.bf16.msra.mxu0 %v1727
    %2258 = vmatpush.bf16.msra.mxu0 %v1719
    %2259 = vmatpush.bf16.msra.mxu0 %v1711
    %2260 = vmatpush.bf16.msra.mxu0 %v1703
    %2261 = vmatpush.bf16.msra.mxu0 %v1695
    %2262 = vmatpush.bf16.msra.mxu0 %v1687
    %2263 = vmatpush.bf16.msra.mxu0 %v1679
    %2264 = vmatmul.bf16.gmra.mxu0 %v504
    %v2265 = vpop.f32.mrf.mxu0
    %v2266 = vadd.f32 %v2252, %v2265
    %v2267 = vpop.f32.mrf.mxu0
    %v2268 = vadd.f32 %v2254, %v2267
    %2269 = vdwg.mxu0
    %2270 = vmatpush.bf16.msra.mxu0 %v1799
    %2271 = vmatpush.bf16.msra.mxu0 %v1791
    %2272 = vmatpush.bf16.msra.mxu0 %v1783
    %2273 = vmatpush.bf16.msra.mxu0 %v1775
    %2274 = vmatpush.bf16.msra.mxu0 %v1767
    %2275 = vmatpush.bf16.msra.mxu0 %v1759
    %2276 = vmatpush.bf16.msra.mxu0 %v1751
    %2277 = vmatpush.bf16.msra.mxu0 %v1743
    %2278 = vmatmul.bf16.gmra.mxu0 %v505
    %v2279 = vpop.f32.mrf.mxu0
    %v2280 = vadd.f32 %v2266, %v2279
    %v2281 = vpop.f32.mrf.mxu0
    %v2282 = vadd.f32 %v2268, %v2281
    %2283 = vdwg.mxu0
    %2284 = vmatpush.bf16.msra.mxu0 %v1608
    %2285 = vmatpush.bf16.msra.mxu0 %v1600
    %2286 = vmatpush.bf16.msra.mxu0 %v1592
    %2287 = vmatpush.bf16.msra.mxu0 %v1584
    %2288 = vmatpush.bf16.msra.mxu0 %v1576
    %2289 = vmatpush.bf16.msra.mxu0 %v1568
    %2290 = vmatpush.bf16.msra.mxu0 %v1560
    %2291 = vmatpush.bf16.msra.mxu0 %v1552
    %2292 = vmatmul.bf16.gmra.mxu0 %v502
    %v2293 = vpop.f32.mrf.mxu0
    %v2294 = vadd.f32 %v768, %v2293
    %v2295 = vpop.f32.mrf.mxu0
    %v2296 = vadd.f32 %v768, %v2295
    %2297 = vdwg.mxu0
    %2298 = vmatpush.bf16.msra.mxu0 %v1672
    %2299 = vmatpush.bf16.msra.mxu0 %v1664
    %2300 = vmatpush.bf16.msra.mxu0 %v1656
    %2301 = vmatpush.bf16.msra.mxu0 %v1648
    %2302 = vmatpush.bf16.msra.mxu0 %v1640
    %2303 = vmatpush.bf16.msra.mxu0 %v1632
    %2304 = vmatpush.bf16.msra.mxu0 %v1624
    %2305 = vmatpush.bf16.msra.mxu0 %v1616
    %2306 = vmatmul.bf16.gmra.mxu0 %v503
    %v2307 = vpop.f32.mrf.mxu0
    %v2308 = vadd.f32 %v2294, %v2307
    %v2309 = vpop.f32.mrf.mxu0
    %v2310 = vadd.f32 %v2296, %v2309
    %2311 = vdwg.mxu0
    %2312 = vmatpush.bf16.msra.mxu0 %v1736
    %2313 = vmatpush.bf16.msra.mxu0 %v1728
    %2314 = vmatpush.bf16.msra.mxu0 %v1720
    %2315 = vmatpush.bf16.msra.mxu0 %v1712
    %2316 = vmatpush.bf16.msra.mxu0 %v1704
    %2317 = vmatpush.bf16.msra.mxu0 %v1696
    %2318 = vmatpush.bf16.msra.mxu0 %v1688
    %2319 = vmatpush.bf16.msra.mxu0 %v1680
    %2320 = vmatmul.bf16.gmra.mxu0 %v504
    %v2321 = vpop.f32.mrf.mxu0
    %v2322 = vadd.f32 %v2308, %v2321
    %v2323 = vpop.f32.mrf.mxu0
    %v2324 = vadd.f32 %v2310, %v2323
    %2325 = vdwg.mxu0
    %2326 = vmatpush.bf16.msra.mxu0 %v1800
    %2327 = vmatpush.bf16.msra.mxu0 %v1792
    %2328 = vmatpush.bf16.msra.mxu0 %v1784
    %2329 = vmatpush.bf16.msra.mxu0 %v1776
    %2330 = vmatpush.bf16.msra.mxu0 %v1768
    %2331 = vmatpush.bf16.msra.mxu0 %v1760
    %2332 = vmatpush.bf16.msra.mxu0 %v1752
    %2333 = vmatpush.bf16.msra.mxu0 %v1744
    %2334 = vmatmul.bf16.gmra.mxu0 %v505
    %v2335 = vpop.f32.mrf.mxu0
    %v2336 = vadd.f32 %v2322, %v2335
    %v2337 = vpop.f32.mrf.mxu0
    %v2338 = vadd.f32 %v2324, %v2337
    %2339 = vdwg.mxu0
    %2340 = vmatpush.bf16.msra.mxu0 %v1609
    %2341 = vmatpush.bf16.msra.mxu0 %v1601
    %2342 = vmatpush.bf16.msra.mxu0 %v1593
    %2343 = vmatpush.bf16.msra.mxu0 %v1585
    %2344 = vmatpush.bf16.msra.mxu0 %v1577
    %2345 = vmatpush.bf16.msra.mxu0 %v1569
    %2346 = vmatpush.bf16.msra.mxu0 %v1561
    %2347 = vmatpush.bf16.msra.mxu0 %v1553
    %2348 = vmatmul.bf16.gmra.mxu0 %v502
    %v2349 = vpop.f32.mrf.mxu0
    %v2350 = vadd.f32 %v769, %v2349
    %v2351 = vpop.f32.mrf.mxu0
    %v2352 = vadd.f32 %v769, %v2351
    %2353 = vdwg.mxu0
    %2354 = vmatpush.bf16.msra.mxu0 %v1673
    %2355 = vmatpush.bf16.msra.mxu0 %v1665
    %2356 = vmatpush.bf16.msra.mxu0 %v1657
    %2357 = vmatpush.bf16.msra.mxu0 %v1649
    %2358 = vmatpush.bf16.msra.mxu0 %v1641
    %2359 = vmatpush.bf16.msra.mxu0 %v1633
    %2360 = vmatpush.bf16.msra.mxu0 %v1625
    %2361 = vmatpush.bf16.msra.mxu0 %v1617
    %2362 = vmatmul.bf16.gmra.mxu0 %v503
    %v2363 = vpop.f32.mrf.mxu0
    %v2364 = vadd.f32 %v2350, %v2363
    %v2365 = vpop.f32.mrf.mxu0
    %v2366 = vadd.f32 %v2352, %v2365
    %2367 = vdwg.mxu0
    %2368 = vmatpush.bf16.msra.mxu0 %v1737
    %2369 = vmatpush.bf16.msra.mxu0 %v1729
    %2370 = vmatpush.bf16.msra.mxu0 %v1721
    %2371 = vmatpush.bf16.msra.mxu0 %v1713
    %2372 = vmatpush.bf16.msra.mxu0 %v1705
    %2373 = vmatpush.bf16.msra.mxu0 %v1697
    %2374 = vmatpush.bf16.msra.mxu0 %v1689
    %2375 = vmatpush.bf16.msra.mxu0 %v1681
    %2376 = vmatmul.bf16.gmra.mxu0 %v504
    %v2377 = vpop.f32.mrf.mxu0
    %v2378 = vadd.f32 %v2364, %v2377
    %v2379 = vpop.f32.mrf.mxu0
    %v2380 = vadd.f32 %v2366, %v2379
    %2381 = vdwg.mxu0
    %2382 = vmatpush.bf16.msra.mxu0 %v1801
    %2383 = vmatpush.bf16.msra.mxu0 %v1793
    %2384 = vmatpush.bf16.msra.mxu0 %v1785
    %2385 = vmatpush.bf16.msra.mxu0 %v1777
    %2386 = vmatpush.bf16.msra.mxu0 %v1769
    %2387 = vmatpush.bf16.msra.mxu0 %v1761
    %2388 = vmatpush.bf16.msra.mxu0 %v1753
    %2389 = vmatpush.bf16.msra.mxu0 %v1745
    %2390 = vmatmul.bf16.gmra.mxu0 %v505
    %v2391 = vpop.f32.mrf.mxu0
    %v2392 = vadd.f32 %v2378, %v2391
    %v2393 = vpop.f32.mrf.mxu0
    %v2394 = vadd.f32 %v2380, %v2393
    %2395 = vdwg.mxu0
    %2396 = vmatpush.bf16.msra.mxu0 %v1610
    %2397 = vmatpush.bf16.msra.mxu0 %v1602
    %2398 = vmatpush.bf16.msra.mxu0 %v1594
    %2399 = vmatpush.bf16.msra.mxu0 %v1586
    %2400 = vmatpush.bf16.msra.mxu0 %v1578
    %2401 = vmatpush.bf16.msra.mxu0 %v1570
    %2402 = vmatpush.bf16.msra.mxu0 %v1562
    %2403 = vmatpush.bf16.msra.mxu0 %v1554
    %2404 = vmatmul.bf16.gmra.mxu0 %v502
    %v2405 = vpop.f32.mrf.mxu0
    %v2406 = vadd.f32 %v770, %v2405
    %v2407 = vpop.f32.mrf.mxu0
    %v2408 = vadd.f32 %v770, %v2407
    %2409 = vdwg.mxu0
    %2410 = vmatpush.bf16.msra.mxu0 %v1674
    %2411 = vmatpush.bf16.msra.mxu0 %v1666
    %2412 = vmatpush.bf16.msra.mxu0 %v1658
    %2413 = vmatpush.bf16.msra.mxu0 %v1650
    %2414 = vmatpush.bf16.msra.mxu0 %v1642
    %2415 = vmatpush.bf16.msra.mxu0 %v1634
    %2416 = vmatpush.bf16.msra.mxu0 %v1626
    %2417 = vmatpush.bf16.msra.mxu0 %v1618
    %2418 = vmatmul.bf16.gmra.mxu0 %v503
    %v2419 = vpop.f32.mrf.mxu0
    %v2420 = vadd.f32 %v2406, %v2419
    %v2421 = vpop.f32.mrf.mxu0
    %v2422 = vadd.f32 %v2408, %v2421
    %2423 = vdwg.mxu0
    %2424 = vmatpush.bf16.msra.mxu0 %v1738
    %2425 = vmatpush.bf16.msra.mxu0 %v1730
    %2426 = vmatpush.bf16.msra.mxu0 %v1722
    %2427 = vmatpush.bf16.msra.mxu0 %v1714
    %2428 = vmatpush.bf16.msra.mxu0 %v1706
    %2429 = vmatpush.bf16.msra.mxu0 %v1698
    %2430 = vmatpush.bf16.msra.mxu0 %v1690
    %2431 = vmatpush.bf16.msra.mxu0 %v1682
    %2432 = vmatmul.bf16.gmra.mxu0 %v504
    %v2433 = vpop.f32.mrf.mxu0
    %v2434 = vadd.f32 %v2420, %v2433
    %v2435 = vpop.f32.mrf.mxu0
    %v2436 = vadd.f32 %v2422, %v2435
    %2437 = vdwg.mxu0
    %2438 = vmatpush.bf16.msra.mxu0 %v1802
    %2439 = vmatpush.bf16.msra.mxu0 %v1794
    %2440 = vmatpush.bf16.msra.mxu0 %v1786
    %2441 = vmatpush.bf16.msra.mxu0 %v1778
    %2442 = vmatpush.bf16.msra.mxu0 %v1770
    %2443 = vmatpush.bf16.msra.mxu0 %v1762
    %2444 = vmatpush.bf16.msra.mxu0 %v1754
    %2445 = vmatpush.bf16.msra.mxu0 %v1746
    %2446 = vmatmul.bf16.gmra.mxu0 %v505
    %v2447 = vpop.f32.mrf.mxu0
    %v2448 = vadd.f32 %v2434, %v2447
    %v2449 = vpop.f32.mrf.mxu0
    %v2450 = vadd.f32 %v2436, %v2449
    %2451 = vdwg.mxu0
    %2452 = vmatpush.bf16.msra.mxu0 %v1611
    %2453 = vmatpush.bf16.msra.mxu0 %v1603
    %2454 = vmatpush.bf16.msra.mxu0 %v1595
    %2455 = vmatpush.bf16.msra.mxu0 %v1587
    %2456 = vmatpush.bf16.msra.mxu0 %v1579
    %2457 = vmatpush.bf16.msra.mxu0 %v1571
    %2458 = vmatpush.bf16.msra.mxu0 %v1563
    %2459 = vmatpush.bf16.msra.mxu0 %v1555
    %2460 = vmatmul.bf16.gmra.mxu0 %v502
    %v2461 = vpop.f32.mrf.mxu0
    %v2462 = vadd.f32 %v771, %v2461
    %v2463 = vpop.f32.mrf.mxu0
    %v2464 = vadd.f32 %v771, %v2463
    %2465 = vdwg.mxu0
    %2466 = vmatpush.bf16.msra.mxu0 %v1675
    %2467 = vmatpush.bf16.msra.mxu0 %v1667
    %2468 = vmatpush.bf16.msra.mxu0 %v1659
    %2469 = vmatpush.bf16.msra.mxu0 %v1651
    %2470 = vmatpush.bf16.msra.mxu0 %v1643
    %2471 = vmatpush.bf16.msra.mxu0 %v1635
    %2472 = vmatpush.bf16.msra.mxu0 %v1627
    %2473 = vmatpush.bf16.msra.mxu0 %v1619
    %2474 = vmatmul.bf16.gmra.mxu0 %v503
    %v2475 = vpop.f32.mrf.mxu0
    %v2476 = vadd.f32 %v2462, %v2475
    %v2477 = vpop.f32.mrf.mxu0
    %v2478 = vadd.f32 %v2464, %v2477
    %2479 = vdwg.mxu0
    %2480 = vmatpush.bf16.msra.mxu0 %v1739
    %2481 = vmatpush.bf16.msra.mxu0 %v1731
    %2482 = vmatpush.bf16.msra.mxu0 %v1723
    %2483 = vmatpush.bf16.msra.mxu0 %v1715
    %2484 = vmatpush.bf16.msra.mxu0 %v1707
    %2485 = vmatpush.bf16.msra.mxu0 %v1699
    %2486 = vmatpush.bf16.msra.mxu0 %v1691
    %2487 = vmatpush.bf16.msra.mxu0 %v1683
    %2488 = vmatmul.bf16.gmra.mxu0 %v504
    %v2489 = vpop.f32.mrf.mxu0
    %v2490 = vadd.f32 %v2476, %v2489
    %v2491 = vpop.f32.mrf.mxu0
    %v2492 = vadd.f32 %v2478, %v2491
    %2493 = vdwg.mxu0
    %2494 = vmatpush.bf16.msra.mxu0 %v1803
    %2495 = vmatpush.bf16.msra.mxu0 %v1795
    %2496 = vmatpush.bf16.msra.mxu0 %v1787
    %2497 = vmatpush.bf16.msra.mxu0 %v1779
    %2498 = vmatpush.bf16.msra.mxu0 %v1771
    %2499 = vmatpush.bf16.msra.mxu0 %v1763
    %2500 = vmatpush.bf16.msra.mxu0 %v1755
    %2501 = vmatpush.bf16.msra.mxu0 %v1747
    %2502 = vmatmul.bf16.gmra.mxu0 %v505
    %v2503 = vpop.f32.mrf.mxu0
    %v2504 = vadd.f32 %v2490, %v2503
    %v2505 = vpop.f32.mrf.mxu0
    %v2506 = vadd.f32 %v2492, %v2505
    %2507 = vdwg.mxu0
    %v2508 = vmax.f32 %v2112, 0.0
    %v2509 = vmax.f32 %v2168, 0.0
    %v2510 = vmax.f32 %v2224, 0.0
    %v2511 = vmax.f32 %v2280, 0.0
    %v2512 = vmax.f32 %v2336, 0.0
    %v2513 = vmax.f32 %v2392, 0.0
    %v2514 = vmax.f32 %v2448, 0.0
    %v2515 = vmax.f32 %v2504, 0.0
    %v2516 = vmax.f32 %v2114, 0.0
    %v2517 = vmax.f32 %v2170, 0.0
    %v2518 = vmax.f32 %v2226, 0.0
    %v2519 = vmax.f32 %v2282, 0.0
    %v2520 = vmax.f32 %v2338, 0.0
    %v2521 = vmax.f32 %v2394, 0.0
    %v2522 = vmax.f32 %v2450, 0.0
    %v2523 = vmax.f32 %v2506, 0.0
    %v2524 = vpack.c.bf16 %v2516, %v2508
    %v2525 = vpack.c.bf16 %v2517, %v2509
    %v2526 = vpack.c.bf16 %v2518, %v2510
    %v2527 = vpack.c.bf16 %v2519, %v2511
    %v2528 = vpack.c.bf16 %v2520, %v2512
    %v2529 = vpack.c.bf16 %v2521, %v2513
    %v2530 = vpack.c.bf16 %v2522, %v2514
    %v2531 = vpack.c.bf16 %v2523, %v2515
    %v2532 = vld [vmem:[#allocation6] sm:$0xff]
    %v2533 = vld [vmem:[#allocation6 + $0x8] sm:$0xf]
    %v2534 = vld [vmem:[#allocation6 + $0xc] sm:$0xff]
    %v2535 = vld [vmem:[#allocation6 + $0x14] sm:$0xf]
    %v2536 = vld [vmem:[#allocation6 + $0x18] sm:$0xff]
    %v2537 = vld [vmem:[#allocation6 + $0x20] sm:$0xf]
    %v2538 = vld [vmem:[#allocation6 + $0x24] sm:$0xff]
    %v2539 = vld [vmem:[#allocation6 + $0x2c] sm:$0xf]
    %v2540 = vld [vmem:[#allocation6 + $0x30] sm:$0xff]
    %v2541 = vld [vmem:[#allocation6 + $0x38] sm:$0xf]
    %v2542 = vld [vmem:[#allocation6 + $0x3c] sm:$0xff]
    %v2543 = vld [vmem:[#allocation6 + $0x44] sm:$0xf]
    %v2544 = vld [vmem:[#allocation6 + $0x48] sm:$0xff]
    %v2545 = vld [vmem:[#allocation6 + $0x50] sm:$0xf]
    %v2546 = vld [vmem:[#allocation6 + $0x54] sm:$0xff]
    %v2547 = vld [vmem:[#allocation6 + $0x5c] sm:$0xf]
    %v2548 = vld [vmem:[#allocation6 + $0x60] sm:$0xff]
    %v2549 = vld [vmem:[#allocation6 + $0x68] sm:$0xf]
    %v2550 = vld [vmem:[#allocation6 + $0x6c] sm:$0xff]
    %v2551 = vld [vmem:[#allocation6 + $0x74] sm:$0xf]
    %v2552 = vld [vmem:[#allocation6 + $0x78] sm:$0xff]
    %v2553 = vld [vmem:[#allocation6 + $0x80] sm:$0xf]
    %v2554 = vld [vmem:[#allocation6 + $0x84] sm:$0xff]
    %v2555 = vld [vmem:[#allocation6 + $0x8c] sm:$0xf]
    %v2556 = vld [vmem:[#allocation6 + $0x90] sm:$0xff]
    %v2557 = vld [vmem:[#allocation6 + $0x98] sm:$0xf]
    %v2558 = vld [vmem:[#allocation6 + $0x9c] sm:$0xff]
    %v2559 = vld [vmem:[#allocation6 + $0xa4] sm:$0xf]
    %v2560 = vld [vmem:[#allocation6 + $0xa8] sm:$0xff]
    %v2561 = vld [vmem:[#allocation6 + $0xb0] sm:$0xf]
    %v2562 = vld [vmem:[#allocation6 + $0xb4] sm:$0xff]
    %v2563 = vld [vmem:[#allocation6 + $0xbc] sm:$0xf]
    %v2564 = vld [vmem:[#allocation6 + $0xc0] sm:$0xff]
    %v2565 = vld [vmem:[#allocation6 + $0xc8] sm:$0xf]
    %v2566 = vld [vmem:[#allocation6 + $0xcc] sm:$0xff]
    %v2567 = vld [vmem:[#allocation6 + $0xd4] sm:$0xf]
    %v2568 = vld [vmem:[#allocation6 + $0xd8] sm:$0xff]
    %v2569 = vld [vmem:[#allocation6 + $0xe0] sm:$0xf]
    %v2570 = vld [vmem:[#allocation6 + $0xe4] sm:$0xff]
    %v2571 = vld [vmem:[#allocation6 + $0xec] sm:$0xf]
    %v2572 = vld [vmem:[#allocation6 + $0xf0] sm:$0xff]
    %v2573 = vld [vmem:[#allocation6 + $0xf8] sm:$0xf]
    %v2574 = vld [vmem:[#allocation6 + $0xfc] sm:$0xff]
    %v2575 = vld [vmem:[#allocation6 + $0x104] sm:$0xf]
    %v2576 = vld [vmem:[#allocation6 + $0x108] sm:$0xff]
    %v2577 = vld [vmem:[#allocation6 + $0x110] sm:$0xf]
    %v2578 = vld [vmem:[#allocation6 + $0x114] sm:$0xff]
    %v2579 = vld [vmem:[#allocation6 + $0x11c] sm:$0xf]
    %v2580 = vld [vmem:[#allocation6 + $0x120] sm:$0xff]
    %v2581 = vld [vmem:[#allocation6 + $0x128] sm:$0xf]
    %v2582 = vld [vmem:[#allocation6 + $0x12c] sm:$0xff]
    %v2583 = vld [vmem:[#allocation6 + $0x134] sm:$0xf]
    %v2584 = vld [vmem:[#allocation6 + $0x138] sm:$0xff]
    %v2585 = vld [vmem:[#allocation6 + $0x140] sm:$0xf]
    %v2586 = vld [vmem:[#allocation6 + $0x144] sm:$0xff]
    %v2587 = vld [vmem:[#allocation6 + $0x14c] sm:$0xf]
    %v2588 = vld [vmem:[#allocation6 + $0x150] sm:$0xff]
    %v2589 = vld [vmem:[#allocation6 + $0x158] sm:$0xf]
    %v2590 = vld [vmem:[#allocation6 + $0x15c] sm:$0xff]
    %v2591 = vld [vmem:[#allocation6 + $0x164] sm:$0xf]
    %v2592 = vld [vmem:[#allocation6 + $0x168] sm:$0xff]
    %v2593 = vld [vmem:[#allocation6 + $0x170] sm:$0xf]
    %v2594 = vld [vmem:[#allocation6 + $0x174] sm:$0xff]
    %v2595 = vld [vmem:[#allocation6 + $0x17c] sm:$0xf]
    %v2596 = vld [vmem:[#allocation6 + $0x180] sm:$0xff]
    %v2597 = vld [vmem:[#allocation6 + $0x188] sm:$0xf]
    %v2598 = vld [vmem:[#allocation6 + $0x18c] sm:$0xff]
    %v2599 = vld [vmem:[#allocation6 + $0x194] sm:$0xf]
    %v2600 = vld [vmem:[#allocation6 + $0x198] sm:$0xff]
    %v2601 = vld [vmem:[#allocation6 + $0x1a0] sm:$0xf]
    %v2602 = vld [vmem:[#allocation6 + $0x1a4] sm:$0xff]
    %v2603 = vld [vmem:[#allocation6 + $0x1ac] sm:$0xf]
    %v2604 = vld [vmem:[#allocation6 + $0x1b0] sm:$0xff]
    %v2605 = vld [vmem:[#allocation6 + $0x1b8] sm:$0xf]
    %v2606 = vld [vmem:[#allocation6 + $0x1bc] sm:$0xff]
    %v2607 = vld [vmem:[#allocation6 + $0x1c4] sm:$0xf]
    %v2608 = vld [vmem:[#allocation6 + $0x1c8] sm:$0xff]
    %v2609 = vld [vmem:[#allocation6 + $0x1d0] sm:$0xf]
    %v2610 = vld [vmem:[#allocation6 + $0x1d4] sm:$0xff]
    %v2611 = vld [vmem:[#allocation6 + $0x1dc] sm:$0xf]
    %v2612 = vld [vmem:[#allocation6 + $0x1e0] sm:$0xff]
    %v2613 = vld [vmem:[#allocation6 + $0x1e8] sm:$0xf]
    %v2614 = vld [vmem:[#allocation6 + $0x1ec] sm:$0xff]
    %v2615 = vld [vmem:[#allocation6 + $0x1f4] sm:$0xf]
    %v2616 = vld [vmem:[#allocation6 + $0x1f8] sm:$0xff]
    %v2617 = vld [vmem:[#allocation6 + $0x200] sm:$0xf]
    %v2618 = vld [vmem:[#allocation6 + $0x204] sm:$0xff]
    %v2619 = vld [vmem:[#allocation6 + $0x20c] sm:$0xf]
    %v2620 = vld [vmem:[#allocation6 + $0x210] sm:$0xff]
    %v2621 = vld [vmem:[#allocation6 + $0x218] sm:$0xf]
    %v2622 = vld [vmem:[#allocation6 + $0x21c] sm:$0xff]
    %v2623 = vld [vmem:[#allocation6 + $0x224] sm:$0xf]
    %v2624 = vld [vmem:[#allocation6 + $0x228] sm:$0xff]
    %v2625 = vld [vmem:[#allocation6 + $0x230] sm:$0xf]
    %v2626 = vld [vmem:[#allocation6 + $0x234] sm:$0xff]
    %v2627 = vld [vmem:[#allocation6 + $0x23c] sm:$0xf]
    %v2628 = vld [vmem:[#allocation6 + $0x240] sm:$0xff]
    %v2629 = vld [vmem:[#allocation6 + $0x248] sm:$0xf]
    %v2630 = vld [vmem:[#allocation6 + $0x24c] sm:$0xff]
    %v2631 = vld [vmem:[#allocation6 + $0x254] sm:$0xf]
    %v2632 = vld [vmem:[#allocation6 + $0x258] sm:$0xff]
    %v2633 = vld [vmem:[#allocation6 + $0x260] sm:$0xf]
    %v2634 = vld [vmem:[#allocation6 + $0x264] sm:$0xff]
    %v2635 = vld [vmem:[#allocation6 + $0x26c] sm:$0xf]
    %v2636 = vld [vmem:[#allocation6 + $0x270] sm:$0xff]
    %v2637 = vld [vmem:[#allocation6 + $0x278] sm:$0xf]
    %v2638 = vld [vmem:[#allocation6 + $0x27c] sm:$0xff]
    %v2639 = vld [vmem:[#allocation6 + $0x284] sm:$0xf]
    %v2640 = vld [vmem:[#allocation6 + $0x288] sm:$0xff]
    %v2641 = vld [vmem:[#allocation6 + $0x290] sm:$0xf]
    %v2642 = vld [vmem:[#allocation6 + $0x294] sm:$0xff]
    %v2643 = vld [vmem:[#allocation6 + $0x29c] sm:$0xf]
    %v2644 = vld [vmem:[#allocation6 + $0x2a0] sm:$0xff]
    %v2645 = vld [vmem:[#allocation6 + $0x2a8] sm:$0xf]
    %v2646 = vld [vmem:[#allocation6 + $0x2ac] sm:$0xff]
    %v2647 = vld [vmem:[#allocation6 + $0x2b4] sm:$0xf]
    %v2648 = vld [vmem:[#allocation6 + $0x2b8] sm:$0xff]
    %v2649 = vld [vmem:[#allocation6 + $0x2c0] sm:$0xf]
    %v2650 = vld [vmem:[#allocation6 + $0x2c4] sm:$0xff]
    %v2651 = vld [vmem:[#allocation6 + $0x2cc] sm:$0xf]
    %v2652 = vld [vmem:[#allocation6 + $0x2d0] sm:$0xff]
    %v2653 = vld [vmem:[#allocation6 + $0x2d8] sm:$0xf]
    %v2654 = vld [vmem:[#allocation6 + $0x2dc] sm:$0xff]
    %v2655 = vld [vmem:[#allocation6 + $0x2e4] sm:$0xf]
    %v2656 = vld [vmem:[#allocation6 + $0x2e8] sm:$0xff]
    %v2657 = vld [vmem:[#allocation6 + $0x2f0] sm:$0xf]
    %v2658 = vld [vmem:[#allocation6 + $0x2f4] sm:$0xff]
    %v2659 = vld [vmem:[#allocation6 + $0x2fc] sm:$0xf]
    %v2660 = vld [vmem:[#allocation6 + $0x300] sm:$0xff]
    %v2661 = vld [vmem:[#allocation6 + $0x308] sm:$0xf]
    %v2662 = vld [vmem:[#allocation6 + $0x30c] sm:$0xff]
    %v2663 = vld [vmem:[#allocation6 + $0x314] sm:$0xf]
    %v2664 = vld [vmem:[#allocation6 + $0x318] sm:$0xff]
    %v2665 = vld [vmem:[#allocation6 + $0x320] sm:$0xf]
    %v2666 = vld [vmem:[#allocation6 + $0x324] sm:$0xff]
    %v2667 = vld [vmem:[#allocation6 + $0x32c] sm:$0xf]
    %v2668 = vld [vmem:[#allocation6 + $0x330] sm:$0xff]
    %v2669 = vld [vmem:[#allocation6 + $0x338] sm:$0xf]
    %v2670 = vld [vmem:[#allocation6 + $0x33c] sm:$0xff]
    %v2671 = vld [vmem:[#allocation6 + $0x344] sm:$0xf]
    %v2672 = vld [vmem:[#allocation6 + $0x348] sm:$0xff]
    %v2673 = vld [vmem:[#allocation6 + $0x350] sm:$0xf]
    %v2674 = vld [vmem:[#allocation6 + $0x354] sm:$0xff]
    %v2675 = vld [vmem:[#allocation6 + $0x35c] sm:$0xf]
    %v2676 = vld [vmem:[#allocation6 + $0x360] sm:$0xff]
    %v2677 = vld [vmem:[#allocation6 + $0x368] sm:$0xf]
    %v2678 = vld [vmem:[#allocation6 + $0x36c] sm:$0xff]
    %v2679 = vld [vmem:[#allocation6 + $0x374] sm:$0xf]
    %v2680 = vld [vmem:[#allocation6 + $0x378] sm:$0xff]
    %v2681 = vld [vmem:[#allocation6 + $0x380] sm:$0xf]
    %v2682 = vld [vmem:[#allocation6 + $0x384] sm:$0xff]
    %v2683 = vld [vmem:[#allocation6 + $0x38c] sm:$0xf]
    %v2684 = vld [vmem:[#allocation6 + $0x390] sm:$0xff]
    %v2685 = vld [vmem:[#allocation6 + $0x398] sm:$0xf]
    %v2686 = vld [vmem:[#allocation6 + $0x39c] sm:$0xff]
    %v2687 = vld [vmem:[#allocation6 + $0x3a4] sm:$0xf]
    %v2688 = vld [vmem:[#allocation6 + $0x3a8] sm:$0xff]
    %v2689 = vld [vmem:[#allocation6 + $0x3b0] sm:$0xf]
    %v2690 = vld [vmem:[#allocation6 + $0x3b4] sm:$0xff]
    %v2691 = vld [vmem:[#allocation6 + $0x3bc] sm:$0xf]
    %v2692 = vld [vmem:[#allocation6 + $0x3c0] sm:$0xff]
    %v2693 = vld [vmem:[#allocation6 + $0x3c8] sm:$0xf]
    %v2694 = vld [vmem:[#allocation6 + $0x3cc] sm:$0xff]
    %v2695 = vld [vmem:[#allocation6 + $0x3d4] sm:$0xf]
    %v2696 = vld [vmem:[#allocation6 + $0x3d8] sm:$0xff]
    %v2697 = vld [vmem:[#allocation6 + $0x3e0] sm:$0xf]
    %v2698 = vld [vmem:[#allocation6 + $0x3e4] sm:$0xff]
    %v2699 = vld [vmem:[#allocation6 + $0x3ec] sm:$0xf]
    %v2700 = vld [vmem:[#allocation6 + $0x3f0] sm:$0xff]
    %v2701 = vld [vmem:[#allocation6 + $0x3f8] sm:$0xf]
    %v2702 = vld [vmem:[#allocation6 + $0x3fc] sm:$0xff]
    %v2703 = vld [vmem:[#allocation6 + $0x404] sm:$0xf]
    %v2704 = vld [vmem:[#allocation6 + $0x408] sm:$0xff]
    %v2705 = vld [vmem:[#allocation6 + $0x410] sm:$0xf]
    %v2706 = vld [vmem:[#allocation6 + $0x414] sm:$0xff]
    %v2707 = vld [vmem:[#allocation6 + $0x41c] sm:$0xf]
    %v2708 = vld [vmem:[#allocation6 + $0x420] sm:$0xff]
    %v2709 = vld [vmem:[#allocation6 + $0x428] sm:$0xf]
    %v2710 = vld [vmem:[#allocation6 + $0x42c] sm:$0xff]
    %v2711 = vld [vmem:[#allocation6 + $0x434] sm:$0xf]
    %v2712 = vld [vmem:[#allocation6 + $0x438] sm:$0xff]
    %v2713 = vld [vmem:[#allocation6 + $0x440] sm:$0xf]
    %v2714 = vld [vmem:[#allocation6 + $0x444] sm:$0xff]
    %v2715 = vld [vmem:[#allocation6 + $0x44c] sm:$0xf]
    %v2716 = vld [vmem:[#allocation6 + $0x450] sm:$0xff]
    %v2717 = vld [vmem:[#allocation6 + $0x458] sm:$0xf]
    %v2718 = vld [vmem:[#allocation6 + $0x45c] sm:$0xff]
    %v2719 = vld [vmem:[#allocation6 + $0x464] sm:$0xf]
    %v2720 = vld [vmem:[#allocation6 + $0x468] sm:$0xff]
    %v2721 = vld [vmem:[#allocation6 + $0x470] sm:$0xf]
    %v2722 = vld [vmem:[#allocation6 + $0x474] sm:$0xff]
    %v2723 = vld [vmem:[#allocation6 + $0x47c] sm:$0xf]
    %v2724 = vld [vmem:[#allocation6 + $0x480] sm:$0xff]
    %v2725 = vld [vmem:[#allocation6 + $0x488] sm:$0xf]
    %v2726 = vld [vmem:[#allocation6 + $0x48c] sm:$0xff]
    %v2727 = vld [vmem:[#allocation6 + $0x494] sm:$0xf]
    %v2728 = vld [vmem:[#allocation6 + $0x498] sm:$0xff]
    %v2729 = vld [vmem:[#allocation6 + $0x4a0] sm:$0xf]
    %v2730 = vld [vmem:[#allocation6 + $0x4a4] sm:$0xff]
    %v2731 = vld [vmem:[#allocation6 + $0x4ac] sm:$0xf]
    %v2732 = vld [vmem:[#allocation6 + $0x4b0] sm:$0xff]
    %v2733 = vld [vmem:[#allocation6 + $0x4b8] sm:$0xf]
    %v2734 = vld [vmem:[#allocation6 + $0x4bc] sm:$0xff]
    %v2735 = vld [vmem:[#allocation6 + $0x4c4] sm:$0xf]
    %v2736 = vld [vmem:[#allocation6 + $0x4c8] sm:$0xff]
    %v2737 = vld [vmem:[#allocation6 + $0x4d0] sm:$0xf]
    %v2738 = vld [vmem:[#allocation6 + $0x4d4] sm:$0xff]
    %v2739 = vld [vmem:[#allocation6 + $0x4dc] sm:$0xf]
    %v2740 = vld [vmem:[#allocation6 + $0x4e0] sm:$0xff]
    %v2741 = vld [vmem:[#allocation6 + $0x4e8] sm:$0xf]
    %v2742 = vld [vmem:[#allocation6 + $0x4ec] sm:$0xff]
    %v2743 = vld [vmem:[#allocation6 + $0x4f4] sm:$0xf]
    %v2744 = vld [vmem:[#allocation6 + $0x4f8] sm:$0xff]
    %v2745 = vld [vmem:[#allocation6 + $0x500] sm:$0xf]
    %v2746 = vld [vmem:[#allocation6 + $0x504] sm:$0xff]
    %v2747 = vld [vmem:[#allocation6 + $0x50c] sm:$0xf]
    %v2748 = vld [vmem:[#allocation6 + $0x510] sm:$0xff]
    %v2749 = vld [vmem:[#allocation6 + $0x518] sm:$0xf]
    %v2750 = vld [vmem:[#allocation6 + $0x51c] sm:$0xff]
    %v2751 = vld [vmem:[#allocation6 + $0x524] sm:$0xf]
    %v2752 = vld [vmem:[#allocation6 + $0x528] sm:$0xff]
    %v2753 = vld [vmem:[#allocation6 + $0x530] sm:$0xf]
    %v2754 = vld [vmem:[#allocation6 + $0x534] sm:$0xff]
    %v2755 = vld [vmem:[#allocation6 + $0x53c] sm:$0xf]
    %v2756 = vld [vmem:[#allocation6 + $0x540] sm:$0xff]
    %v2757 = vld [vmem:[#allocation6 + $0x548] sm:$0xf]
    %v2758 = vld [vmem:[#allocation6 + $0x54c] sm:$0xff]
    %v2759 = vld [vmem:[#allocation6 + $0x554] sm:$0xf]
    %v2760 = vld [vmem:[#allocation6 + $0x558] sm:$0xff]
    %v2761 = vld [vmem:[#allocation6 + $0x560] sm:$0xf]
    %v2762 = vld [vmem:[#allocation6 + $0x564] sm:$0xff]
    %v2763 = vld [vmem:[#allocation6 + $0x56c] sm:$0xf]
    %v2764 = vld [vmem:[#allocation6 + $0x570] sm:$0xff]
    %v2765 = vld [vmem:[#allocation6 + $0x578] sm:$0xf]
    %v2766 = vld [vmem:[#allocation6 + $0x57c] sm:$0xff]
    %v2767 = vld [vmem:[#allocation6 + $0x584] sm:$0xf]
    %v2768 = vld [vmem:[#allocation6 + $0x588] sm:$0xff]
    %v2769 = vld [vmem:[#allocation6 + $0x590] sm:$0xf]
    %v2770 = vld [vmem:[#allocation6 + $0x594] sm:$0xff]
    %v2771 = vld [vmem:[#allocation6 + $0x59c] sm:$0xf]
    %v2772 = vld [vmem:[#allocation6 + $0x5a0] sm:$0xff]
    %v2773 = vld [vmem:[#allocation6 + $0x5a8] sm:$0xf]
    %v2774 = vld [vmem:[#allocation6 + $0x5ac] sm:$0xff]
    %v2775 = vld [vmem:[#allocation6 + $0x5b4] sm:$0xf]
    %v2776 = vld [vmem:[#allocation6 + $0x5b8] sm:$0xff]
    %v2777 = vld [vmem:[#allocation6 + $0x5c0] sm:$0xf]
    %v2778 = vld [vmem:[#allocation6 + $0x5c4] sm:$0xff]
    %v2779 = vld [vmem:[#allocation6 + $0x5cc] sm:$0xf]
    %v2780 = vld [vmem:[#allocation6 + $0x5d0] sm:$0xff]
    %v2781 = vld [vmem:[#allocation6 + $0x5d8] sm:$0xf]
    %v2782 = vld [vmem:[#allocation6 + $0x5dc] sm:$0xff]
    %v2783 = vld [vmem:[#allocation6 + $0x5e4] sm:$0xf]
    %v2784 = vld [vmem:[#allocation6 + $0x5e8] sm:$0xff]
    %v2785 = vld [vmem:[#allocation6 + $0x5f0] sm:$0xf]
    %v2786 = vld [vmem:[#allocation6 + $0x5f4] sm:$0xff]
    %v2787 = vld [vmem:[#allocation6 + $0x5fc] sm:$0xf]
    %v2788 = vld [vmem:[%s7] sm:$0x7]
    %v2790 = vperm.slane %v2788, 0
    %v2791 = vperm.slane %v2788, 1
    %v2792 = vperm.slane %v2788, 2
    %v3052 = vunpack.c.l.b16 %v2532
    %v3053 = vunpack.c.h.b16 %v2532
    %v3054 = vunpack.c.l.b16 %v2533
    %v3055 = vunpack.c.l.b16 %v2534
    %v3056 = vunpack.c.h.b16 %v2534
    %v3057 = vunpack.c.l.b16 %v2535
    %v3058 = vunpack.c.l.b16 %v2536
    %v3059 = vunpack.c.h.b16 %v2536
    %v3060 = vunpack.c.l.b16 %v2537
    %v3061 = vunpack.c.l.b16 %v2538
    %v3062 = vunpack.c.h.b16 %v2538
    %v3063 = vunpack.c.l.b16 %v2539
    %v3064 = vunpack.c.l.b16 %v2540
    %v3065 = vunpack.c.h.b16 %v2540
    %v3066 = vunpack.c.l.b16 %v2541
    %v3067 = vunpack.c.l.b16 %v2542
    %v3068 = vunpack.c.h.b16 %v2542
    %v3069 = vunpack.c.l.b16 %v2543
    %v3070 = vunpack.c.l.b16 %v2544
    %v3071 = vunpack.c.h.b16 %v2544
    %v3072 = vunpack.c.l.b16 %v2545
    %v3073 = vunpack.c.l.b16 %v2546
    %v3074 = vunpack.c.h.b16 %v2546
    %v3075 = vunpack.c.l.b16 %v2547
    %v3076 = vunpack.c.l.b16 %v2548
    %v3077 = vunpack.c.h.b16 %v2548
    %v3078 = vunpack.c.l.b16 %v2549
    %v3079 = vunpack.c.l.b16 %v2550
    %v3080 = vunpack.c.h.b16 %v2550
    %v3081 = vunpack.c.l.b16 %v2551
    %v3082 = vunpack.c.l.b16 %v2552
    %v3083 = vunpack.c.h.b16 %v2552
    %v3084 = vunpack.c.l.b16 %v2553
    %v3085 = vunpack.c.l.b16 %v2554
    %v3086 = vunpack.c.h.b16 %v2554
    %v3087 = vunpack.c.l.b16 %v2555
    %v3088 = vunpack.c.l.b16 %v2556
    %v3089 = vunpack.c.h.b16 %v2556
    %v3090 = vunpack.c.l.b16 %v2557
    %v3091 = vunpack.c.l.b16 %v2558
    %v3092 = vunpack.c.h.b16 %v2558
    %v3093 = vunpack.c.l.b16 %v2559
    %v3094 = vunpack.c.l.b16 %v2560
    %v3095 = vunpack.c.h.b16 %v2560
    %v3096 = vunpack.c.l.b16 %v2561
    %v3097 = vunpack.c.l.b16 %v2562
    %v3098 = vunpack.c.h.b16 %v2562
    %v3099 = vunpack.c.l.b16 %v2563
    %v3100 = vunpack.c.l.b16 %v2564
    %v3101 = vunpack.c.h.b16 %v2564
    %v3102 = vunpack.c.l.b16 %v2565
    %v3103 = vunpack.c.l.b16 %v2566
    %v3104 = vunpack.c.h.b16 %v2566
    %v3105 = vunpack.c.l.b16 %v2567
    %v3106 = vunpack.c.l.b16 %v2568
    %v3107 = vunpack.c.h.b16 %v2568
    %v3108 = vunpack.c.l.b16 %v2569
    %v3109 = vunpack.c.l.b16 %v2570
    %v3110 = vunpack.c.h.b16 %v2570
    %v3111 = vunpack.c.l.b16 %v2571
    %v3112 = vunpack.c.l.b16 %v2572
    %v3113 = vunpack.c.h.b16 %v2572
    %v3114 = vunpack.c.l.b16 %v2573
    %v3115 = vunpack.c.l.b16 %v2574
    %v3116 = vunpack.c.h.b16 %v2574
    %v3117 = vunpack.c.l.b16 %v2575
    %v3118 = vunpack.c.l.b16 %v2576
    %v3119 = vunpack.c.h.b16 %v2576
    %v3120 = vunpack.c.l.b16 %v2577
    %v3121 = vunpack.c.l.b16 %v2578
    %v3122 = vunpack.c.h.b16 %v2578
    %v3123 = vunpack.c.l.b16 %v2579
    %v3124 = vunpack.c.l.b16 %v2580
    %v3125 = vunpack.c.h.b16 %v2580
    %v3126 = vunpack.c.l.b16 %v2581
    %v3127 = vunpack.c.l.b16 %v2582
    %v3128 = vunpack.c.h.b16 %v2582
    %v3129 = vunpack.c.l.b16 %v2583
    %v3130 = vunpack.c.l.b16 %v2584
    %v3131 = vunpack.c.h.b16 %v2584
    %v3132 = vunpack.c.l.b16 %v2585
    %v3133 = vunpack.c.l.b16 %v2586
    %v3134 = vunpack.c.h.b16 %v2586
    %v3135 = vunpack.c.l.b16 %v2587
    %v3136 = vunpack.c.l.b16 %v2588
    %v3137 = vunpack.c.h.b16 %v2588
    %v3138 = vunpack.c.l.b16 %v2589
    %v3139 = vunpack.c.l.b16 %v2590
    %v3140 = vunpack.c.h.b16 %v2590
    %v3141 = vunpack.c.l.b16 %v2591
    %v3142 = vunpack.c.l.b16 %v2592
    %v3143 = vunpack.c.h.b16 %v2592
    %v3144 = vunpack.c.l.b16 %v2593
    %v3145 = vunpack.c.l.b16 %v2594
    %v3146 = vunpack.c.h.b16 %v2594
    %v3147 = vunpack.c.l.b16 %v2595
    %v3148 = vunpack.c.l.b16 %v2596
    %v3149 = vunpack.c.h.b16 %v2596
    %v3150 = vunpack.c.l.b16 %v2597
    %v3151 = vunpack.c.l.b16 %v2598
    %v3152 = vunpack.c.h.b16 %v2598
    %v3153 = vunpack.c.l.b16 %v2599
    %v3154 = vunpack.c.l.b16 %v2600
    %v3155 = vunpack.c.h.b16 %v2600
    %v3156 = vunpack.c.l.b16 %v2601
    %v3157 = vunpack.c.l.b16 %v2602
    %v3158 = vunpack.c.h.b16 %v2602
    %v3159 = vunpack.c.l.b16 %v2603
    %v3160 = vunpack.c.l.b16 %v2604
    %v3161 = vunpack.c.h.b16 %v2604
    %v3162 = vunpack.c.l.b16 %v2605
    %v3163 = vunpack.c.l.b16 %v2606
    %v3164 = vunpack.c.h.b16 %v2606
    %v3165 = vunpack.c.l.b16 %v2607
    %v3166 = vunpack.c.l.b16 %v2608
    %v3167 = vunpack.c.h.b16 %v2608
    %v3168 = vunpack.c.l.b16 %v2609
    %v3169 = vunpack.c.l.b16 %v2610
    %v3170 = vunpack.c.h.b16 %v2610
    %v3171 = vunpack.c.l.b16 %v2611
    %v3172 = vunpack.c.l.b16 %v2612
    %v3173 = vunpack.c.h.b16 %v2612
    %v3174 = vunpack.c.l.b16 %v2613
    %v3175 = vunpack.c.l.b16 %v2614
    %v3176 = vunpack.c.h.b16 %v2614
    %v3177 = vunpack.c.l.b16 %v2615
    %v3178 = vunpack.c.l.b16 %v2616
    %v3179 = vunpack.c.h.b16 %v2616
    %v3180 = vunpack.c.l.b16 %v2617
    %v3181 = vunpack.c.l.b16 %v2618
    %v3182 = vunpack.c.h.b16 %v2618
    %v3183 = vunpack.c.l.b16 %v2619
    %v3184 = vunpack.c.l.b16 %v2620
    %v3185 = vunpack.c.h.b16 %v2620
    %v3186 = vunpack.c.l.b16 %v2621
    %v3187 = vunpack.c.l.b16 %v2622
    %v3188 = vunpack.c.h.b16 %v2622
    %v3189 = vunpack.c.l.b16 %v2623
    %v3190 = vunpack.c.l.b16 %v2624
    %v3191 = vunpack.c.h.b16 %v2624
    %v3192 = vunpack.c.l.b16 %v2625
    %v3193 = vunpack.c.l.b16 %v2626
    %v3194 = vunpack.c.h.b16 %v2626
    %v3195 = vunpack.c.l.b16 %v2627
    %v3196 = vunpack.c.l.b16 %v2628
    %v3197 = vunpack.c.h.b16 %v2628
    %v3198 = vunpack.c.l.b16 %v2629
    %v3199 = vunpack.c.l.b16 %v2630
    %v3200 = vunpack.c.h.b16 %v2630
    %v3201 = vunpack.c.l.b16 %v2631
    %v3202 = vunpack.c.l.b16 %v2632
    %v3203 = vunpack.c.h.b16 %v2632
    %v3204 = vunpack.c.l.b16 %v2633
    %v3205 = vunpack.c.l.b16 %v2634
    %v3206 = vunpack.c.h.b16 %v2634
    %v3207 = vunpack.c.l.b16 %v2635
    %v3208 = vunpack.c.l.b16 %v2636
    %v3209 = vunpack.c.h.b16 %v2636
    %v3210 = vunpack.c.l.b16 %v2637
    %v3211 = vunpack.c.l.b16 %v2638
    %v3212 = vunpack.c.h.b16 %v2638
    %v3213 = vunpack.c.l.b16 %v2639
    %v3214 = vunpack.c.l.b16 %v2640
    %v3215 = vunpack.c.h.b16 %v2640
    %v3216 = vunpack.c.l.b16 %v2641
    %v3217 = vunpack.c.l.b16 %v2642
    %v3218 = vunpack.c.h.b16 %v2642
    %v3219 = vunpack.c.l.b16 %v2643
    %v3220 = vunpack.c.l.b16 %v2644
    %v3221 = vunpack.c.h.b16 %v2644
    %v3222 = vunpack.c.l.b16 %v2645
    %v3223 = vunpack.c.l.b16 %v2646
    %v3224 = vunpack.c.h.b16 %v2646
    %v3225 = vunpack.c.l.b16 %v2647
    %v3226 = vunpack.c.l.b16 %v2648
    %v3227 = vunpack.c.h.b16 %v2648
    %v3228 = vunpack.c.l.b16 %v2649
    %v3229 = vunpack.c.l.b16 %v2650
    %v3230 = vunpack.c.h.b16 %v2650
    %v3231 = vunpack.c.l.b16 %v2651
    %v3232 = vunpack.c.l.b16 %v2652
    %v3233 = vunpack.c.h.b16 %v2652
    %v3234 = vunpack.c.l.b16 %v2653
    %v3235 = vunpack.c.l.b16 %v2654
    %v3236 = vunpack.c.h.b16 %v2654
    %v3237 = vunpack.c.l.b16 %v2655
    %v3238 = vunpack.c.l.b16 %v2656
    %v3239 = vunpack.c.h.b16 %v2656
    %v3240 = vunpack.c.l.b16 %v2657
    %v3241 = vunpack.c.l.b16 %v2658
    %v3242 = vunpack.c.h.b16 %v2658
    %v3243 = vunpack.c.l.b16 %v2659
    %v3244 = vunpack.c.l.b16 %v2660
    %v3245 = vunpack.c.h.b16 %v2660
    %v3246 = vunpack.c.l.b16 %v2661
    %v3247 = vunpack.c.l.b16 %v2662
    %v3248 = vunpack.c.h.b16 %v2662
    %v3249 = vunpack.c.l.b16 %v2663
    %v3250 = vunpack.c.l.b16 %v2664
    %v3251 = vunpack.c.h.b16 %v2664
    %v3252 = vunpack.c.l.b16 %v2665
    %v3253 = vunpack.c.l.b16 %v2666
    %v3254 = vunpack.c.h.b16 %v2666
    %v3255 = vunpack.c.l.b16 %v2667
    %v3256 = vunpack.c.l.b16 %v2668
    %v3257 = vunpack.c.h.b16 %v2668
    %v3258 = vunpack.c.l.b16 %v2669
    %v3259 = vunpack.c.l.b16 %v2670
    %v3260 = vunpack.c.h.b16 %v2670
    %v3261 = vunpack.c.l.b16 %v2671
    %v3262 = vunpack.c.l.b16 %v2672
    %v3263 = vunpack.c.h.b16 %v2672
    %v3264 = vunpack.c.l.b16 %v2673
    %v3265 = vunpack.c.l.b16 %v2674
    %v3266 = vunpack.c.h.b16 %v2674
    %v3267 = vunpack.c.l.b16 %v2675
    %v3268 = vunpack.c.l.b16 %v2676
    %v3269 = vunpack.c.h.b16 %v2676
    %v3270 = vunpack.c.l.b16 %v2677
    %v3271 = vunpack.c.l.b16 %v2678
    %v3272 = vunpack.c.h.b16 %v2678
    %v3273 = vunpack.c.l.b16 %v2679
    %v3274 = vunpack.c.l.b16 %v2680
    %v3275 = vunpack.c.h.b16 %v2680
    %v3276 = vunpack.c.l.b16 %v2681
    %v3277 = vunpack.c.l.b16 %v2682
    %v3278 = vunpack.c.h.b16 %v2682
    %v3279 = vunpack.c.l.b16 %v2683
    %v3280 = vunpack.c.l.b16 %v2684
    %v3281 = vunpack.c.h.b16 %v2684
    %v3282 = vunpack.c.l.b16 %v2685
    %v3283 = vunpack.c.l.b16 %v2686
    %v3284 = vunpack.c.h.b16 %v2686
    %v3285 = vunpack.c.l.b16 %v2687
    %v3286 = vunpack.c.l.b16 %v2688
    %v3287 = vunpack.c.h.b16 %v2688
    %v3288 = vunpack.c.l.b16 %v2689
    %v3289 = vunpack.c.l.b16 %v2690
    %v3290 = vunpack.c.h.b16 %v2690
    %v3291 = vunpack.c.l.b16 %v2691
    %v3292 = vunpack.c.l.b16 %v2692
    %v3293 = vunpack.c.h.b16 %v2692
    %v3294 = vunpack.c.l.b16 %v2693
    %v3295 = vunpack.c.l.b16 %v2694
    %v3296 = vunpack.c.h.b16 %v2694
    %v3297 = vunpack.c.l.b16 %v2695
    %v3298 = vunpack.c.l.b16 %v2696
    %v3299 = vunpack.c.h.b16 %v2696
    %v3300 = vunpack.c.l.b16 %v2697
    %v3301 = vunpack.c.l.b16 %v2698
    %v3302 = vunpack.c.h.b16 %v2698
    %v3303 = vunpack.c.l.b16 %v2699
    %v3304 = vunpack.c.l.b16 %v2700
    %v3305 = vunpack.c.h.b16 %v2700
    %v3306 = vunpack.c.l.b16 %v2701
    %v3307 = vunpack.c.l.b16 %v2702
    %v3308 = vunpack.c.h.b16 %v2702
    %v3309 = vunpack.c.l.b16 %v2703
    %v3310 = vunpack.c.l.b16 %v2704
    %v3311 = vunpack.c.h.b16 %v2704
    %v3312 = vunpack.c.l.b16 %v2705
    %v3313 = vunpack.c.l.b16 %v2706
    %v3314 = vunpack.c.h.b16 %v2706
    %v3315 = vunpack.c.l.b16 %v2707
    %v3316 = vunpack.c.l.b16 %v2708
    %v3317 = vunpack.c.h.b16 %v2708
    %v3318 = vunpack.c.l.b16 %v2709
    %v3319 = vunpack.c.l.b16 %v2710
    %v3320 = vunpack.c.h.b16 %v2710
    %v3321 = vunpack.c.l.b16 %v2711
    %v3322 = vunpack.c.l.b16 %v2712
    %v3323 = vunpack.c.h.b16 %v2712
    %v3324 = vunpack.c.l.b16 %v2713
    %v3325 = vunpack.c.l.b16 %v2714
    %v3326 = vunpack.c.h.b16 %v2714
    %v3327 = vunpack.c.l.b16 %v2715
    %v3328 = vunpack.c.l.b16 %v2716
    %v3329 = vunpack.c.h.b16 %v2716
    %v3330 = vunpack.c.l.b16 %v2717
    %v3331 = vunpack.c.l.b16 %v2718
    %v3332 = vunpack.c.h.b16 %v2718
    %v3333 = vunpack.c.l.b16 %v2719
    %v3334 = vunpack.c.l.b16 %v2720
    %v3335 = vunpack.c.h.b16 %v2720
    %v3336 = vunpack.c.l.b16 %v2721
    %v3337 = vunpack.c.l.b16 %v2722
    %v3338 = vunpack.c.h.b16 %v2722
    %v3339 = vunpack.c.l.b16 %v2723
    %v3340 = vunpack.c.l.b16 %v2724
    %v3341 = vunpack.c.h.b16 %v2724
    %v3342 = vunpack.c.l.b16 %v2725
    %v3343 = vunpack.c.l.b16 %v2726
    %v3344 = vunpack.c.h.b16 %v2726
    %v3345 = vunpack.c.l.b16 %v2727
    %v3346 = vunpack.c.l.b16 %v2728
    %v3347 = vunpack.c.h.b16 %v2728
    %v3348 = vunpack.c.l.b16 %v2729
    %v3349 = vunpack.c.l.b16 %v2730
    %v3350 = vunpack.c.h.b16 %v2730
    %v3351 = vunpack.c.l.b16 %v2731
    %v3352 = vunpack.c.l.b16 %v2732
    %v3353 = vunpack.c.h.b16 %v2732
    %v3354 = vunpack.c.l.b16 %v2733
    %v3355 = vunpack.c.l.b16 %v2734
    %v3356 = vunpack.c.h.b16 %v2734
    %v3357 = vunpack.c.l.b16 %v2735
    %v3358 = vunpack.c.l.b16 %v2736
    %v3359 = vunpack.c.h.b16 %v2736
    %v3360 = vunpack.c.l.b16 %v2737
    %v3361 = vunpack.c.l.b16 %v2738
    %v3362 = vunpack.c.h.b16 %v2738
    %v3363 = vunpack.c.l.b16 %v2739
    %v3364 = vunpack.c.l.b16 %v2740
    %v3365 = vunpack.c.h.b16 %v2740
    %v3366 = vunpack.c.l.b16 %v2741
    %v3367 = vunpack.c.l.b16 %v2742
    %v3368 = vunpack.c.h.b16 %v2742
    %v3369 = vunpack.c.l.b16 %v2743
    %v3370 = vunpack.c.l.b16 %v2744
    %v3371 = vunpack.c.h.b16 %v2744
    %v3372 = vunpack.c.l.b16 %v2745
    %v3373 = vunpack.c.l.b16 %v2746
    %v3374 = vunpack.c.h.b16 %v2746
    %v3375 = vunpack.c.l.b16 %v2747
    %v3376 = vunpack.c.l.b16 %v2748
    %v3377 = vunpack.c.h.b16 %v2748
    %v3378 = vunpack.c.l.b16 %v2749
    %v3379 = vunpack.c.l.b16 %v2750
    %v3380 = vunpack.c.h.b16 %v2750
    %v3381 = vunpack.c.l.b16 %v2751
    %v3382 = vunpack.c.l.b16 %v2752
    %v3383 = vunpack.c.h.b16 %v2752
    %v3384 = vunpack.c.l.b16 %v2753
    %v3385 = vunpack.c.l.b16 %v2754
    %v3386 = vunpack.c.h.b16 %v2754
    %v3387 = vunpack.c.l.b16 %v2755
    %v3388 = vunpack.c.l.b16 %v2756
    %v3389 = vunpack.c.h.b16 %v2756
    %v3390 = vunpack.c.l.b16 %v2757
    %v3391 = vunpack.c.l.b16 %v2758
    %v3392 = vunpack.c.h.b16 %v2758
    %v3393 = vunpack.c.l.b16 %v2759
    %v3394 = vunpack.c.l.b16 %v2760
    %v3395 = vunpack.c.h.b16 %v2760
    %v3396 = vunpack.c.l.b16 %v2761
    %v3397 = vunpack.c.l.b16 %v2762
    %v3398 = vunpack.c.h.b16 %v2762
    %v3399 = vunpack.c.l.b16 %v2763
    %v3400 = vunpack.c.l.b16 %v2764
    %v3401 = vunpack.c.h.b16 %v2764
    %v3402 = vunpack.c.l.b16 %v2765
    %v3403 = vunpack.c.l.b16 %v2766
    %v3404 = vunpack.c.h.b16 %v2766
    %v3405 = vunpack.c.l.b16 %v2767
    %v3406 = vunpack.c.l.b16 %v2768
    %v3407 = vunpack.c.h.b16 %v2768
    %v3408 = vunpack.c.l.b16 %v2769
    %v3409 = vunpack.c.l.b16 %v2770
    %v3410 = vunpack.c.h.b16 %v2770
    %v3411 = vunpack.c.l.b16 %v2771
    %v3412 = vunpack.c.l.b16 %v2772
    %v3413 = vunpack.c.h.b16 %v2772
    %v3414 = vunpack.c.l.b16 %v2773
    %v3415 = vunpack.c.l.b16 %v2774
    %v3416 = vunpack.c.h.b16 %v2774
    %v3417 = vunpack.c.l.b16 %v2775
    %v3418 = vunpack.c.l.b16 %v2776
    %v3419 = vunpack.c.h.b16 %v2776
    %v3420 = vunpack.c.l.b16 %v2777
    %v3421 = vunpack.c.l.b16 %v2778
    %v3422 = vunpack.c.h.b16 %v2778
    %v3423 = vunpack.c.l.b16 %v2779
    %v3424 = vunpack.c.l.b16 %v2780
    %v3425 = vunpack.c.h.b16 %v2780
    %v3426 = vunpack.c.l.b16 %v2781
    %v3427 = vunpack.c.l.b16 %v2782
    %v3428 = vunpack.c.h.b16 %v2782
    %v3429 = vunpack.c.l.b16 %v2783
    %v3430 = vunpack.c.l.b16 %v2784
    %v3431 = vunpack.c.h.b16 %v2784
    %v3432 = vunpack.c.l.b16 %v2785
    %v3433 = vunpack.c.l.b16 %v2786
    %v3434 = vunpack.c.h.b16 %v2786
    %v3435 = vunpack.c.l.b16 %v2787
    %v3436 = vpack.c.b16 %v3055, %v3052
    %v3437 = vpack.c.b16 %v3056, %v3053
    %v3438 = vpack.c.b16 %v3057, %v3054
    %v3439 = vpack.c.b16 %v3061, %v3058
    %v3440 = vpack.c.b16 %v3062, %v3059
    %v3441 = vpack.c.b16 %v3063, %v3060
    %v3442 = vpack.c.b16 %v3067, %v3064
    %v3443 = vpack.c.b16 %v3068, %v3065
    %v3444 = vpack.c.b16 %v3069, %v3066
    %v3445 = vpack.c.b16 %v3073, %v3070
    %v3446 = vpack.c.b16 %v3074, %v3071
    %v3447 = vpack.c.b16 %v3075, %v3072
    %v3448 = vpack.c.b16 %v3079, %v3076
    %v3449 = vpack.c.b16 %v3080, %v3077
    %v3450 = vpack.c.b16 %v3081, %v3078
    %v3451 = vpack.c.b16 %v3085, %v3082
    %v3452 = vpack.c.b16 %v3086, %v3083
    %v3453 = vpack.c.b16 %v3087, %v3084
    %v3454 = vpack.c.b16 %v3091, %v3088
    %v3455 = vpack.c.b16 %v3092, %v3089
    %v3456 = vpack.c.b16 %v3093, %v3090
    %v3457 = vpack.c.b16 %v3097, %v3094
    %v3458 = vpack.c.b16 %v3098, %v3095
    %v3459 = vpack.c.b16 %v3099, %v3096
    %v3460 = vpack.c.b16 %v3103, %v3100
    %v3461 = vpack.c.b16 %v3104, %v3101
    %v3462 = vpack.c.b16 %v3105, %v3102
    %v3463 = vpack.c.b16 %v3109, %v3106
    %v3464 = vpack.c.b16 %v3110, %v3107
    %v3465 = vpack.c.b16 %v3111, %v3108
    %v3466 = vpack.c.b16 %v3115, %v3112
    %v3467 = vpack.c.b16 %v3116, %v3113
    %v3468 = vpack.c.b16 %v3117, %v3114
    %v3469 = vpack.c.b16 %v3121, %v3118
    %v3470 = vpack.c.b16 %v3122, %v3119
    %v3471 = vpack.c.b16 %v3123, %v3120
    %v3472 = vpack.c.b16 %v3127, %v3124
    %v3473 = vpack.c.b16 %v3128, %v3125
    %v3474 = vpack.c.b16 %v3129, %v3126
    %v3475 = vpack.c.b16 %v3133, %v3130
    %v3476 = vpack.c.b16 %v3134, %v3131
    %v3477 = vpack.c.b16 %v3135, %v3132
    %v3478 = vpack.c.b16 %v3139, %v3136
    %v3479 = vpack.c.b16 %v3140, %v3137
    %v3480 = vpack.c.b16 %v3141, %v3138
    %v3481 = vpack.c.b16 %v3145, %v3142
    %v3482 = vpack.c.b16 %v3146, %v3143
    %v3483 = vpack.c.b16 %v3147, %v3144
    %v3484 = vpack.c.b16 %v3151, %v3148
    %v3485 = vpack.c.b16 %v3152, %v3149
    %v3486 = vpack.c.b16 %v3153, %v3150
    %v3487 = vpack.c.b16 %v3157, %v3154
    %v3488 = vpack.c.b16 %v3158, %v3155
    %v3489 = vpack.c.b16 %v3159, %v3156
    %v3490 = vpack.c.b16 %v3163, %v3160
    %v3491 = vpack.c.b16 %v3164, %v3161
    %v3492 = vpack.c.b16 %v3165, %v3162
    %v3493 = vpack.c.b16 %v3169, %v3166
    %v3494 = vpack.c.b16 %v3170, %v3167
    %v3495 = vpack.c.b16 %v3171, %v3168
    %v3496 = vpack.c.b16 %v3175, %v3172
    %v3497 = vpack.c.b16 %v3176, %v3173
    %v3498 = vpack.c.b16 %v3177, %v3174
    %v3499 = vpack.c.b16 %v3181, %v3178
    %v3500 = vpack.c.b16 %v3182, %v3179
    %v3501 = vpack.c.b16 %v3183, %v3180
    %v3502 = vpack.c.b16 %v3187, %v3184
    %v3503 = vpack.c.b16 %v3188, %v3185
    %v3504 = vpack.c.b16 %v3189, %v3186
    %v3505 = vpack.c.b16 %v3193, %v3190
    %v3506 = vpack.c.b16 %v3194, %v3191
    %v3507 = vpack.c.b16 %v3195, %v3192
    %v3508 = vpack.c.b16 %v3199, %v3196
    %v3509 = vpack.c.b16 %v3200, %v3197
    %v3510 = vpack.c.b16 %v3201, %v3198
    %v3511 = vpack.c.b16 %v3205, %v3202
    %v3512 = vpack.c.b16 %v3206, %v3203
    %v3513 = vpack.c.b16 %v3207, %v3204
    %v3514 = vpack.c.b16 %v3211, %v3208
    %v3515 = vpack.c.b16 %v3212, %v3209
    %v3516 = vpack.c.b16 %v3213, %v3210
    %v3517 = vpack.c.b16 %v3217, %v3214
    %v3518 = vpack.c.b16 %v3218, %v3215
    %v3519 = vpack.c.b16 %v3219, %v3216
    %v3520 = vpack.c.b16 %v3223, %v3220
    %v3521 = vpack.c.b16 %v3224, %v3221
    %v3522 = vpack.c.b16 %v3225, %v3222
    %v3523 = vpack.c.b16 %v3229, %v3226
    %v3524 = vpack.c.b16 %v3230, %v3227
    %v3525 = vpack.c.b16 %v3231, %v3228
    %v3526 = vpack.c.b16 %v3235, %v3232
    %v3527 = vpack.c.b16 %v3236, %v3233
    %v3528 = vpack.c.b16 %v3237, %v3234
    %v3529 = vpack.c.b16 %v3241, %v3238
    %v3530 = vpack.c.b16 %v3242, %v3239
    %v3531 = vpack.c.b16 %v3243, %v3240
    %v3532 = vpack.c.b16 %v3247, %v3244
    %v3533 = vpack.c.b16 %v3248, %v3245
    %v3534 = vpack.c.b16 %v3249, %v3246
    %v3535 = vpack.c.b16 %v3253, %v3250
    %v3536 = vpack.c.b16 %v3254, %v3251
    %v3537 = vpack.c.b16 %v3255, %v3252
    %v3538 = vpack.c.b16 %v3259, %v3256
    %v3539 = vpack.c.b16 %v3260, %v3257
    %v3540 = vpack.c.b16 %v3261, %v3258
    %v3541 = vpack.c.b16 %v3265, %v3262
    %v3542 = vpack.c.b16 %v3266, %v3263
    %v3543 = vpack.c.b16 %v3267, %v3264
    %v3544 = vpack.c.b16 %v3271, %v3268
    %v3545 = vpack.c.b16 %v3272, %v3269
    %v3546 = vpack.c.b16 %v3273, %v3270
    %v3547 = vpack.c.b16 %v3277, %v3274
    %v3548 = vpack.c.b16 %v3278, %v3275
    %v3549 = vpack.c.b16 %v3279, %v3276
    %v3550 = vpack.c.b16 %v3283, %v3280
    %v3551 = vpack.c.b16 %v3284, %v3281
    %v3552 = vpack.c.b16 %v3285, %v3282
    %v3553 = vpack.c.b16 %v3289, %v3286
    %v3554 = vpack.c.b16 %v3290, %v3287
    %v3555 = vpack.c.b16 %v3291, %v3288
    %v3556 = vpack.c.b16 %v3295, %v3292
    %v3557 = vpack.c.b16 %v3296, %v3293
    %v3558 = vpack.c.b16 %v3297, %v3294
    %v3559 = vpack.c.b16 %v3301, %v3298
    %v3560 = vpack.c.b16 %v3302, %v3299
    %v3561 = vpack.c.b16 %v3303, %v3300
    %v3562 = vpack.c.b16 %v3307, %v3304
    %v3563 = vpack.c.b16 %v3308, %v3305
    %v3564 = vpack.c.b16 %v3309, %v3306
    %v3565 = vpack.c.b16 %v3313, %v3310
    %v3566 = vpack.c.b16 %v3314, %v3311
    %v3567 = vpack.c.b16 %v3315, %v3312
    %v3568 = vpack.c.b16 %v3319, %v3316
    %v3569 = vpack.c.b16 %v3320, %v3317
    %v3570 = vpack.c.b16 %v3321, %v3318
    %v3571 = vpack.c.b16 %v3325, %v3322
    %v3572 = vpack.c.b16 %v3326, %v3323
    %v3573 = vpack.c.b16 %v3327, %v3324
    %v3574 = vpack.c.b16 %v3331, %v3328
    %v3575 = vpack.c.b16 %v3332, %v3329
    %v3576 = vpack.c.b16 %v3333, %v3330
    %v3577 = vpack.c.b16 %v3337, %v3334
    %v3578 = vpack.c.b16 %v3338, %v3335
    %v3579 = vpack.c.b16 %v3339, %v3336
    %v3580 = vpack.c.b16 %v3343, %v3340
    %v3581 = vpack.c.b16 %v3344, %v3341
    %v3582 = vpack.c.b16 %v3345, %v3342
    %v3583 = vpack.c.b16 %v3349, %v3346
    %v3584 = vpack.c.b16 %v3350, %v3347
    %v3585 = vpack.c.b16 %v3351, %v3348
    %v3586 = vpack.c.b16 %v3355, %v3352
    %v3587 = vpack.c.b16 %v3356, %v3353
    %v3588 = vpack.c.b16 %v3357, %v3354
    %v3589 = vpack.c.b16 %v3361, %v3358
    %v3590 = vpack.c.b16 %v3362, %v3359
    %v3591 = vpack.c.b16 %v3363, %v3360
    %v3592 = vpack.c.b16 %v3367, %v3364
    %v3593 = vpack.c.b16 %v3368, %v3365
    %v3594 = vpack.c.b16 %v3369, %v3366
    %v3595 = vpack.c.b16 %v3373, %v3370
    %v3596 = vpack.c.b16 %v3374, %v3371
    %v3597 = vpack.c.b16 %v3375, %v3372
    %v3598 = vpack.c.b16 %v3379, %v3376
    %v3599 = vpack.c.b16 %v3380, %v3377
    %v3600 = vpack.c.b16 %v3381, %v3378
    %v3601 = vpack.c.b16 %v3385, %v3382
    %v3602 = vpack.c.b16 %v3386, %v3383
    %v3603 = vpack.c.b16 %v3387, %v3384
    %v3604 = vpack.c.b16 %v3391, %v3388
    %v3605 = vpack.c.b16 %v3392, %v3389
    %v3606 = vpack.c.b16 %v3393, %v3390
    %v3607 = vpack.c.b16 %v3397, %v3394
    %v3608 = vpack.c.b16 %v3398, %v3395
    %v3609 = vpack.c.b16 %v3399, %v3396
    %v3610 = vpack.c.b16 %v3403, %v3400
    %v3611 = vpack.c.b16 %v3404, %v3401
    %v3612 = vpack.c.b16 %v3405, %v3402
    %v3613 = vpack.c.b16 %v3409, %v3406
    %v3614 = vpack.c.b16 %v3410, %v3407
    %v3615 = vpack.c.b16 %v3411, %v3408
    %v3616 = vpack.c.b16 %v3415, %v3412
    %v3617 = vpack.c.b16 %v3416, %v3413
    %v3618 = vpack.c.b16 %v3417, %v3414
    %v3619 = vpack.c.b16 %v3421, %v3418
    %v3620 = vpack.c.b16 %v3422, %v3419
    %v3621 = vpack.c.b16 %v3423, %v3420
    %v3622 = vpack.c.b16 %v3427, %v3424
    %v3623 = vpack.c.b16 %v3428, %v3425
    %v3624 = vpack.c.b16 %v3429, %v3426
    %v3625 = vpack.c.b16 %v3433, %v3430
    %v3626 = vpack.c.b16 %v3434, %v3431
    %v3627 = vpack.c.b16 %v3435, %v3432
    %3820 = vmatpush.bf16.msra.mxu0 %v3457
    %3821 = vmatpush.bf16.msra.mxu0 %v3454
    %3822 = vmatpush.bf16.msra.mxu0 %v3451
    %3823 = vmatpush.bf16.msra.mxu0 %v3448
    %3824 = vmatpush.bf16.msra.mxu0 %v3445
    %3825 = vmatpush.bf16.msra.mxu0 %v3442
    %3826 = vmatpush.bf16.msra.mxu0 %v3439
    %3827 = vmatpush.bf16.msra.mxu0 %v3436
    %3828 = vmatmul.bf16.gmra.mxu0 %v2524
    %v3829 = vpop.f32.mrf.mxu0
    %v3830 = vadd.f32 %v2790, %v3829
    %v3831 = vpop.f32.mrf.mxu0
    %v3832 = vadd.f32 %v2790, %v3831
    %3833 = vdwg.mxu0
    %3834 = vmatpush.bf16.msra.mxu0 %v3481
    %3835 = vmatpush.bf16.msra.mxu0 %v3478
    %3836 = vmatpush.bf16.msra.mxu0 %v3475
    %3837 = vmatpush.bf16.msra.mxu0 %v3472
    %3838 = vmatpush.bf16.msra.mxu0 %v3469
    %3839 = vmatpush.bf16.msra.mxu0 %v3466
    %3840 = vmatpush.bf16.msra.mxu0 %v3463
    %3841 = vmatpush.bf16.msra.mxu0 %v3460
    %3842 = vmatmul.bf16.gmra.mxu0 %v2525
    %v3843 = vpop.f32.mrf.mxu0
    %v3844 = vadd.f32 %v3830, %v3843
    %v3845 = vpop.f32.mrf.mxu0
    %v3846 = vadd.f32 %v3832, %v3845
    %3847 = vdwg.mxu0
    %3848 = vmatpush.bf16.msra.mxu0 %v3505
    %3849 = vmatpush.bf16.msra.mxu0 %v3502
    %3850 = vmatpush.bf16.msra.mxu0 %v3499
    %3851 = vmatpush.bf16.msra.mxu0 %v3496
    %3852 = vmatpush.bf16.msra.mxu0 %v3493
    %3853 = vmatpush.bf16.msra.mxu0 %v3490
    %3854 = vmatpush.bf16.msra.mxu0 %v3487
    %3855 = vmatpush.bf16.msra.mxu0 %v3484
    %3856 = vmatmul.bf16.gmra.mxu0 %v2526
    %v3857 = vpop.f32.mrf.mxu0
    %v3858 = vadd.f32 %v3844, %v3857
    %v3859 = vpop.f32.mrf.mxu0
    %v3860 = vadd.f32 %v3846, %v3859
    %3861 = vdwg.mxu0
    %3862 = vmatpush.bf16.msra.mxu0 %v3529
    %3863 = vmatpush.bf16.msra.mxu0 %v3526
    %3864 = vmatpush.bf16.msra.mxu0 %v3523
    %3865 = vmatpush.bf16.msra.mxu0 %v3520
    %3866 = vmatpush.bf16.msra.mxu0 %v3517
    %3867 = vmatpush.bf16.msra.mxu0 %v3514
    %3868 = vmatpush.bf16.msra.mxu0 %v3511
    %3869 = vmatpush.bf16.msra.mxu0 %v3508
    %3870 = vmatmul.bf16.gmra.mxu0 %v2527
    %v3871 = vpop.f32.mrf.mxu0
    %v3872 = vadd.f32 %v3858, %v3871
    %v3873 = vpop.f32.mrf.mxu0
    %v3874 = vadd.f32 %v3860, %v3873
    %3875 = vdwg.mxu0
    %3876 = vmatpush.bf16.msra.mxu0 %v3553
    %3877 = vmatpush.bf16.msra.mxu0 %v3550
    %3878 = vmatpush.bf16.msra.mxu0 %v3547
    %3879 = vmatpush.bf16.msra.mxu0 %v3544
    %3880 = vmatpush.bf16.msra.mxu0 %v3541
    %3881 = vmatpush.bf16.msra.mxu0 %v3538
    %3882 = vmatpush.bf16.msra.mxu0 %v3535
    %3883 = vmatpush.bf16.msra.mxu0 %v3532
    %3884 = vmatmul.bf16.gmra.mxu0 %v2528
    %v3885 = vpop.f32.mrf.mxu0
    %v3886 = vadd.f32 %v3872, %v3885
    %v3887 = vpop.f32.mrf.mxu0
    %v3888 = vadd.f32 %v3874, %v3887
    %3889 = vdwg.mxu0
    %3890 = vmatpush.bf16.msra.mxu0 %v3577
    %3891 = vmatpush.bf16.msra.mxu0 %v3574
    %3892 = vmatpush.bf16.msra.mxu0 %v3571
    %3893 = vmatpush.bf16.msra.mxu0 %v3568
    %3894 = vmatpush.bf16.msra.mxu0 %v3565
    %3895 = vmatpush.bf16.msra.mxu0 %v3562
    %3896 = vmatpush.bf16.msra.mxu0 %v3559
    %3897 = vmatpush.bf16.msra.mxu0 %v3556
    %3898 = vmatmul.bf16.gmra.mxu0 %v2529
    %v3899 = vpop.f32.mrf.mxu0
    %v3900 = vadd.f32 %v3886, %v3899
    %v3901 = vpop.f32.mrf.mxu0
    %v3902 = vadd.f32 %v3888, %v3901
    %3903 = vdwg.mxu0
    %3904 = vmatpush.bf16.msra.mxu0 %v3601
    %3905 = vmatpush.bf16.msra.mxu0 %v3598
    %3906 = vmatpush.bf16.msra.mxu0 %v3595
    %3907 = vmatpush.bf16.msra.mxu0 %v3592
    %3908 = vmatpush.bf16.msra.mxu0 %v3589
    %3909 = vmatpush.bf16.msra.mxu0 %v3586
    %3910 = vmatpush.bf16.msra.mxu0 %v3583
    %3911 = vmatpush.bf16.msra.mxu0 %v3580
    %3912 = vmatmul.bf16.gmra.mxu0 %v2530
    %v3913 = vpop.f32.mrf.mxu0
    %v3914 = vadd.f32 %v3900, %v3913
    %v3915 = vpop.f32.mrf.mxu0
    %v3916 = vadd.f32 %v3902, %v3915
    %3917 = vdwg.mxu0
    %3918 = vmatpush.bf16.msra.mxu0 %v3625
    %3919 = vmatpush.bf16.msra.mxu0 %v3622
    %3920 = vmatpush.bf16.msra.mxu0 %v3619
    %3921 = vmatpush.bf16.msra.mxu0 %v3616
    %3922 = vmatpush.bf16.msra.mxu0 %v3613
    %3923 = vmatpush.bf16.msra.mxu0 %v3610
    %3924 = vmatpush.bf16.msra.mxu0 %v3607
    %3925 = vmatpush.bf16.msra.mxu0 %v3604
    %3926 = vmatmul.bf16.gmra.mxu0 %v2531
    %v3927 = vpop.f32.mrf.mxu0
    %v3928 = vadd.f32 %v3914, %v3927
    %v3929 = vpop.f32.mrf.mxu0
    %v3930 = vadd.f32 %v3916, %v3929
    %3931 = vdwg.mxu0
    %3932 = vmatpush.bf16.msra.mxu0 %v3458
    %3933 = vmatpush.bf16.msra.mxu0 %v3455
    %3934 = vmatpush.bf16.msra.mxu0 %v3452
    %3935 = vmatpush.bf16.msra.mxu0 %v3449
    %3936 = vmatpush.bf16.msra.mxu0 %v3446
    %3937 = vmatpush.bf16.msra.mxu0 %v3443
    %3938 = vmatpush.bf16.msra.mxu0 %v3440
    %3939 = vmatpush.bf16.msra.mxu0 %v3437
    %3940 = vmatmul.bf16.gmra.mxu0 %v2524
    %v3941 = vpop.f32.mrf.mxu0
    %v3942 = vadd.f32 %v2791, %v3941
    %v3943 = vpop.f32.mrf.mxu0
    %v3944 = vadd.f32 %v2791, %v3943
    %3945 = vdwg.mxu0
    %3946 = vmatpush.bf16.msra.mxu0 %v3482
    %3947 = vmatpush.bf16.msra.mxu0 %v3479
    %3948 = vmatpush.bf16.msra.mxu0 %v3476
    %3949 = vmatpush.bf16.msra.mxu0 %v3473
    %3950 = vmatpush.bf16.msra.mxu0 %v3470
    %3951 = vmatpush.bf16.msra.mxu0 %v3467
    %3952 = vmatpush.bf16.msra.mxu0 %v3464
    %3953 = vmatpush.bf16.msra.mxu0 %v3461
    %3954 = vmatmul.bf16.gmra.mxu0 %v2525
    %v3955 = vpop.f32.mrf.mxu0
    %v3956 = vadd.f32 %v3942, %v3955
    %v3957 = vpop.f32.mrf.mxu0
    %v3958 = vadd.f32 %v3944, %v3957
    %3959 = vdwg.mxu0
    %3960 = vmatpush.bf16.msra.mxu0 %v3506
    %3961 = vmatpush.bf16.msra.mxu0 %v3503
    %3962 = vmatpush.bf16.msra.mxu0 %v3500
    %3963 = vmatpush.bf16.msra.mxu0 %v3497
    %3964 = vmatpush.bf16.msra.mxu0 %v3494
    %3965 = vmatpush.bf16.msra.mxu0 %v3491
    %3966 = vmatpush.bf16.msra.mxu0 %v3488
    %3967 = vmatpush.bf16.msra.mxu0 %v3485
    %3968 = vmatmul.bf16.gmra.mxu0 %v2526
    %v3969 = vpop.f32.mrf.mxu0
    %v3970 = vadd.f32 %v3956, %v3969
    %v3971 = vpop.f32.mrf.mxu0
    %v3972 = vadd.f32 %v3958, %v3971
    %3973 = vdwg.mxu0
    %3974 = vmatpush.bf16.msra.mxu0 %v3530
    %3975 = vmatpush.bf16.msra.mxu0 %v3527
    %3976 = vmatpush.bf16.msra.mxu0 %v3524
    %3977 = vmatpush.bf16.msra.mxu0 %v3521
    %3978 = vmatpush.bf16.msra.mxu0 %v3518
    %3979 = vmatpush.bf16.msra.mxu0 %v3515
    %3980 = vmatpush.bf16.msra.mxu0 %v3512
    %3981 = vmatpush.bf16.msra.mxu0 %v3509
    %3982 = vmatmul.bf16.gmra.mxu0 %v2527
    %v3983 = vpop.f32.mrf.mxu0
    %v3984 = vadd.f32 %v3970, %v3983
    %v3985 = vpop.f32.mrf.mxu0
    %v3986 = vadd.f32 %v3972, %v3985
    %3987 = vdwg.mxu0
    %3988 = vmatpush.bf16.msra.mxu0 %v3554
    %3989 = vmatpush.bf16.msra.mxu0 %v3551
    %3990 = vmatpush.bf16.msra.mxu0 %v3548
    %3991 = vmatpush.bf16.msra.mxu0 %v3545
    %3992 = vmatpush.bf16.msra.mxu0 %v3542
    %3993 = vmatpush.bf16.msra.mxu0 %v3539
    %3994 = vmatpush.bf16.msra.mxu0 %v3536
    %3995 = vmatpush.bf16.msra.mxu0 %v3533
    %3996 = vmatmul.bf16.gmra.mxu0 %v2528
    %v3997 = vpop.f32.mrf.mxu0
    %v3998 = vadd.f32 %v3984, %v3997
    %v3999 = vpop.f32.mrf.mxu0
    %v4000 = vadd.f32 %v3986, %v3999
    %4001 = vdwg.mxu0
    %4002 = vmatpush.bf16.msra.mxu0 %v3578
    %4003 = vmatpush.bf16.msra.mxu0 %v3575
    %4004 = vmatpush.bf16.msra.mxu0 %v3572
    %4005 = vmatpush.bf16.msra.mxu0 %v3569
    %4006 = vmatpush.bf16.msra.mxu0 %v3566
    %4007 = vmatpush.bf16.msra.mxu0 %v3563
    %4008 = vmatpush.bf16.msra.mxu0 %v3560
    %4009 = vmatpush.bf16.msra.mxu0 %v3557
    %4010 = vmatmul.bf16.gmra.mxu0 %v2529
    %v4011 = vpop.f32.mrf.mxu0
    %v4012 = vadd.f32 %v3998, %v4011
    %v4013 = vpop.f32.mrf.mxu0
    %v4014 = vadd.f32 %v4000, %v4013
    %4015 = vdwg.mxu0
    %4016 = vmatpush.bf16.msra.mxu0 %v3602
    %4017 = vmatpush.bf16.msra.mxu0 %v3599
    %4018 = vmatpush.bf16.msra.mxu0 %v3596
    %4019 = vmatpush.bf16.msra.mxu0 %v3593
    %4020 = vmatpush.bf16.msra.mxu0 %v3590
    %4021 = vmatpush.bf16.msra.mxu0 %v3587
    %4022 = vmatpush.bf16.msra.mxu0 %v3584
    %4023 = vmatpush.bf16.msra.mxu0 %v3581
    %4024 = vmatmul.bf16.gmra.mxu0 %v2530
    %v4025 = vpop.f32.mrf.mxu0
    %v4026 = vadd.f32 %v4012, %v4025
    %v4027 = vpop.f32.mrf.mxu0
    %v4028 = vadd.f32 %v4014, %v4027
    %4029 = vdwg.mxu0
    %4030 = vmatpush.bf16.msra.mxu0 %v3626
    %4031 = vmatpush.bf16.msra.mxu0 %v3623
    %4032 = vmatpush.bf16.msra.mxu0 %v3620
    %4033 = vmatpush.bf16.msra.mxu0 %v3617
    %4034 = vmatpush.bf16.msra.mxu0 %v3614
    %4035 = vmatpush.bf16.msra.mxu0 %v3611
    %4036 = vmatpush.bf16.msra.mxu0 %v3608
    %4037 = vmatpush.bf16.msra.mxu0 %v3605
    %4038 = vmatmul.bf16.gmra.mxu0 %v2531
    %v4039 = vpop.f32.mrf.mxu0
    %v4040 = vadd.f32 %v4026, %v4039
    %v4041 = vpop.f32.mrf.mxu0
    %v4042 = vadd.f32 %v4028, %v4041
    %4043 = vdwg.mxu0
    %4044 = vmatpush.bf16.msra.mxu0 %v3459
    %4045 = vmatpush.bf16.msra.mxu0 %v3456
    %4046 = vmatpush.bf16.msra.mxu0 %v3453
    %4047 = vmatpush.bf16.msra.mxu0 %v3450
    %4048 = vmatpush.bf16.msra.mxu0 %v3447
    %4049 = vmatpush.bf16.msra.mxu0 %v3444
    %4050 = vmatpush.bf16.msra.mxu0 %v3441
    %4051 = vmatpush.bf16.msra.mxu0 %v3438
    %4052 = vmatmul.bf16.gmra.mxu0 %v2524
    %v4053 = vpop.f32.mrf.mxu0
    %v4054 = vadd.f32 %v2792, %v4053
    %v4055 = vpop.f32.mrf.mxu0
    %v4056 = vadd.f32 %v2792, %v4055
    %4057 = vdwg.mxu0
    %4058 = vmatpush.bf16.msra.mxu0 %v3483
    %4059 = vmatpush.bf16.msra.mxu0 %v3480
    %4060 = vmatpush.bf16.msra.mxu0 %v3477
    %4061 = vmatpush.bf16.msra.mxu0 %v3474
    %4062 = vmatpush.bf16.msra.mxu0 %v3471
    %4063 = vmatpush.bf16.msra.mxu0 %v3468
    %4064 = vmatpush.bf16.msra.mxu0 %v3465
    %4065 = vmatpush.bf16.msra.mxu0 %v3462
    %4066 = vmatmul.bf16.gmra.mxu0 %v2525
    %v4067 = vpop.f32.mrf.mxu0
    %v4068 = vadd.f32 %v4054, %v4067
    %v4069 = vpop.f32.mrf.mxu0
    %v4070 = vadd.f32 %v4056, %v4069
    %4071 = vdwg.mxu0
    %4072 = vmatpush.bf16.msra.mxu0 %v3507
    %4073 = vmatpush.bf16.msra.mxu0 %v3504
    %4074 = vmatpush.bf16.msra.mxu0 %v3501
    %4075 = vmatpush.bf16.msra.mxu0 %v3498
    %4076 = vmatpush.bf16.msra.mxu0 %v3495
    %4077 = vmatpush.bf16.msra.mxu0 %v3492
    %4078 = vmatpush.bf16.msra.mxu0 %v3489
    %4079 = vmatpush.bf16.msra.mxu0 %v3486
    %4080 = vmatmul.bf16.gmra.mxu0 %v2526
    %v4081 = vpop.f32.mrf.mxu0
    %v4082 = vadd.f32 %v4068, %v4081
    %v4083 = vpop.f32.mrf.mxu0
    %v4084 = vadd.f32 %v4070, %v4083
    %4085 = vdwg.mxu0
    %4086 = vmatpush.bf16.msra.mxu0 %v3531
    %4087 = vmatpush.bf16.msra.mxu0 %v3528
    %4088 = vmatpush.bf16.msra.mxu0 %v3525
    %4089 = vmatpush.bf16.msra.mxu0 %v3522
    %4090 = vmatpush.bf16.msra.mxu0 %v3519
    %4091 = vmatpush.bf16.msra.mxu0 %v3516
    %4092 = vmatpush.bf16.msra.mxu0 %v3513
    %4093 = vmatpush.bf16.msra.mxu0 %v3510
    %4094 = vmatmul.bf16.gmra.mxu0 %v2527
    %v4095 = vpop.f32.mrf.mxu0
    %v4096 = vadd.f32 %v4082, %v4095
    %v4097 = vpop.f32.mrf.mxu0
    %v4098 = vadd.f32 %v4084, %v4097
    %4099 = vdwg.mxu0
    %4100 = vmatpush.bf16.msra.mxu0 %v3555
    %4101 = vmatpush.bf16.msra.mxu0 %v3552
    %4102 = vmatpush.bf16.msra.mxu0 %v3549
    %4103 = vmatpush.bf16.msra.mxu0 %v3546
    %4104 = vmatpush.bf16.msra.mxu0 %v3543
    %4105 = vmatpush.bf16.msra.mxu0 %v3540
    %4106 = vmatpush.bf16.msra.mxu0 %v3537
    %4107 = vmatpush.bf16.msra.mxu0 %v3534
    %4108 = vmatmul.bf16.gmra.mxu0 %v2528
    %v4109 = vpop.f32.mrf.mxu0
    %v4110 = vadd.f32 %v4096, %v4109
    %v4111 = vpop.f32.mrf.mxu0
    %v4112 = vadd.f32 %v4098, %v4111
    %4113 = vdwg.mxu0
    %4114 = vmatpush.bf16.msra.mxu0 %v3579
    %4115 = vmatpush.bf16.msra.mxu0 %v3576
    %4116 = vmatpush.bf16.msra.mxu0 %v3573
    %4117 = vmatpush.bf16.msra.mxu0 %v3570
    %4118 = vmatpush.bf16.msra.mxu0 %v3567
    %4119 = vmatpush.bf16.msra.mxu0 %v3564
    %4120 = vmatpush.bf16.msra.mxu0 %v3561
    %4121 = vmatpush.bf16.msra.mxu0 %v3558
    %4122 = vmatmul.bf16.gmra.mxu0 %v2529
    %v4123 = vpop.f32.mrf.mxu0
    %v4124 = vadd.f32 %v4110, %v4123
    %v4125 = vpop.f32.mrf.mxu0
    %v4126 = vadd.f32 %v4112, %v4125
    %4127 = vdwg.mxu0
    %4128 = vmatpush.bf16.msra.mxu0 %v3603
    %4129 = vmatpush.bf16.msra.mxu0 %v3600
    %4130 = vmatpush.bf16.msra.mxu0 %v3597
    %4131 = vmatpush.bf16.msra.mxu0 %v3594
    %4132 = vmatpush.bf16.msra.mxu0 %v3591
    %4133 = vmatpush.bf16.msra.mxu0 %v3588
    %4134 = vmatpush.bf16.msra.mxu0 %v3585
    %4135 = vmatpush.bf16.msra.mxu0 %v3582
    %4136 = vmatmul.bf16.gmra.mxu0 %v2530
    %v4137 = vpop.f32.mrf.mxu0
    %v4138 = vadd.f32 %v4124, %v4137
    %v4139 = vpop.f32.mrf.mxu0
    %v4140 = vadd.f32 %v4126, %v4139
    %4141 = vdwg.mxu0
    %4142 = vmatpush.bf16.msra.mxu0 %v3627
    %4143 = vmatpush.bf16.msra.mxu0 %v3624
    %4144 = vmatpush.bf16.msra.mxu0 %v3621
    %4145 = vmatpush.bf16.msra.mxu0 %v3618
    %4146 = vmatpush.bf16.msra.mxu0 %v3615
    %4147 = vmatpush.bf16.msra.mxu0 %v3612
    %4148 = vmatpush.bf16.msra.mxu0 %v3609
    %4149 = vmatpush.bf16.msra.mxu0 %v3606
    %4150 = vmatmul.bf16.gmra.mxu0 %v2531
    %v4151 = vpop.f32.mrf.mxu0
    %v4152 = vadd.f32 %v4138, %v4151
    %v4153 = vpop.f32.mrf.mxu0
    %v4154 = vadd.f32 %v4140, %v4153
    %4155 = vdwg.mxu0
    %v4156 = vxor.u32 %v3928, 2147483648
    %v4157 = vxor.u32 %v4040, 2147483648
    %v4158 = vxor.u32 %v4152, 2147483648
    %v4159 = vxor.u32 %v3930, 2147483648
    %v4160 = vxor.u32 %v4042, 2147483648
    %v4161 = vxor.u32 %v4154, 2147483648
    %v4162 = vmul.f32 %v4156, 1.442695
    %v4163 = vpow.pop %v4162
    %v4164 = vmul.f32 %v4157, 1.442695
    %v4165 = vpow.pop %v4164
    %v4166 = vmul.f32 %v4158, 1.442695
    %v4167 = vpow.pop %v4166
    %v4168 = vmul.f32 %v4159, 1.442695
    %v4169 = vpow.pop %v4168
    %v4170 = vmul.f32 %v4160, 1.442695
    %v4171 = vpow.pop %v4170
    %v4172 = vmul.f32 %v4161, 1.442695
    %v4173 = vpow.pop %v4172
    %v4174 = vadd.f32 %v4163, 1.0
    %v4175 = vadd.f32 %v4165, 1.0
    %v4176 = vadd.f32 %v4167, 1.0
    %v4177 = vadd.f32 %v4169, 1.0
    %v4178 = vadd.f32 %v4171, 1.0
    %v4179 = vadd.f32 %v4173, 1.0
    %v4180 = vrcp.pop %v4174
    %v4181 = vmul.f32 %v4174, %v4180
    %v4182 = vsub.f32 1.0, %v4181
    %v4183 = vmul.f32 %v4180, %v4182
    %v4184 = vadd.f32 %v4180, %v4183
    %vm4185 = vweird.f32 %v4174
    %vm4186 = vweird.f32 %v4180
    %vm4187 = vmor %vm4185, %vm4186
    %v4188 = vsel %vm4187, %v4180, %v4184
    %v4189 = vand.u32 2147483647, %v4174
    %vm4190 = vcmp.eq.f32.partialorder %v4189, 8.507059e+37
    %v4191 = vand.u32 %v4174, 2147483648
    %v4192 = vor.u32 1.1754944e-38, %v4191
    %v4193 = vsel %vm4190, %v4192, %v4188
    %v4194 = vmul.f32 1.0, %v4193
    %v4195 = vrcp.pop %v4175
    %v4196 = vmul.f32 %v4175, %v4195
    %v4197 = vsub.f32 1.0, %v4196
    %v4198 = vmul.f32 %v4195, %v4197
    %v4199 = vadd.f32 %v4195, %v4198
    %vm4200 = vweird.f32 %v4175
    %vm4201 = vweird.f32 %v4195
    %vm4202 = vmor %vm4200, %vm4201
    %v4203 = vsel %vm4202, %v4195, %v4199
    %v4204 = vand.u32 2147483647, %v4175
    %vm4205 = vcmp.eq.f32.partialorder %v4204, 8.507059e+37
    %v4206 = vand.u32 %v4175, 2147483648
    %v4207 = vor.u32 1.1754944e-38, %v4206
    %v4208 = vsel %vm4205, %v4207, %v4203
    %v4209 = vmul.f32 1.0, %v4208
    %v4210 = vrcp.pop %v4176
    %v4211 = vmul.f32 %v4176, %v4210
    %v4212 = vsub.f32 1.0, %v4211
    %v4213 = vmul.f32 %v4210, %v4212
    %v4214 = vadd.f32 %v4210, %v4213
    %vm4215 = vweird.f32 %v4176
    %vm4216 = vweird.f32 %v4210
    %vm4217 = vmor %vm4215, %vm4216
    %v4218 = vsel %vm4217, %v4210, %v4214
    %v4219 = vand.u32 2147483647, %v4176
    %vm4220 = vcmp.eq.f32.partialorder %v4219, 8.507059e+37
    %v4221 = vand.u32 %v4176, 2147483648
    %v4222 = vor.u32 1.1754944e-38, %v4221
    %v4223 = vsel %vm4220, %v4222, %v4218
    %v4224 = vmul.f32 1.0, %v4223
    %v4225 = vrcp.pop %v4177
    %v4226 = vmul.f32 %v4177, %v4225
    %v4227 = vsub.f32 1.0, %v4226
    %v4228 = vmul.f32 %v4225, %v4227
    %v4229 = vadd.f32 %v4225, %v4228
    %vm4230 = vweird.f32 %v4177
    %vm4231 = vweird.f32 %v4225
    %vm4232 = vmor %vm4230, %vm4231
    %v4233 = vsel %vm4232, %v4225, %v4229
    %v4234 = vand.u32 2147483647, %v4177
    %vm4235 = vcmp.eq.f32.partialorder %v4234, 8.507059e+37
    %v4236 = vand.u32 %v4177, 2147483648
    %v4237 = vor.u32 1.1754944e-38, %v4236
    %v4238 = vsel %vm4235, %v4237, %v4233
    %v4239 = vmul.f32 1.0, %v4238
    %v4240 = vrcp.pop %v4178
    %v4241 = vmul.f32 %v4178, %v4240
    %v4242 = vsub.f32 1.0, %v4241
    %v4243 = vmul.f32 %v4240, %v4242
    %v4244 = vadd.f32 %v4240, %v4243
    %vm4245 = vweird.f32 %v4178
    %vm4246 = vweird.f32 %v4240
    %vm4247 = vmor %vm4245, %vm4246
    %v4248 = vsel %vm4247, %v4240, %v4244
    %v4249 = vand.u32 2147483647, %v4178
    %vm4250 = vcmp.eq.f32.partialorder %v4249, 8.507059e+37
    %v4251 = vand.u32 %v4178, 2147483648
    %v4252 = vor.u32 1.1754944e-38, %v4251
    %v4253 = vsel %vm4250, %v4252, %v4248
    %v4254 = vmul.f32 1.0, %v4253
    %v4255 = vrcp.pop %v4179
    %v4256 = vmul.f32 %v4179, %v4255
    %v4257 = vsub.f32 1.0, %v4256
    %v4258 = vmul.f32 %v4255, %v4257
    %v4259 = vadd.f32 %v4255, %v4258
    %vm4260 = vweird.f32 %v4179
    %vm4261 = vweird.f32 %v4255
    %vm4262 = vmor %vm4260, %vm4261
    %v4263 = vsel %vm4262, %v4255, %v4259
    %v4264 = vand.u32 2147483647, %v4179
    %vm4265 = vcmp.eq.f32.partialorder %v4264, 8.507059e+37
    %v4266 = vand.u32 %v4179, 2147483648
    %v4267 = vor.u32 1.1754944e-38, %v4266
    %v4268 = vsel %vm4265, %v4267, %v4263
    %v4269 = vmul.f32 1.0, %v4268
    %v4270 = vpack.c.bf16 %v4209, %v4194
    %v4271 = vpack.c.bf16 %v4224, %v4224
    %v4272 = vpack.c.bf16 %v4254, %v4239
    %v4273 = vpack.c.bf16 %v4269, %v4269
    %4274 = vst [vmem:[%s8] sm:$0xff] %v4270
    %4275 = vst [vmem:[%s8 + $0x8] sm:$0xf] %v4271
    %4276 = vst [vmem:[%s8 + $0xc] sm:$0xff] %v4272
    %4277 = vst [vmem:[%s8 + $0x14] sm:$0xf] %v4273
    // Predicated region
    $region46: #{generator_forward.1} parent=1 // pred_check
      _
    $region47: #{generator_forward.1} parent=1 // pred_check_branch
      %4279 = sbr.rel (0) target = $region49
    $region48: #{generator_forward.1} parent=1 // pred_region
      _
    $region49: #{generator_forward.1} parent=1 // pred_fallthru
      _
    // Predicated region
    $region50: #{generator_forward.1} parent=1 // pred_check
      _
    $region51: #{generator_forward.1} parent=1 // pred_check_branch
      %4281 = sbr.rel (0) target = $region53
    $region52: #{generator_forward.1} parent=1 // pred_region
      _
    $region53: #{generator_forward.1} parent=1 // pred_fallthru
      _
    %4282 = vsyncpa [#allocation3], 1
    %4283 = vsyncpa [#allocation5], 1

</llo_original>
